<compile_context>
chip_gen: v7x
topology: tpu7x:2x2x1
jax: 0.10.0
libtpu: 0.0.40
codegen_flags: <defaults>
</compile_context>

<pallas_src>
import functools

import jax
import jax.numpy as jnp
from jax.experimental import pallas as pl
from jax.experimental.pallas import tpu as pltpu

# ----------------------- model hyper-parameters (args) -----------------------
B, L, D = 2, 8, 32          # batch, sequence length, args.dims
N_HEADS = 2                 # fixed to 2 in SASREC.__init__
HEAD_DIM = D // N_HEADS
INNER = 4 * D               # inner_size = dims * 4
N_LAYERS = 2                # args.encoder_layers
NUM_ITEMS = 64              # args.num_items
N_TGT = 16                  # number of candidate target items at inference

LN_EPS_OUTER = 1e-5         # nn.LayerNorm default eps (outer self.layer_norm)
LN_EPS_TE = 1e-12           # transformer-internal LayerNorm eps (RecBole default)

_INV_SQRT2 = 0.7071067811865476


# --------------------------- in-kernel math helpers ---------------------------
def _erf(x):
    # float32-accurate erf via the Numerical Recipes erfc rational approximation
    # (max abs err ~1.2e-7); built only from exp/mul/add so it lowers on Mosaic.
    a = jnp.abs(x)
    t = 1.0 / (1.0 + 0.5 * a)
    y = t * jnp.exp(
        -a * a - 1.26551223
        + t * (1.00002368
        + t * (0.37409196
        + t * (0.09678418
        + t * (-0.18628806
        + t * (0.27886807
        + t * (-1.13520398
        + t * (1.48851587
        + t * (-0.82215223
        + t * 0.17087277)))))))))
    erf_abs = 1.0 - y
    return jnp.where(x >= 0.0, erf_abs, -erf_abs)


def _gelu_exact(x):
    # exact (erf-based) GELU, matching RecBole's 'gelu' activation
    return 0.5 * x * (1.0 + _erf(x * _INV_SQRT2))


def _layernorm(x, g, b, eps):
    mu = jnp.mean(x, axis=-1, keepdims=True)
    var = jnp.mean((x - mu) ** 2, axis=-1, keepdims=True)
    return (x - mu) * jax.lax.rsqrt(var + eps) * g + b


def _softmax_last(s):
    s = s - jnp.max(s, axis=-1, keepdims=True)
    p = jnp.exp(s)
    # denominator reciprocal on the EUP slot (free vs. VALU divide)
    return p * pl.reciprocal(jnp.sum(p, axis=-1, keepdims=True), approx=True)


# ------------------------------ fused kernel -----------------------------------
def sasrec_fused_kernel(x_ref, mask_ref, tgt_ref, ln_g_ref, ln_b_ref,
                        wqkv_ref, bqkv_ref, wo_ref, bo_ref, ln1g_ref, ln1b_ref,
                        w1_ref, b1_ref, w2_ref, b2_ref, ln2g_ref, ln2b_ref,
                        o_ref, *, n_layers, n_heads, eps_outer, eps_te):
    x3 = x_ref[...].astype(jnp.float32)                      # (B, L, D)
    bb, ll, d = x3.shape
    dh = d // n_heads
    mask = mask_ref[...].astype(jnp.float32)                 # (B, L, L)

    # seq_ebd = dropout(layer_norm(seq_ebd)); dropout is identity in eval mode.
    x2 = _layernorm(x3.reshape(bb * ll, d), ln_g_ref[...], ln_b_ref[...],
                    eps_outer)                               # (B*L, D)

    scale = 1.0 / (float(dh) ** 0.5)
    for li in range(n_layers):                               # static layer loop
        # ---- multi-head self-attention (fused QKV projection) ----
        wqkv = wqkv_ref[li].astype(jnp.float32)              # (D, 3D)
        qkv = jnp.dot(x2, wqkv, preferred_element_type=jnp.float32) + bqkv_ref[li]
        q = qkv[:, 0 * d:1 * d].reshape(bb, ll, d)
        k = qkv[:, 1 * d:2 * d].reshape(bb, ll, d)
        v = qkv[:, 2 * d:3 * d].reshape(bb, ll, d)

        wo = wo_ref[li].astype(jnp.float32)                  # (D, D)
        attn2 = None
        for h in range(n_heads):                             # static head loop
            sl = slice(h * dh, (h + 1) * dh)
            qh, kh, vh = q[..., sl], k[..., sl], v[..., sl]  # (B, L, dh)
            s = jnp.einsum('bqd,bkd->bqk', qh, kh,
                           preferred_element_type=jnp.float32) * scale + mask
            p = _softmax_last(s)                             # attn dropout p=0
            ctx = jnp.einsum('bqk,bkd->bqd', p, vh,
                             preferred_element_type=jnp.float32)   # (B, L, dh)
            # project this head's context through its rows of W_O and sum
            # (avoids a lane-axis concatenate / relayout).
            part = jnp.dot(ctx.reshape(bb * ll, dh), wo[sl, :],
                           preferred_element_type=jnp.float32)
            attn2 = part if attn2 is None else attn2 + part
        attn2 = attn2 + bo_ref[li]                           # hidden dropout = id
        x2 = _layernorm(attn2 + x2, ln1g_ref[li], ln1b_ref[li], eps_te)

        # ---- feed-forward (GELU) ----
        h1 = jnp.dot(x2, w1_ref[li].astype(jnp.float32),
                     preferred_element_type=jnp.float32) + b1_ref[li]
        h1 = _gelu_exact(h1)
        h2 = jnp.dot(h1, w2_ref[li].astype(jnp.float32),
                     preferred_element_type=jnp.float32) + b2_ref[li]
        x2 = _layernorm(h2 + x2, ln2g_ref[li], ln2b_ref[li], eps_te)

    # rec_heads = seq_rep[:, -1, :]  (left-padding-only assumption, as in the demo)
    rec = x2.reshape(bb, ll, d)[:, ll - 1, :]                # (B, D)
    tgt_t = tgt_ref[...].astype(jnp.float32)                 # (D, N) pre-transposed
    o_ref[...] = jnp.dot(rec, tgt_t,
                         preferred_element_type=jnp.float32).astype(o_ref.dtype)


# ------------------------------ pallas_call glue -------------------------------
_VMEM_SPEC = pl.BlockSpec(memory_space=pltpu.MemorySpace.VMEM)


# ------------------------------ parameters ------------------------------------
def init_params(key):
    keys = jax.random.split(key, 1 + N_LAYERS)
    V = jax.random.normal(keys[0], (NUM_ITEMS, D), jnp.float32) * (1.0 / D)
    V = V.at[0].set(0.0)                                     # padding_idx=0

    wqkv, wo, w1, w2 = [], [], [], []
    for li in range(N_LAYERS):
        lk = jax.random.split(keys[1 + li], 6)

        def w(k, shape):
            return jax.random.normal(k, shape, jnp.float32) * 0.02

        wq_, wk_, wv_ = w(lk[0], (D, D)), w(lk[1], (D, D)), w(lk[2], (D, D))
        wqkv.append(jnp.concatenate([wq_, wk_, wv_], axis=1))   # (D, 3D)
        wo.append(w(lk[3], (D, D)))
        w1.append(w(lk[4], (D, INNER)))
        w2.append(w(lk[5], (INNER, D)))

    zeros = lambda shape: jnp.zeros(shape, jnp.float32)
    ones = lambda shape: jnp.ones(shape, jnp.float32)
    return dict(
        V=V,
        ln_g=ones((1, D)), ln_b=zeros((1, D)),
        wqkv=jnp.stack(wqkv), bqkv=zeros((N_LAYERS, 1, 3 * D)),
        wo=jnp.stack(wo),     bo=zeros((N_LAYERS, 1, D)),
        ln1_g=ones((N_LAYERS, 1, D)), ln1_b=zeros((N_LAYERS, 1, D)),
        w1=jnp.stack(w1),     b1=zeros((N_LAYERS, 1, INNER)),
        w2=jnp.stack(w2),     b2=zeros((N_LAYERS, 1, D)),
        ln2_g=ones((N_LAYERS, 1, D)), ln2_b=zeros((N_LAYERS, 1, D)),
    )


# -------------------------------- forward --------------------------------------
def get_attention_mask(item_seq):
    # matches SASREC.get_attention_mask (uni-directional): (B, L, L) additive mask
    b, l = item_seq.shape
    am = item_seq != 0                                       # (B, L) key validity
    ext = jnp.broadcast_to(am[:, None, :], (b, l, l))        # mask on key positions
    causal = jnp.tril(jnp.ones((l, l), dtype=bool))
    m = jnp.logical_and(ext, causal[None, :, :])
    return jnp.where(m, 0.0, -10000.0).astype(jnp.float32)


@jax.jit
def sasrec_forward(params, item_seq_indices, target_item_indices):
    V = params['V']
    seq_ebd = jnp.take(V, item_seq_indices, axis=0)          # (B, L, D)
    tgt_ebd = jnp.take(V, target_item_indices, axis=0)       # (N, 1, D)
    tgt_t = tgt_ebd[:, 0, :].T                               # (D, N) for score dot
    mask = get_attention_mask(item_seq_indices)              # (B, L, L)

    kernel = functools.partial(sasrec_fused_kernel,
                               n_layers=N_LAYERS, n_heads=N_HEADS,
                               eps_outer=LN_EPS_OUTER, eps_te=LN_EPS_TE)
    args = (seq_ebd, mask, tgt_t,
            params['ln_g'], params['ln_b'],
            params['wqkv'], params['bqkv'], params['wo'], params['bo'],
            params['ln1_g'], params['ln1_b'],
            params['w1'], params['b1'], params['w2'], params['b2'],
            params['ln2_g'], params['ln2_b'])

    rel_score = pl.pallas_call(
        kernel,
        out_shape=jax.ShapeDtypeStruct((seq_ebd.shape[0], tgt_t.shape[1]),
                                       jnp.float32),
        in_specs=[_VMEM_SPEC] * len(args),
        out_specs=_VMEM_SPEC,
    )(*args)
    return rel_score                                         # (B, N)


# ---------------------------------- main ----------------------------------------
if __name__ == "__main__":
    root = jax.random.PRNGKey(0)
    k_params, k_seq, k_tgt = jax.random.split(root, 3)

    params = init_params(k_params)

    item_seq = jax.random.randint(k_seq, (B, L), 0, NUM_ITEMS, dtype=jnp.int32)
    item_seq = item_seq.at[0, :3].set(0)                     # some left padding
    target_items = jax.random.randint(k_tgt, (N_TGT, 1), 1, NUM_ITEMS,
                                      dtype=jnp.int32)

    out = sasrec_forward(params, item_seq, target_items)
    out = jax.block_until_ready(out)
    assert out.shape == (B, N_TGT) and out.dtype == jnp.float32
    print("KERNEL_OK")
</pallas_src>

<mosaic_0001>
module attributes {stable_mosaic.version = 11 : i64} {
  func.func @sasrec_fused_kernel(%arg0: memref<2x8x32xf32, #tpu.memory_space<vmem>>, %arg1: memref<2x8x8xf32, #tpu.memory_space<vmem>>, %arg2: memref<32x16xf32, #tpu.memory_space<vmem>>, %arg3: memref<1x32xf32, #tpu.memory_space<vmem>>, %arg4: memref<1x32xf32, #tpu.memory_space<vmem>>, %arg5: memref<2x32x96xf32, #tpu.memory_space<vmem>>, %arg6: memref<2x1x96xf32, #tpu.memory_space<vmem>>, %arg7: memref<2x32x32xf32, #tpu.memory_space<vmem>>, %arg8: memref<2x1x32xf32, #tpu.memory_space<vmem>>, %arg9: memref<2x1x32xf32, #tpu.memory_space<vmem>>, %arg10: memref<2x1x32xf32, #tpu.memory_space<vmem>>, %arg11: memref<2x32x128xf32, #tpu.memory_space<vmem>>, %arg12: memref<2x1x128xf32, #tpu.memory_space<vmem>>, %arg13: memref<2x128x32xf32, #tpu.memory_space<vmem>>, %arg14: memref<2x1x32xf32, #tpu.memory_space<vmem>>, %arg15: memref<2x1x32xf32, #tpu.memory_space<vmem>>, %arg16: memref<2x1x32xf32, #tpu.memory_space<vmem>>, %arg17: memref<2x16xf32, #tpu.memory_space<vmem>>) attributes {dimension_semantics = [], scalar_prefetch = 0 : i64, scratch_operands = 0 : i64, tpu.core_type = #tpu.core_type<tc>} {
    %c0 = arith.constant 0 : index
    %c0_0 = arith.constant 0 : index
    %c0_1 = arith.constant 0 : index
    %0 = vector.load %arg0[%c0, %c0_0, %c0_1] : memref<2x8x32xf32, #tpu.memory_space<vmem>>, vector<2x8x32xf32>
    %c0_2 = arith.constant 0 : index
    %c0_3 = arith.constant 0 : index
    %c0_4 = arith.constant 0 : index
    %1 = vector.load %arg1[%c0_2, %c0_3, %c0_4] : memref<2x8x8xf32, #tpu.memory_space<vmem>>, vector<2x8x8xf32>
    %2 = vector.shape_cast %0 : vector<2x8x32xf32> to vector<16x32xf32>
    %c0_5 = arith.constant 0 : index
    %c0_6 = arith.constant 0 : index
    %3 = vector.load %arg3[%c0_5, %c0_6] : memref<1x32xf32, #tpu.memory_space<vmem>>, vector<1x32xf32>
    %c0_7 = arith.constant 0 : index
    %c0_8 = arith.constant 0 : index
    %4 = vector.load %arg4[%c0_7, %c0_8] : memref<1x32xf32, #tpu.memory_space<vmem>>, vector<1x32xf32>
    %cst = arith.constant dense<0.000000e+00> : vector<16xf32>
    %5 = vector.multi_reduction <add>, %2, %cst [1] : vector<16x32xf32> to vector<16xf32>
    %6 = vector.shape_cast %5 : vector<16xf32> to vector<16x1xf32>
    %cst_9 = arith.constant 3.200000e+01 : f32
    %7 = vector.broadcast %cst_9 : f32 to vector<16x1xf32>
    %8 = arith.divf %6, %7 : vector<16x1xf32>
    %9 = vector.broadcast %8 : vector<16x1xf32> to vector<16x32xf32>
    %10 = arith.subf %2, %9 : vector<16x32xf32>
    %11 = arith.mulf %10, %10 : vector<16x32xf32>
    %cst_10 = arith.constant dense<0.000000e+00> : vector<16xf32>
    %12 = vector.multi_reduction <add>, %11, %cst_10 [1] : vector<16x32xf32> to vector<16xf32>
    %13 = vector.shape_cast %12 : vector<16xf32> to vector<16x1xf32>
    %cst_11 = arith.constant 3.200000e+01 : f32
    %14 = vector.broadcast %cst_11 : f32 to vector<16x1xf32>
    %15 = arith.divf %13, %14 : vector<16x1xf32>
    %16 = vector.broadcast %8 : vector<16x1xf32> to vector<16x32xf32>
    %17 = arith.subf %2, %16 : vector<16x32xf32>
    %cst_12 = arith.constant 9.99999974E-6 : f32
    %18 = vector.broadcast %cst_12 : f32 to vector<16x1xf32>
    %19 = arith.addf %15, %18 : vector<16x1xf32>
    %20 = math.rsqrt %19 : vector<16x1xf32>
    %21 = vector.broadcast %20 : vector<16x1xf32> to vector<16x32xf32>
    %22 = arith.mulf %17, %21 : vector<16x32xf32>
    %23 = vector.broadcast %3 : vector<1x32xf32> to vector<16x32xf32>
    %24 = arith.mulf %22, %23 : vector<16x32xf32>
    %25 = vector.broadcast %4 : vector<1x32xf32> to vector<16x32xf32>
    %26 = arith.addf %24, %25 : vector<16x32xf32>
    %c0_13 = arith.constant 0 : index
    %c0_14 = arith.constant 0 : index
    %c0_15 = arith.constant 0 : index
    %27 = vector.load %arg5[%c0_13, %c0_14, %c0_15] : memref<2x32x96xf32, #tpu.memory_space<vmem>>, vector<1x32x96xf32>
    %28 = vector.shape_cast %27 : vector<1x32x96xf32> to vector<32x96xf32>
    %cst_16 = arith.constant dense<0.000000e+00> : vector<16x96xf32>
    %29 = tpu.matmul %26, %28, %cst_16 {dimension_numbers = #tpu.dot_dimension_numbers<[1], [0], [0], [1], [0, 0, 1, 1], [], []>} : vector<16x32xf32>, vector<32x96xf32>, vector<16x96xf32> -> vector<16x96xf32>
    %c0_17 = arith.constant 0 : index
    %c0_18 = arith.constant 0 : index
    %c0_19 = arith.constant 0 : index
    %30 = vector.load %arg6[%c0_17, %c0_18, %c0_19] : memref<2x1x96xf32, #tpu.memory_space<vmem>>, vector<1x1x96xf32>
    %31 = vector.shape_cast %30 : vector<1x1x96xf32> to vector<1x96xf32>
    %32 = vector.broadcast %31 : vector<1x96xf32> to vector<16x96xf32>
    %33 = arith.addf %29, %32 : vector<16x96xf32>
    %34 = vector.extract_strided_slice %33 {offsets = [0, 0], sizes = [16, 32], strides = [1, 1]} : vector<16x96xf32> to vector<16x32xf32>
    %35 = vector.shape_cast %34 : vector<16x32xf32> to vector<2x8x32xf32>
    %36 = vector.extract_strided_slice %33 {offsets = [0, 32], sizes = [16, 32], strides = [1, 1]} : vector<16x96xf32> to vector<16x32xf32>
    %37 = vector.shape_cast %36 : vector<16x32xf32> to vector<2x8x32xf32>
    %38 = vector.extract_strided_slice %33 {offsets = [0, 64], sizes = [16, 32], strides = [1, 1]} : vector<16x96xf32> to vector<16x32xf32>
    %39 = vector.shape_cast %38 : vector<16x32xf32> to vector<2x8x32xf32>
    %c0_20 = arith.constant 0 : index
    %c0_21 = arith.constant 0 : index
    %c0_22 = arith.constant 0 : index
    %40 = vector.load %arg7[%c0_20, %c0_21, %c0_22] : memref<2x32x32xf32, #tpu.memory_space<vmem>>, vector<1x32x32xf32>
    %41 = vector.shape_cast %40 : vector<1x32x32xf32> to vector<32x32xf32>
    %42 = vector.extract_strided_slice %35 {offsets = [0, 0, 0], sizes = [2, 8, 16], strides = [1, 1, 1]} : vector<2x8x32xf32> to vector<2x8x16xf32>
    %43 = vector.extract_strided_slice %37 {offsets = [0, 0, 0], sizes = [2, 8, 16], strides = [1, 1, 1]} : vector<2x8x32xf32> to vector<2x8x16xf32>
    %44 = vector.extract_strided_slice %39 {offsets = [0, 0, 0], sizes = [2, 8, 16], strides = [1, 1, 1]} : vector<2x8x32xf32> to vector<2x8x16xf32>
    "tpu.trace_start"() <{level = 10 : i32, message = "bqd,bkd->bqk"}> : () -> ()
    %cst_23 = arith.constant dense<0.000000e+00> : vector<2x8x8xf32>
    %45 = tpu.matmul %42, %43, %cst_23 {dimension_numbers = #tpu.dot_dimension_numbers<[2], [2], [1], [1], [0, 0, 0, 1, 1, 1], [0], [0]>} : vector<2x8x16xf32>, vector<2x8x16xf32>, vector<2x8x8xf32> -> vector<2x8x8xf32>
    "tpu.trace_stop"() : () -> ()
    %cst_24 = arith.constant 2.500000e-01 : f32
    %46 = vector.broadcast %cst_24 : f32 to vector<2x8x8xf32>
    %47 = arith.mulf %45, %46 : vector<2x8x8xf32>
    %48 = arith.addf %47, %1 : vector<2x8x8xf32>
    %cst_25 = arith.constant dense<0xFF800000> : vector<2x8xf32>
    %49 = vector.multi_reduction <maximumf>, %48, %cst_25 [2] : vector<2x8x8xf32> to vector<2x8xf32>
    %50 = vector.shape_cast %49 : vector<2x8xf32> to vector<2x8x1xf32>
    %51 = vector.broadcast %50 : vector<2x8x1xf32> to vector<2x8x8xf32>
    %52 = arith.subf %48, %51 : vector<2x8x8xf32>
    %53 = math.exp %52 : vector<2x8x8xf32>
    %cst_26 = arith.constant dense<0.000000e+00> : vector<2x8xf32>
    %54 = vector.multi_reduction <add>, %53, %cst_26 [2] : vector<2x8x8xf32> to vector<2x8xf32>
    %55 = vector.shape_cast %54 : vector<2x8xf32> to vector<2x8x1xf32>
    %56 = tpu.reciprocal %55 {approx = true} : vector<2x8x1xf32> -> vector<2x8x1xf32>
    %57 = vector.broadcast %56 : vector<2x8x1xf32> to vector<2x8x8xf32>
    %58 = arith.mulf %53, %57 : vector<2x8x8xf32>
    "tpu.trace_start"() <{level = 10 : i32, message = "bqk,bkd->bqd"}> : () -> ()
    %cst_27 = arith.constant dense<0.000000e+00> : vector<2x8x16xf32>
    %59 = tpu.matmul %58, %44, %cst_27 {dimension_numbers = #tpu.dot_dimension_numbers<[2], [1], [1], [2], [0, 0, 0, 1, 1, 2], [0], [0]>} : vector<2x8x8xf32>, vector<2x8x16xf32>, vector<2x8x16xf32> -> vector<2x8x16xf32>
    "tpu.trace_stop"() : () -> ()
    %60 = vector.shape_cast %59 : vector<2x8x16xf32> to vector<16x16xf32>
    %61 = vector.extract_strided_slice %41 {offsets = [0, 0], sizes = [16, 32], strides = [1, 1]} : vector<32x32xf32> to vector<16x32xf32>
    %cst_28 = arith.constant dense<0.000000e+00> : vector<16x32xf32>
    %62 = tpu.matmul %60, %61, %cst_28 {dimension_numbers = #tpu.dot_dimension_numbers<[1], [0], [0], [1], [0, 0, 1, 1], [], []>} : vector<16x16xf32>, vector<16x32xf32>, vector<16x32xf32> -> vector<16x32xf32>
    %63 = vector.extract_strided_slice %35 {offsets = [0, 0, 16], sizes = [2, 8, 16], strides = [1, 1, 1]} : vector<2x8x32xf32> to vector<2x8x16xf32>
    %64 = vector.extract_strided_slice %37 {offsets = [0, 0, 16], sizes = [2, 8, 16], strides = [1, 1, 1]} : vector<2x8x32xf32> to vector<2x8x16xf32>
    %65 = vector.extract_strided_slice %39 {offsets = [0, 0, 16], sizes = [2, 8, 16], strides = [1, 1, 1]} : vector<2x8x32xf32> to vector<2x8x16xf32>
    "tpu.trace_start"() <{level = 10 : i32, message = "bqd,bkd->bqk"}> : () -> ()
    %cst_29 = arith.constant dense<0.000000e+00> : vector<2x8x8xf32>
    %66 = tpu.matmul %63, %64, %cst_29 {dimension_numbers = #tpu.dot_dimension_numbers<[2], [2], [1], [1], [0, 0, 0, 1, 1, 1], [0], [0]>} : vector<2x8x16xf32>, vector<2x8x16xf32>, vector<2x8x8xf32> -> vector<2x8x8xf32>
    "tpu.trace_stop"() : () -> ()
    %cst_30 = arith.constant 2.500000e-01 : f32
    %67 = vector.broadcast %cst_30 : f32 to vector<2x8x8xf32>
    %68 = arith.mulf %66, %67 : vector<2x8x8xf32>
    %69 = arith.addf %68, %1 : vector<2x8x8xf32>
    %cst_31 = arith.constant dense<0xFF800000> : vector<2x8xf32>
    %70 = vector.multi_reduction <maximumf>, %69, %cst_31 [2] : vector<2x8x8xf32> to vector<2x8xf32>
    %71 = vector.shape_cast %70 : vector<2x8xf32> to vector<2x8x1xf32>
    %72 = vector.broadcast %71 : vector<2x8x1xf32> to vector<2x8x8xf32>
    %73 = arith.subf %69, %72 : vector<2x8x8xf32>
    %74 = math.exp %73 : vector<2x8x8xf32>
    %cst_32 = arith.constant dense<0.000000e+00> : vector<2x8xf32>
    %75 = vector.multi_reduction <add>, %74, %cst_32 [2] : vector<2x8x8xf32> to vector<2x8xf32>
    %76 = vector.shape_cast %75 : vector<2x8xf32> to vector<2x8x1xf32>
    %77 = tpu.reciprocal %76 {approx = true} : vector<2x8x1xf32> -> vector<2x8x1xf32>
    %78 = vector.broadcast %77 : vector<2x8x1xf32> to vector<2x8x8xf32>
    %79 = arith.mulf %74, %78 : vector<2x8x8xf32>
    "tpu.trace_start"() <{level = 10 : i32, message = "bqk,bkd->bqd"}> : () -> ()
    %cst_33 = arith.constant dense<0.000000e+00> : vector<2x8x16xf32>
    %80 = tpu.matmul %79, %65, %cst_33 {dimension_numbers = #tpu.dot_dimension_numbers<[2], [1], [1], [2], [0, 0, 0, 1, 1, 2], [0], [0]>} : vector<2x8x8xf32>, vector<2x8x16xf32>, vector<2x8x16xf32> -> vector<2x8x16xf32>
    "tpu.trace_stop"() : () -> ()
    %81 = vector.shape_cast %80 : vector<2x8x16xf32> to vector<16x16xf32>
    %82 = vector.extract_strided_slice %41 {offsets = [16, 0], sizes = [16, 32], strides = [1, 1]} : vector<32x32xf32> to vector<16x32xf32>
    %cst_34 = arith.constant dense<0.000000e+00> : vector<16x32xf32>
    %83 = tpu.matmul %81, %82, %cst_34 {dimension_numbers = #tpu.dot_dimension_numbers<[1], [0], [0], [1], [0, 0, 1, 1], [], []>} : vector<16x16xf32>, vector<16x32xf32>, vector<16x32xf32> -> vector<16x32xf32>
    %84 = arith.addf %62, %83 : vector<16x32xf32>
    %c0_35 = arith.constant 0 : index
    %c0_36 = arith.constant 0 : index
    %c0_37 = arith.constant 0 : index
    %85 = vector.load %arg8[%c0_35, %c0_36, %c0_37] : memref<2x1x32xf32, #tpu.memory_space<vmem>>, vector<1x1x32xf32>
    %86 = vector.shape_cast %85 : vector<1x1x32xf32> to vector<1x32xf32>
    %87 = vector.broadcast %86 : vector<1x32xf32> to vector<16x32xf32>
    %88 = arith.addf %84, %87 : vector<16x32xf32>
    %89 = arith.addf %88, %26 : vector<16x32xf32>
    %c0_38 = arith.constant 0 : index
    %c0_39 = arith.constant 0 : index
    %c0_40 = arith.constant 0 : index
    %90 = vector.load %arg9[%c0_38, %c0_39, %c0_40] : memref<2x1x32xf32, #tpu.memory_space<vmem>>, vector<1x1x32xf32>
    %91 = vector.shape_cast %90 : vector<1x1x32xf32> to vector<1x32xf32>
    %c0_41 = arith.constant 0 : index
    %c0_42 = arith.constant 0 : index
    %c0_43 = arith.constant 0 : index
    %92 = vector.load %arg10[%c0_41, %c0_42, %c0_43] : memref<2x1x32xf32, #tpu.memory_space<vmem>>, vector<1x1x32xf32>
    %93 = vector.shape_cast %92 : vector<1x1x32xf32> to vector<1x32xf32>
    %cst_44 = arith.constant dense<0.000000e+00> : vector<16xf32>
    %94 = vector.multi_reduction <add>, %89, %cst_44 [1] : vector<16x32xf32> to vector<16xf32>
    %95 = vector.shape_cast %94 : vector<16xf32> to vector<16x1xf32>
    %cst_45 = arith.constant 3.200000e+01 : f32
    %96 = vector.broadcast %cst_45 : f32 to vector<16x1xf32>
    %97 = arith.divf %95, %96 : vector<16x1xf32>
    %98 = vector.broadcast %97 : vector<16x1xf32> to vector<16x32xf32>
    %99 = arith.subf %89, %98 : vector<16x32xf32>
    %100 = arith.mulf %99, %99 : vector<16x32xf32>
    %cst_46 = arith.constant dense<0.000000e+00> : vector<16xf32>
    %101 = vector.multi_reduction <add>, %100, %cst_46 [1] : vector<16x32xf32> to vector<16xf32>
    %102 = vector.shape_cast %101 : vector<16xf32> to vector<16x1xf32>
    %cst_47 = arith.constant 3.200000e+01 : f32
    %103 = vector.broadcast %cst_47 : f32 to vector<16x1xf32>
    %104 = arith.divf %102, %103 : vector<16x1xf32>
    %105 = vector.broadcast %97 : vector<16x1xf32> to vector<16x32xf32>
    %106 = arith.subf %89, %105 : vector<16x32xf32>
    %cst_48 = arith.constant 9.99999996E-13 : f32
    %107 = vector.broadcast %cst_48 : f32 to vector<16x1xf32>
    %108 = arith.addf %104, %107 : vector<16x1xf32>
    %109 = math.rsqrt %108 : vector<16x1xf32>
    %110 = vector.broadcast %109 : vector<16x1xf32> to vector<16x32xf32>
    %111 = arith.mulf %106, %110 : vector<16x32xf32>
    %112 = vector.broadcast %91 : vector<1x32xf32> to vector<16x32xf32>
    %113 = arith.mulf %111, %112 : vector<16x32xf32>
    %114 = vector.broadcast %93 : vector<1x32xf32> to vector<16x32xf32>
    %115 = arith.addf %113, %114 : vector<16x32xf32>
    %c0_49 = arith.constant 0 : index
    %c0_50 = arith.constant 0 : index
    %c0_51 = arith.constant 0 : index
    %116 = vector.load %arg11[%c0_49, %c0_50, %c0_51] : memref<2x32x128xf32, #tpu.memory_space<vmem>>, vector<1x32x128xf32>
    %117 = vector.shape_cast %116 : vector<1x32x128xf32> to vector<32x128xf32>
    %cst_52 = arith.constant dense<0.000000e+00> : vector<16x128xf32>
    %118 = tpu.matmul %115, %117, %cst_52 {dimension_numbers = #tpu.dot_dimension_numbers<[1], [0], [0], [1], [0, 0, 1, 1], [], []>} : vector<16x32xf32>, vector<32x128xf32>, vector<16x128xf32> -> vector<16x128xf32>
    %c0_53 = arith.constant 0 : index
    %c0_54 = arith.constant 0 : index
    %c0_55 = arith.constant 0 : index
    %119 = vector.load %arg12[%c0_53, %c0_54, %c0_55] : memref<2x1x128xf32, #tpu.memory_space<vmem>>, vector<1x1x128xf32>
    %120 = vector.shape_cast %119 : vector<1x1x128xf32> to vector<1x128xf32>
    %121 = vector.broadcast %120 : vector<1x128xf32> to vector<16x128xf32>
    %122 = arith.addf %118, %121 : vector<16x128xf32>
    %cst_56 = arith.constant 5.000000e-01 : f32
    %123 = vector.broadcast %cst_56 : f32 to vector<16x128xf32>
    %124 = arith.mulf %123, %122 : vector<16x128xf32>
    %cst_57 = arith.constant 0.707106769 : f32
    %125 = vector.broadcast %cst_57 : f32 to vector<16x128xf32>
    %126 = arith.mulf %122, %125 : vector<16x128xf32>
    %127 = math.absf %126 : vector<16x128xf32>
    %cst_58 = arith.constant 5.000000e-01 : f32
    %128 = vector.broadcast %cst_58 : f32 to vector<16x128xf32>
    %129 = arith.mulf %128, %127 : vector<16x128xf32>
    %cst_59 = arith.constant 1.000000e+00 : f32
    %130 = vector.broadcast %cst_59 : f32 to vector<16x128xf32>
    %131 = arith.addf %130, %129 : vector<16x128xf32>
    %cst_60 = arith.constant 1.000000e+00 : f32
    %132 = vector.broadcast %cst_60 : f32 to vector<16x128xf32>
    %133 = arith.divf %132, %131 : vector<16x128xf32>
    %cst_61 = arith.constant 0.000000e+00 : f32
    %134 = vector.broadcast %cst_61 : f32 to vector<16x128xf32>
    %135 = arith.subf %134, %127 : vector<16x128xf32>
    %136 = arith.mulf %135, %127 : vector<16x128xf32>
    %cst_62 = arith.constant 1.26551223 : f32
    %137 = vector.broadcast %cst_62 : f32 to vector<16x128xf32>
    %138 = arith.subf %136, %137 : vector<16x128xf32>
    %cst_63 = arith.constant 0.170872763 : f32
    %139 = vector.broadcast %cst_63 : f32 to vector<16x128xf32>
    %140 = arith.mulf %133, %139 : vector<16x128xf32>
    %cst_64 = arith.constant -0.822152256 : f32
    %141 = vector.broadcast %cst_64 : f32 to vector<16x128xf32>
    %142 = arith.addf %141, %140 : vector<16x128xf32>
    %143 = arith.mulf %133, %142 : vector<16x128xf32>
    %cst_65 = arith.constant 1.48851585 : f32
    %144 = vector.broadcast %cst_65 : f32 to vector<16x128xf32>
    %145 = arith.addf %144, %143 : vector<16x128xf32>
    %146 = arith.mulf %133, %145 : vector<16x128xf32>
    %cst_66 = arith.constant -1.13520396 : f32
    %147 = vector.broadcast %cst_66 : f32 to vector<16x128xf32>
    %148 = arith.addf %147, %146 : vector<16x128xf32>
    %149 = arith.mulf %133, %148 : vector<16x128xf32>
    %cst_67 = arith.constant 0.278868079 : f32
    %150 = vector.broadcast %cst_67 : f32 to vector<16x128xf32>
    %151 = arith.addf %150, %149 : vector<16x128xf32>
    %152 = arith.mulf %133, %151 : vector<16x128xf32>
    %cst_68 = arith.constant -0.186288059 : f32
    %153 = vector.broadcast %cst_68 : f32 to vector<16x128xf32>
    %154 = arith.addf %153, %152 : vector<16x128xf32>
    %155 = arith.mulf %133, %154 : vector<16x128xf32>
    %cst_69 = arith.constant 0.0967841818 : f32
    %156 = vector.broadcast %cst_69 : f32 to vector<16x128xf32>
    %157 = arith.addf %156, %155 : vector<16x128xf32>
    %158 = arith.mulf %133, %157 : vector<16x128xf32>
    %cst_70 = arith.constant 0.374091953 : f32
    %159 = vector.broadcast %cst_70 : f32 to vector<16x128xf32>
    %160 = arith.addf %159, %158 : vector<16x128xf32>
    %161 = arith.mulf %133, %160 : vector<16x128xf32>
    %cst_71 = arith.constant 1.00002372 : f32
    %162 = vector.broadcast %cst_71 : f32 to vector<16x128xf32>
    %163 = arith.addf %162, %161 : vector<16x128xf32>
    %164 = arith.mulf %133, %163 : vector<16x128xf32>
    %165 = arith.addf %138, %164 : vector<16x128xf32>
    %166 = math.exp %165 : vector<16x128xf32>
    %167 = arith.mulf %133, %166 : vector<16x128xf32>
    %cst_72 = arith.constant 1.000000e+00 : f32
    %168 = vector.broadcast %cst_72 : f32 to vector<16x128xf32>
    %169 = arith.subf %168, %167 : vector<16x128xf32>
    %cst_73 = arith.constant 0.000000e+00 : f32
    %170 = vector.broadcast %cst_73 : f32 to vector<16x128xf32>
    %171 = arith.cmpf oge, %126, %170 : vector<16x128xf32>
    %cst_74 = arith.constant 0.000000e+00 : f32
    %172 = vector.broadcast %cst_74 : f32 to vector<16x128xf32>
    %173 = arith.subf %172, %169 : vector<16x128xf32>
    %174 = arith.select %171, %169, %173 : vector<16x128xi1>, vector<16x128xf32>
    %cst_75 = arith.constant 1.000000e+00 : f32
    %175 = vector.broadcast %cst_75 : f32 to vector<16x128xf32>
    %176 = arith.addf %175, %174 : vector<16x128xf32>
    %177 = arith.mulf %124, %176 : vector<16x128xf32>
    %c0_76 = arith.constant 0 : index
    %c0_77 = arith.constant 0 : index
    %c0_78 = arith.constant 0 : index
    %178 = vector.load %arg13[%c0_76, %c0_77, %c0_78] : memref<2x128x32xf32, #tpu.memory_space<vmem>>, vector<1x128x32xf32>
    %179 = vector.shape_cast %178 : vector<1x128x32xf32> to vector<128x32xf32>
    %cst_79 = arith.constant dense<0.000000e+00> : vector<16x32xf32>
    %180 = tpu.matmul %177, %179, %cst_79 {dimension_numbers = #tpu.dot_dimension_numbers<[1], [0], [0], [1], [0, 0, 1, 1], [], []>} : vector<16x128xf32>, vector<128x32xf32>, vector<16x32xf32> -> vector<16x32xf32>
    %c0_80 = arith.constant 0 : index
    %c0_81 = arith.constant 0 : index
    %c0_82 = arith.constant 0 : index
    %181 = vector.load %arg14[%c0_80, %c0_81, %c0_82] : memref<2x1x32xf32, #tpu.memory_space<vmem>>, vector<1x1x32xf32>
    %182 = vector.shape_cast %181 : vector<1x1x32xf32> to vector<1x32xf32>
    %183 = vector.broadcast %182 : vector<1x32xf32> to vector<16x32xf32>
    %184 = arith.addf %180, %183 : vector<16x32xf32>
    %185 = arith.addf %184, %115 : vector<16x32xf32>
    %c0_83 = arith.constant 0 : index
    %c0_84 = arith.constant 0 : index
    %c0_85 = arith.constant 0 : index
    %186 = vector.load %arg15[%c0_83, %c0_84, %c0_85] : memref<2x1x32xf32, #tpu.memory_space<vmem>>, vector<1x1x32xf32>
    %187 = vector.shape_cast %186 : vector<1x1x32xf32> to vector<1x32xf32>
    %c0_86 = arith.constant 0 : index
    %c0_87 = arith.constant 0 : index
    %c0_88 = arith.constant 0 : index
    %188 = vector.load %arg16[%c0_86, %c0_87, %c0_88] : memref<2x1x32xf32, #tpu.memory_space<vmem>>, vector<1x1x32xf32>
    %189 = vector.shape_cast %188 : vector<1x1x32xf32> to vector<1x32xf32>
    %cst_89 = arith.constant dense<0.000000e+00> : vector<16xf32>
    %190 = vector.multi_reduction <add>, %185, %cst_89 [1] : vector<16x32xf32> to vector<16xf32>
    %191 = vector.shape_cast %190 : vector<16xf32> to vector<16x1xf32>
    %cst_90 = arith.constant 3.200000e+01 : f32
    %192 = vector.broadcast %cst_90 : f32 to vector<16x1xf32>
    %193 = arith.divf %191, %192 : vector<16x1xf32>
    %194 = vector.broadcast %193 : vector<16x1xf32> to vector<16x32xf32>
    %195 = arith.subf %185, %194 : vector<16x32xf32>
    %196 = arith.mulf %195, %195 : vector<16x32xf32>
    %cst_91 = arith.constant dense<0.000000e+00> : vector<16xf32>
    %197 = vector.multi_reduction <add>, %196, %cst_91 [1] : vector<16x32xf32> to vector<16xf32>
    %198 = vector.shape_cast %197 : vector<16xf32> to vector<16x1xf32>
    %cst_92 = arith.constant 3.200000e+01 : f32
    %199 = vector.broadcast %cst_92 : f32 to vector<16x1xf32>
    %200 = arith.divf %198, %199 : vector<16x1xf32>
    %201 = vector.broadcast %193 : vector<16x1xf32> to vector<16x32xf32>
    %202 = arith.subf %185, %201 : vector<16x32xf32>
    %cst_93 = arith.constant 9.99999996E-13 : f32
    %203 = vector.broadcast %cst_93 : f32 to vector<16x1xf32>
    %204 = arith.addf %200, %203 : vector<16x1xf32>
    %205 = math.rsqrt %204 : vector<16x1xf32>
    %206 = vector.broadcast %205 : vector<16x1xf32> to vector<16x32xf32>
    %207 = arith.mulf %202, %206 : vector<16x32xf32>
    %208 = vector.broadcast %187 : vector<1x32xf32> to vector<16x32xf32>
    %209 = arith.mulf %207, %208 : vector<16x32xf32>
    %210 = vector.broadcast %189 : vector<1x32xf32> to vector<16x32xf32>
    %211 = arith.addf %209, %210 : vector<16x32xf32>
    %c1 = arith.constant 1 : index
    %c0_94 = arith.constant 0 : index
    %c0_95 = arith.constant 0 : index
    %212 = vector.load %arg5[%c1, %c0_94, %c0_95] : memref<2x32x96xf32, #tpu.memory_space<vmem>>, vector<1x32x96xf32>
    %213 = vector.shape_cast %212 : vector<1x32x96xf32> to vector<32x96xf32>
    %cst_96 = arith.constant dense<0.000000e+00> : vector<16x96xf32>
    %214 = tpu.matmul %211, %213, %cst_96 {dimension_numbers = #tpu.dot_dimension_numbers<[1], [0], [0], [1], [0, 0, 1, 1], [], []>} : vector<16x32xf32>, vector<32x96xf32>, vector<16x96xf32> -> vector<16x96xf32>
    %c1_97 = arith.constant 1 : index
    %c0_98 = arith.constant 0 : index
    %c0_99 = arith.constant 0 : index
    %215 = vector.load %arg6[%c1_97, %c0_98, %c0_99] : memref<2x1x96xf32, #tpu.memory_space<vmem>>, vector<1x1x96xf32>
    %216 = vector.shape_cast %215 : vector<1x1x96xf32> to vector<1x96xf32>
    %217 = vector.broadcast %216 : vector<1x96xf32> to vector<16x96xf32>
    %218 = arith.addf %214, %217 : vector<16x96xf32>
    %219 = vector.extract_strided_slice %218 {offsets = [0, 0], sizes = [16, 32], strides = [1, 1]} : vector<16x96xf32> to vector<16x32xf32>
    %220 = vector.shape_cast %219 : vector<16x32xf32> to vector<2x8x32xf32>
    %221 = vector.extract_strided_slice %218 {offsets = [0, 32], sizes = [16, 32], strides = [1, 1]} : vector<16x96xf32> to vector<16x32xf32>
    %222 = vector.shape_cast %221 : vector<16x32xf32> to vector<2x8x32xf32>
    %223 = vector.extract_strided_slice %218 {offsets = [0, 64], sizes = [16, 32], strides = [1, 1]} : vector<16x96xf32> to vector<16x32xf32>
    %224 = vector.shape_cast %223 : vector<16x32xf32> to vector<2x8x32xf32>
    %c1_100 = arith.constant 1 : index
    %c0_101 = arith.constant 0 : index
    %c0_102 = arith.constant 0 : index
    %225 = vector.load %arg7[%c1_100, %c0_101, %c0_102] : memref<2x32x32xf32, #tpu.memory_space<vmem>>, vector<1x32x32xf32>
    %226 = vector.shape_cast %225 : vector<1x32x32xf32> to vector<32x32xf32>
    %227 = vector.extract_strided_slice %220 {offsets = [0, 0, 0], sizes = [2, 8, 16], strides = [1, 1, 1]} : vector<2x8x32xf32> to vector<2x8x16xf32>
    %228 = vector.extract_strided_slice %222 {offsets = [0, 0, 0], sizes = [2, 8, 16], strides = [1, 1, 1]} : vector<2x8x32xf32> to vector<2x8x16xf32>
    %229 = vector.extract_strided_slice %224 {offsets = [0, 0, 0], sizes = [2, 8, 16], strides = [1, 1, 1]} : vector<2x8x32xf32> to vector<2x8x16xf32>
    "tpu.trace_start"() <{level = 10 : i32, message = "bqd,bkd->bqk"}> : () -> ()
    %cst_103 = arith.constant dense<0.000000e+00> : vector<2x8x8xf32>
    %230 = tpu.matmul %227, %228, %cst_103 {dimension_numbers = #tpu.dot_dimension_numbers<[2], [2], [1], [1], [0, 0, 0, 1, 1, 1], [0], [0]>} : vector<2x8x16xf32>, vector<2x8x16xf32>, vector<2x8x8xf32> -> vector<2x8x8xf32>
    "tpu.trace_stop"() : () -> ()
    %cst_104 = arith.constant 2.500000e-01 : f32
    %231 = vector.broadcast %cst_104 : f32 to vector<2x8x8xf32>
    %232 = arith.mulf %230, %231 : vector<2x8x8xf32>
    %233 = arith.addf %232, %1 : vector<2x8x8xf32>
    %cst_105 = arith.constant dense<0xFF800000> : vector<2x8xf32>
    %234 = vector.multi_reduction <maximumf>, %233, %cst_105 [2] : vector<2x8x8xf32> to vector<2x8xf32>
    %235 = vector.shape_cast %234 : vector<2x8xf32> to vector<2x8x1xf32>
    %236 = vector.broadcast %235 : vector<2x8x1xf32> to vector<2x8x8xf32>
    %237 = arith.subf %233, %236 : vector<2x8x8xf32>
    %238 = math.exp %237 : vector<2x8x8xf32>
    %cst_106 = arith.constant dense<0.000000e+00> : vector<2x8xf32>
    %239 = vector.multi_reduction <add>, %238, %cst_106 [2] : vector<2x8x8xf32> to vector<2x8xf32>
    %240 = vector.shape_cast %239 : vector<2x8xf32> to vector<2x8x1xf32>
    %241 = tpu.reciprocal %240 {approx = true} : vector<2x8x1xf32> -> vector<2x8x1xf32>
    %242 = vector.broadcast %241 : vector<2x8x1xf32> to vector<2x8x8xf32>
    %243 = arith.mulf %238, %242 : vector<2x8x8xf32>
    "tpu.trace_start"() <{level = 10 : i32, message = "bqk,bkd->bqd"}> : () -> ()
    %cst_107 = arith.constant dense<0.000000e+00> : vector<2x8x16xf32>
    %244 = tpu.matmul %243, %229, %cst_107 {dimension_numbers = #tpu.dot_dimension_numbers<[2], [1], [1], [2], [0, 0, 0, 1, 1, 2], [0], [0]>} : vector<2x8x8xf32>, vector<2x8x16xf32>, vector<2x8x16xf32> -> vector<2x8x16xf32>
    "tpu.trace_stop"() : () -> ()
    %245 = vector.shape_cast %244 : vector<2x8x16xf32> to vector<16x16xf32>
    %246 = vector.extract_strided_slice %226 {offsets = [0, 0], sizes = [16, 32], strides = [1, 1]} : vector<32x32xf32> to vector<16x32xf32>
    %cst_108 = arith.constant dense<0.000000e+00> : vector<16x32xf32>
    %247 = tpu.matmul %245, %246, %cst_108 {dimension_numbers = #tpu.dot_dimension_numbers<[1], [0], [0], [1], [0, 0, 1, 1], [], []>} : vector<16x16xf32>, vector<16x32xf32>, vector<16x32xf32> -> vector<16x32xf32>
    %248 = vector.extract_strided_slice %220 {offsets = [0, 0, 16], sizes = [2, 8, 16], strides = [1, 1, 1]} : vector<2x8x32xf32> to vector<2x8x16xf32>
    %249 = vector.extract_strided_slice %222 {offsets = [0, 0, 16], sizes = [2, 8, 16], strides = [1, 1, 1]} : vector<2x8x32xf32> to vector<2x8x16xf32>
    %250 = vector.extract_strided_slice %224 {offsets = [0, 0, 16], sizes = [2, 8, 16], strides = [1, 1, 1]} : vector<2x8x32xf32> to vector<2x8x16xf32>
    "tpu.trace_start"() <{level = 10 : i32, message = "bqd,bkd->bqk"}> : () -> ()
    %cst_109 = arith.constant dense<0.000000e+00> : vector<2x8x8xf32>
    %251 = tpu.matmul %248, %249, %cst_109 {dimension_numbers = #tpu.dot_dimension_numbers<[2], [2], [1], [1], [0, 0, 0, 1, 1, 1], [0], [0]>} : vector<2x8x16xf32>, vector<2x8x16xf32>, vector<2x8x8xf32> -> vector<2x8x8xf32>
    "tpu.trace_stop"() : () -> ()
    %cst_110 = arith.constant 2.500000e-01 : f32
    %252 = vector.broadcast %cst_110 : f32 to vector<2x8x8xf32>
    %253 = arith.mulf %251, %252 : vector<2x8x8xf32>
    %254 = arith.addf %253, %1 : vector<2x8x8xf32>
    %cst_111 = arith.constant dense<0xFF800000> : vector<2x8xf32>
    %255 = vector.multi_reduction <maximumf>, %254, %cst_111 [2] : vector<2x8x8xf32> to vector<2x8xf32>
    %256 = vector.shape_cast %255 : vector<2x8xf32> to vector<2x8x1xf32>
    %257 = vector.broadcast %256 : vector<2x8x1xf32> to vector<2x8x8xf32>
    %258 = arith.subf %254, %257 : vector<2x8x8xf32>
    %259 = math.exp %258 : vector<2x8x8xf32>
    %cst_112 = arith.constant dense<0.000000e+00> : vector<2x8xf32>
    %260 = vector.multi_reduction <add>, %259, %cst_112 [2] : vector<2x8x8xf32> to vector<2x8xf32>
    %261 = vector.shape_cast %260 : vector<2x8xf32> to vector<2x8x1xf32>
    %262 = tpu.reciprocal %261 {approx = true} : vector<2x8x1xf32> -> vector<2x8x1xf32>
    %263 = vector.broadcast %262 : vector<2x8x1xf32> to vector<2x8x8xf32>
    %264 = arith.mulf %259, %263 : vector<2x8x8xf32>
    "tpu.trace_start"() <{level = 10 : i32, message = "bqk,bkd->bqd"}> : () -> ()
    %cst_113 = arith.constant dense<0.000000e+00> : vector<2x8x16xf32>
    %265 = tpu.matmul %264, %250, %cst_113 {dimension_numbers = #tpu.dot_dimension_numbers<[2], [1], [1], [2], [0, 0, 0, 1, 1, 2], [0], [0]>} : vector<2x8x8xf32>, vector<2x8x16xf32>, vector<2x8x16xf32> -> vector<2x8x16xf32>
    "tpu.trace_stop"() : () -> ()
    %266 = vector.shape_cast %265 : vector<2x8x16xf32> to vector<16x16xf32>
    %267 = vector.extract_strided_slice %226 {offsets = [16, 0], sizes = [16, 32], strides = [1, 1]} : vector<32x32xf32> to vector<16x32xf32>
    %cst_114 = arith.constant dense<0.000000e+00> : vector<16x32xf32>
    %268 = tpu.matmul %266, %267, %cst_114 {dimension_numbers = #tpu.dot_dimension_numbers<[1], [0], [0], [1], [0, 0, 1, 1], [], []>} : vector<16x16xf32>, vector<16x32xf32>, vector<16x32xf32> -> vector<16x32xf32>
    %269 = arith.addf %247, %268 : vector<16x32xf32>
    %c1_115 = arith.constant 1 : index
    %c0_116 = arith.constant 0 : index
    %c0_117 = arith.constant 0 : index
    %270 = vector.load %arg8[%c1_115, %c0_116, %c0_117] : memref<2x1x32xf32, #tpu.memory_space<vmem>>, vector<1x1x32xf32>
    %271 = vector.shape_cast %270 : vector<1x1x32xf32> to vector<1x32xf32>
    %272 = vector.broadcast %271 : vector<1x32xf32> to vector<16x32xf32>
    %273 = arith.addf %269, %272 : vector<16x32xf32>
    %274 = arith.addf %273, %211 : vector<16x32xf32>
    %c1_118 = arith.constant 1 : index
    %c0_119 = arith.constant 0 : index
    %c0_120 = arith.constant 0 : index
    %275 = vector.load %arg9[%c1_118, %c0_119, %c0_120] : memref<2x1x32xf32, #tpu.memory_space<vmem>>, vector<1x1x32xf32>
    %276 = vector.shape_cast %275 : vector<1x1x32xf32> to vector<1x32xf32>
    %c1_121 = arith.constant 1 : index
    %c0_122 = arith.constant 0 : index
    %c0_123 = arith.constant 0 : index
    %277 = vector.load %arg10[%c1_121, %c0_122, %c0_123] : memref<2x1x32xf32, #tpu.memory_space<vmem>>, vector<1x1x32xf32>
    %278 = vector.shape_cast %277 : vector<1x1x32xf32> to vector<1x32xf32>
    %cst_124 = arith.constant dense<0.000000e+00> : vector<16xf32>
    %279 = vector.multi_reduction <add>, %274, %cst_124 [1] : vector<16x32xf32> to vector<16xf32>
    %280 = vector.shape_cast %279 : vector<16xf32> to vector<16x1xf32>
    %cst_125 = arith.constant 3.200000e+01 : f32
    %281 = vector.broadcast %cst_125 : f32 to vector<16x1xf32>
    %282 = arith.divf %280, %281 : vector<16x1xf32>
    %283 = vector.broadcast %282 : vector<16x1xf32> to vector<16x32xf32>
    %284 = arith.subf %274, %283 : vector<16x32xf32>
    %285 = arith.mulf %284, %284 : vector<16x32xf32>
    %cst_126 = arith.constant dense<0.000000e+00> : vector<16xf32>
    %286 = vector.multi_reduction <add>, %285, %cst_126 [1] : vector<16x32xf32> to vector<16xf32>
    %287 = vector.shape_cast %286 : vector<16xf32> to vector<16x1xf32>
    %cst_127 = arith.constant 3.200000e+01 : f32
    %288 = vector.broadcast %cst_127 : f32 to vector<16x1xf32>
    %289 = arith.divf %287, %288 : vector<16x1xf32>
    %290 = vector.broadcast %282 : vector<16x1xf32> to vector<16x32xf32>
    %291 = arith.subf %274, %290 : vector<16x32xf32>
    %cst_128 = arith.constant 9.99999996E-13 : f32
    %292 = vector.broadcast %cst_128 : f32 to vector<16x1xf32>
    %293 = arith.addf %289, %292 : vector<16x1xf32>
    %294 = math.rsqrt %293 : vector<16x1xf32>
    %295 = vector.broadcast %294 : vector<16x1xf32> to vector<16x32xf32>
    %296 = arith.mulf %291, %295 : vector<16x32xf32>
    %297 = vector.broadcast %276 : vector<1x32xf32> to vector<16x32xf32>
    %298 = arith.mulf %296, %297 : vector<16x32xf32>
    %299 = vector.broadcast %278 : vector<1x32xf32> to vector<16x32xf32>
    %300 = arith.addf %298, %299 : vector<16x32xf32>
    %c1_129 = arith.constant 1 : index
    %c0_130 = arith.constant 0 : index
    %c0_131 = arith.constant 0 : index
    %301 = vector.load %arg11[%c1_129, %c0_130, %c0_131] : memref<2x32x128xf32, #tpu.memory_space<vmem>>, vector<1x32x128xf32>
    %302 = vector.shape_cast %301 : vector<1x32x128xf32> to vector<32x128xf32>
    %cst_132 = arith.constant dense<0.000000e+00> : vector<16x128xf32>
    %303 = tpu.matmul %300, %302, %cst_132 {dimension_numbers = #tpu.dot_dimension_numbers<[1], [0], [0], [1], [0, 0, 1, 1], [], []>} : vector<16x32xf32>, vector<32x128xf32>, vector<16x128xf32> -> vector<16x128xf32>
    %c1_133 = arith.constant 1 : index
    %c0_134 = arith.constant 0 : index
    %c0_135 = arith.constant 0 : index
    %304 = vector.load %arg12[%c1_133, %c0_134, %c0_135] : memref<2x1x128xf32, #tpu.memory_space<vmem>>, vector<1x1x128xf32>
    %305 = vector.shape_cast %304 : vector<1x1x128xf32> to vector<1x128xf32>
    %306 = vector.broadcast %305 : vector<1x128xf32> to vector<16x128xf32>
    %307 = arith.addf %303, %306 : vector<16x128xf32>
    %cst_136 = arith.constant 5.000000e-01 : f32
    %308 = vector.broadcast %cst_136 : f32 to vector<16x128xf32>
    %309 = arith.mulf %308, %307 : vector<16x128xf32>
    %cst_137 = arith.constant 0.707106769 : f32
    %310 = vector.broadcast %cst_137 : f32 to vector<16x128xf32>
    %311 = arith.mulf %307, %310 : vector<16x128xf32>
    %312 = math.absf %311 : vector<16x128xf32>
    %cst_138 = arith.constant 5.000000e-01 : f32
    %313 = vector.broadcast %cst_138 : f32 to vector<16x128xf32>
    %314 = arith.mulf %313, %312 : vector<16x128xf32>
    %cst_139 = arith.constant 1.000000e+00 : f32
    %315 = vector.broadcast %cst_139 : f32 to vector<16x128xf32>
    %316 = arith.addf %315, %314 : vector<16x128xf32>
    %cst_140 = arith.constant 1.000000e+00 : f32
    %317 = vector.broadcast %cst_140 : f32 to vector<16x128xf32>
    %318 = arith.divf %317, %316 : vector<16x128xf32>
    %cst_141 = arith.constant 0.000000e+00 : f32
    %319 = vector.broadcast %cst_141 : f32 to vector<16x128xf32>
    %320 = arith.subf %319, %312 : vector<16x128xf32>
    %321 = arith.mulf %320, %312 : vector<16x128xf32>
    %cst_142 = arith.constant 1.26551223 : f32
    %322 = vector.broadcast %cst_142 : f32 to vector<16x128xf32>
    %323 = arith.subf %321, %322 : vector<16x128xf32>
    %cst_143 = arith.constant 0.170872763 : f32
    %324 = vector.broadcast %cst_143 : f32 to vector<16x128xf32>
    %325 = arith.mulf %318, %324 : vector<16x128xf32>
    %cst_144 = arith.constant -0.822152256 : f32
    %326 = vector.broadcast %cst_144 : f32 to vector<16x128xf32>
    %327 = arith.addf %326, %325 : vector<16x128xf32>
    %328 = arith.mulf %318, %327 : vector<16x128xf32>
    %cst_145 = arith.constant 1.48851585 : f32
    %329 = vector.broadcast %cst_145 : f32 to vector<16x128xf32>
    %330 = arith.addf %329, %328 : vector<16x128xf32>
    %331 = arith.mulf %318, %330 : vector<16x128xf32>
    %cst_146 = arith.constant -1.13520396 : f32
    %332 = vector.broadcast %cst_146 : f32 to vector<16x128xf32>
    %333 = arith.addf %332, %331 : vector<16x128xf32>
    %334 = arith.mulf %318, %333 : vector<16x128xf32>
    %cst_147 = arith.constant 0.278868079 : f32
    %335 = vector.broadcast %cst_147 : f32 to vector<16x128xf32>
    %336 = arith.addf %335, %334 : vector<16x128xf32>
    %337 = arith.mulf %318, %336 : vector<16x128xf32>
    %cst_148 = arith.constant -0.186288059 : f32
    %338 = vector.broadcast %cst_148 : f32 to vector<16x128xf32>
    %339 = arith.addf %338, %337 : vector<16x128xf32>
    %340 = arith.mulf %318, %339 : vector<16x128xf32>
    %cst_149 = arith.constant 0.0967841818 : f32
    %341 = vector.broadcast %cst_149 : f32 to vector<16x128xf32>
    %342 = arith.addf %341, %340 : vector<16x128xf32>
    %343 = arith.mulf %318, %342 : vector<16x128xf32>
    %cst_150 = arith.constant 0.374091953 : f32
    %344 = vector.broadcast %cst_150 : f32 to vector<16x128xf32>
    %345 = arith.addf %344, %343 : vector<16x128xf32>
    %346 = arith.mulf %318, %345 : vector<16x128xf32>
    %cst_151 = arith.constant 1.00002372 : f32
    %347 = vector.broadcast %cst_151 : f32 to vector<16x128xf32>
    %348 = arith.addf %347, %346 : vector<16x128xf32>
    %349 = arith.mulf %318, %348 : vector<16x128xf32>
    %350 = arith.addf %323, %349 : vector<16x128xf32>
    %351 = math.exp %350 : vector<16x128xf32>
    %352 = arith.mulf %318, %351 : vector<16x128xf32>
    %cst_152 = arith.constant 1.000000e+00 : f32
    %353 = vector.broadcast %cst_152 : f32 to vector<16x128xf32>
    %354 = arith.subf %353, %352 : vector<16x128xf32>
    %cst_153 = arith.constant 0.000000e+00 : f32
    %355 = vector.broadcast %cst_153 : f32 to vector<16x128xf32>
    %356 = arith.cmpf oge, %311, %355 : vector<16x128xf32>
    %cst_154 = arith.constant 0.000000e+00 : f32
    %357 = vector.broadcast %cst_154 : f32 to vector<16x128xf32>
    %358 = arith.subf %357, %354 : vector<16x128xf32>
    %359 = arith.select %356, %354, %358 : vector<16x128xi1>, vector<16x128xf32>
    %cst_155 = arith.constant 1.000000e+00 : f32
    %360 = vector.broadcast %cst_155 : f32 to vector<16x128xf32>
    %361 = arith.addf %360, %359 : vector<16x128xf32>
    %362 = arith.mulf %309, %361 : vector<16x128xf32>
    %c1_156 = arith.constant 1 : index
    %c0_157 = arith.constant 0 : index
    %c0_158 = arith.constant 0 : index
    %363 = vector.load %arg13[%c1_156, %c0_157, %c0_158] : memref<2x128x32xf32, #tpu.memory_space<vmem>>, vector<1x128x32xf32>
    %364 = vector.shape_cast %363 : vector<1x128x32xf32> to vector<128x32xf32>
    %cst_159 = arith.constant dense<0.000000e+00> : vector<16x32xf32>
    %365 = tpu.matmul %362, %364, %cst_159 {dimension_numbers = #tpu.dot_dimension_numbers<[1], [0], [0], [1], [0, 0, 1, 1], [], []>} : vector<16x128xf32>, vector<128x32xf32>, vector<16x32xf32> -> vector<16x32xf32>
    %c1_160 = arith.constant 1 : index
    %c0_161 = arith.constant 0 : index
    %c0_162 = arith.constant 0 : index
    %366 = vector.load %arg14[%c1_160, %c0_161, %c0_162] : memref<2x1x32xf32, #tpu.memory_space<vmem>>, vector<1x1x32xf32>
    %367 = vector.shape_cast %366 : vector<1x1x32xf32> to vector<1x32xf32>
    %368 = vector.broadcast %367 : vector<1x32xf32> to vector<16x32xf32>
    %369 = arith.addf %365, %368 : vector<16x32xf32>
    %370 = arith.addf %369, %300 : vector<16x32xf32>
    %c1_163 = arith.constant 1 : index
    %c0_164 = arith.constant 0 : index
    %c0_165 = arith.constant 0 : index
    %371 = vector.load %arg15[%c1_163, %c0_164, %c0_165] : memref<2x1x32xf32, #tpu.memory_space<vmem>>, vector<1x1x32xf32>
    %372 = vector.shape_cast %371 : vector<1x1x32xf32> to vector<1x32xf32>
    %c1_166 = arith.constant 1 : index
    %c0_167 = arith.constant 0 : index
    %c0_168 = arith.constant 0 : index
    %373 = vector.load %arg16[%c1_166, %c0_167, %c0_168] : memref<2x1x32xf32, #tpu.memory_space<vmem>>, vector<1x1x32xf32>
    %374 = vector.shape_cast %373 : vector<1x1x32xf32> to vector<1x32xf32>
    %cst_169 = arith.constant dense<0.000000e+00> : vector<16xf32>
    %375 = vector.multi_reduction <add>, %370, %cst_169 [1] : vector<16x32xf32> to vector<16xf32>
    %376 = vector.shape_cast %375 : vector<16xf32> to vector<16x1xf32>
    %cst_170 = arith.constant 3.200000e+01 : f32
    %377 = vector.broadcast %cst_170 : f32 to vector<16x1xf32>
    %378 = arith.divf %376, %377 : vector<16x1xf32>
    %379 = vector.broadcast %378 : vector<16x1xf32> to vector<16x32xf32>
    %380 = arith.subf %370, %379 : vector<16x32xf32>
    %381 = arith.mulf %380, %380 : vector<16x32xf32>
    %cst_171 = arith.constant dense<0.000000e+00> : vector<16xf32>
    %382 = vector.multi_reduction <add>, %381, %cst_171 [1] : vector<16x32xf32> to vector<16xf32>
    %383 = vector.shape_cast %382 : vector<16xf32> to vector<16x1xf32>
    %cst_172 = arith.constant 3.200000e+01 : f32
    %384 = vector.broadcast %cst_172 : f32 to vector<16x1xf32>
    %385 = arith.divf %383, %384 : vector<16x1xf32>
    %386 = vector.broadcast %378 : vector<16x1xf32> to vector<16x32xf32>
    %387 = arith.subf %370, %386 : vector<16x32xf32>
    %cst_173 = arith.constant 9.99999996E-13 : f32
    %388 = vector.broadcast %cst_173 : f32 to vector<16x1xf32>
    %389 = arith.addf %385, %388 : vector<16x1xf32>
    %390 = math.rsqrt %389 : vector<16x1xf32>
    %391 = vector.broadcast %390 : vector<16x1xf32> to vector<16x32xf32>
    %392 = arith.mulf %387, %391 : vector<16x32xf32>
    %393 = vector.broadcast %372 : vector<1x32xf32> to vector<16x32xf32>
    %394 = arith.mulf %392, %393 : vector<16x32xf32>
    %395 = vector.broadcast %374 : vector<1x32xf32> to vector<16x32xf32>
    %396 = arith.addf %394, %395 : vector<16x32xf32>
    %397 = vector.shape_cast %396 : vector<16x32xf32> to vector<2x8x32xf32>
    %398 = vector.extract_strided_slice %397 {offsets = [0, 7, 0], sizes = [2, 1, 32], strides = [1, 1, 1]} : vector<2x8x32xf32> to vector<2x1x32xf32>
    %399 = vector.shape_cast %398 : vector<2x1x32xf32> to vector<2x32xf32>
    %c0_174 = arith.constant 0 : index
    %c0_175 = arith.constant 0 : index
    %400 = vector.load %arg2[%c0_174, %c0_175] : memref<32x16xf32, #tpu.memory_space<vmem>>, vector<32x16xf32>
    %cst_176 = arith.constant dense<0.000000e+00> : vector<2x16xf32>
    %401 = tpu.matmul %399, %400, %cst_176 {dimension_numbers = #tpu.dot_dimension_numbers<[1], [0], [0], [1], [0, 0, 1, 1], [], []>} : vector<2x32xf32>, vector<32x16xf32>, vector<2x16xf32> -> vector<2x16xf32>
    %c0_177 = arith.constant 0 : index
    %c0_178 = arith.constant 0 : index
    %402 = vector.load %arg17[%c0_177, %c0_178] : memref<2x16xf32, #tpu.memory_space<vmem>>, vector<2x16xf32>
    tpu.vector_store %arg17[%c0_177, %c0_178], %401 {strides = array<i32>} : memref<2x16xf32, #tpu.memory_space<vmem>>, vector<2x16xf32>,
    return
  }
}

</mosaic_0001>

<llo_original>
// kernel: sasrec_forward.1
$region0: #{sasrec_forward.1}
  #allocation0 [shape = 'u32[]', space=smem, size = 0x4, offset = 0x4, fixed_abs, tag = 'smem constant byte address 0x4 - core index']
  #allocation1 [shape = 'u32[144,128]{1,0:T(1,128)}', space=vmem, size = 0x12000, scoped, tag = 'internal scratch']
  %s0 = inlined_call_operand.vmem [shape: f32[2,8,32], index: 0, kind: input, shape index: {}]
  %s1 = inlined_call_operand.vmem [shape: f32[2,8,8], index: 1, kind: input, shape index: {}]
  %s2 = inlined_call_operand.vmem [shape: f32[32,16], index: 2, kind: input, shape index: {}]
  %s3 = inlined_call_operand.vmem [shape: f32[1,32], index: 3, kind: input, shape index: {}]
  %s4 = inlined_call_operand.vmem [shape: f32[1,32], index: 4, kind: input, shape index: {}]
  %s5 = inlined_call_operand.vmem [shape: f32[2,32,96], index: 5, kind: input, shape index: {}]
  %s6 = inlined_call_operand.vmem [shape: f32[2,1,96], index: 6, kind: input, shape index: {}]
  %s7 = inlined_call_operand.vmem [shape: f32[2,32,32], index: 7, kind: input, shape index: {}]
  %s8 = inlined_call_operand.vmem [shape: f32[2,1,32], index: 8, kind: input, shape index: {}]
  %s9 = inlined_call_operand.vmem [shape: f32[2,1,32], index: 9, kind: input, shape index: {}]
  %s10 = inlined_call_operand.vmem [shape: f32[2,1,32], index: 10, kind: input, shape index: {}]
  %s11 = inlined_call_operand.vmem [shape: f32[2,32,128], index: 11, kind: input, shape index: {}]
  %s12 = inlined_call_operand.vmem [shape: f32[2,1,128], index: 12, kind: input, shape index: {}]
  %s13 = inlined_call_operand.vmem [shape: f32[2,128,32], index: 13, kind: input, shape index: {}]
  %s14 = inlined_call_operand.vmem [shape: f32[2,1,32], index: 14, kind: input, shape index: {}]
  %s15 = inlined_call_operand.vmem [shape: f32[2,1,32], index: 15, kind: input, shape index: {}]
  %s16 = inlined_call_operand.vmem [shape: f32[2,1,32], index: 16, kind: input, shape index: {}]
  %s17 = inlined_call_operand.hbm [shape: f32[2,16], index: 17, kind: output, shape index: {}]
  %s18 = sld [smem:[#allocation0]]
  $region78: #{sasrec_forward.1} parent=0
    _
  %s20 = ssub.s32 1, %s18
  %s21 = scalar_select 0, %s20, %s18
  $region1: #{sasrec_forward.1} parent=0
    #allocation2 [shape = 'u8[1024]{0}', space=vmem, size = 0x400, scoped, tag = 'output window, operand 0, single buffered']
    #allocation3 [shape = 's32[1]{0}', space=sflag, size = 0x4, scoped, tag = 'scoped memory for sasrec_forward.1']
    %22 = vsyncpa [#allocation3], 0
    // Predicated region
    $region2: #{sasrec_forward.1} parent=1 // pred_check
      _
    $region3: #{sasrec_forward.1} parent=1 // pred_check_branch
      %24 = sbr.rel (0) target = $region5
    $region4: #{sasrec_forward.1} parent=1 // pred_region
      _
    $region5: #{sasrec_forward.1} parent=1 // pred_fallthru
      _
    // Predicated region
    $region6: #{sasrec_forward.1} parent=1 // pred_check
      _
    $region7: #{sasrec_forward.1} parent=1 // pred_check_branch
      %26 = sbr.rel (0) target = $region9
    $region8: #{sasrec_forward.1} parent=1 // pred_region
      _
    $region9: #{sasrec_forward.1} parent=1 // pred_fallthru
      _
    // Predicated region
    $region10: #{sasrec_forward.1} parent=1 // pred_check
      _
    $region11: #{sasrec_forward.1} parent=1 // pred_check_branch
      %28 = sbr.rel (0) target = $region13
    $region12: #{sasrec_forward.1} parent=1 // pred_region
      _
    $region13: #{sasrec_forward.1} parent=1 // pred_fallthru
      _
    // Predicated region
    $region14: #{sasrec_forward.1} parent=1 // pred_check
      _
    $region15: #{sasrec_forward.1} parent=1 // pred_check_branch
      %30 = sbr.rel (0) target = $region17
    $region16: #{sasrec_forward.1} parent=1 // pred_region
      _
    $region17: #{sasrec_forward.1} parent=1 // pred_fallthru
      _
    // Predicated region
    $region18: #{sasrec_forward.1} parent=1 // pred_check
      _
    $region19: #{sasrec_forward.1} parent=1 // pred_check_branch
      %32 = sbr.rel (0) target = $region21
    $region20: #{sasrec_forward.1} parent=1 // pred_region
      _
    $region21: #{sasrec_forward.1} parent=1 // pred_fallthru
      _
    // Predicated region
    $region22: #{sasrec_forward.1} parent=1 // pred_check
      _
    $region23: #{sasrec_forward.1} parent=1 // pred_check_branch
      %34 = sbr.rel (0) target = $region25
    $region24: #{sasrec_forward.1} parent=1 // pred_region
      _
    $region25: #{sasrec_forward.1} parent=1 // pred_fallthru
      _
    // Predicated region
    $region26: #{sasrec_forward.1} parent=1 // pred_check
      _
    $region27: #{sasrec_forward.1} parent=1 // pred_check_branch
      %36 = sbr.rel (0) target = $region29
    $region28: #{sasrec_forward.1} parent=1 // pred_region
      _
    $region29: #{sasrec_forward.1} parent=1 // pred_fallthru
      _
    // Predicated region
    $region30: #{sasrec_forward.1} parent=1 // pred_check
      _
    $region31: #{sasrec_forward.1} parent=1 // pred_check_branch
      %38 = sbr.rel (0) target = $region33
    $region32: #{sasrec_forward.1} parent=1 // pred_region
      _
    $region33: #{sasrec_forward.1} parent=1 // pred_fallthru
      _
    // Predicated region
    $region34: #{sasrec_forward.1} parent=1 // pred_check
      _
    $region35: #{sasrec_forward.1} parent=1 // pred_check_branch
      %40 = sbr.rel (0) target = $region37
    $region36: #{sasrec_forward.1} parent=1 // pred_region
      _
    $region37: #{sasrec_forward.1} parent=1 // pred_fallthru
      _
    // Predicated region
    $region38: #{sasrec_forward.1} parent=1 // pred_check
      _
    $region39: #{sasrec_forward.1} parent=1 // pred_check_branch
      %42 = sbr.rel (0) target = $region41
    $region40: #{sasrec_forward.1} parent=1 // pred_region
      _
    $region41: #{sasrec_forward.1} parent=1 // pred_fallthru
      _
    // Predicated region
    $region42: #{sasrec_forward.1} parent=1 // pred_check
      _
    $region43: #{sasrec_forward.1} parent=1 // pred_check_branch
      %44 = sbr.rel (0) target = $region45
    $region44: #{sasrec_forward.1} parent=1 // pred_region
      _
    $region45: #{sasrec_forward.1} parent=1 // pred_fallthru
      _
    // Predicated region
    $region46: #{sasrec_forward.1} parent=1 // pred_check
      _
    $region47: #{sasrec_forward.1} parent=1 // pred_check_branch
      %46 = sbr.rel (0) target = $region49
    $region48: #{sasrec_forward.1} parent=1 // pred_region
      _
    $region49: #{sasrec_forward.1} parent=1 // pred_fallthru
      _
    // Predicated region
    $region50: #{sasrec_forward.1} parent=1 // pred_check
      _
    $region51: #{sasrec_forward.1} parent=1 // pred_check_branch
      %48 = sbr.rel (0) target = $region53
    $region52: #{sasrec_forward.1} parent=1 // pred_region
      _
    $region53: #{sasrec_forward.1} parent=1 // pred_fallthru
      _
    // Predicated region
    $region54: #{sasrec_forward.1} parent=1 // pred_check
      _
    $region55: #{sasrec_forward.1} parent=1 // pred_check_branch
      %50 = sbr.rel (0) target = $region57
    $region56: #{sasrec_forward.1} parent=1 // pred_region
      _
    $region57: #{sasrec_forward.1} parent=1 // pred_fallthru
      _
    // Predicated region
    $region58: #{sasrec_forward.1} parent=1 // pred_check
      _
    $region59: #{sasrec_forward.1} parent=1 // pred_check_branch
      %52 = sbr.rel (0) target = $region61
    $region60: #{sasrec_forward.1} parent=1 // pred_region
      _
    $region61: #{sasrec_forward.1} parent=1 // pred_fallthru
      _
    // Predicated region
    $region62: #{sasrec_forward.1} parent=1 // pred_check
      _
    $region63: #{sasrec_forward.1} parent=1 // pred_check_branch
      %54 = sbr.rel (0) target = $region65
    $region64: #{sasrec_forward.1} parent=1 // pred_region
      _
    $region65: #{sasrec_forward.1} parent=1 // pred_fallthru
      _
    // Predicated region
    $region66: #{sasrec_forward.1} parent=1 // pred_check
      _
    $region67: #{sasrec_forward.1} parent=1 // pred_check_branch
      %56 = sbr.rel (0) target = $region69
    $region68: #{sasrec_forward.1} parent=1 // pred_region
      _
    $region69: #{sasrec_forward.1} parent=1 // pred_fallthru
      _
    %v57 = vld [vmem:[%s0] sm:$0xff]
    %v58 = vld [vmem:[%s0 + $0x8] sm:$0xff]
    %v59 = vld [vmem:[%s1] sm:$0xff]
    %v60 = vld [vmem:[%s1 + $0x8] sm:$0xff]
    %v61 = vld [vmem:[%s3] sm:$0x1]
    %v62 = vld [vmem:[%s4] sm:$0x1]
    %vm63 = vcmask 261120
    %v64 = vsel %vm63, %v57, 0.0
    %65 = vadd.xlane.f32.xlu0 %v64
    %v66 = vpop.xlane.xlu0 %65
    %v67 = vsel %vm63, %v58, 0.0
    %68 = vadd.xlane.f32.xlu0 %v67
    %v69 = vpop.xlane.xlu0 %68
    %v70 = vrcp.pop 32.0
    %v71 = vmul.f32 %v66, %v70
    %v72 = vmul.f32 %v69, %v70
    %v73 = vsub.f32 %v57, %v71
    %v74 = vsub.f32 %v58, %v72
    %v75 = vmul.f32 %v73, %v73
    %v76 = vmul.f32 %v74, %v74
    %v77 = vsel %vm63, %v75, 0.0
    %78 = vadd.xlane.f32.xlu0 %v77
    %v79 = vpop.xlane.xlu0 %78
    %v80 = vsel %vm63, %v76, 0.0
    %81 = vadd.xlane.f32.xlu0 %v80
    %v82 = vpop.xlane.xlu0 %81
    %v83 = vmul.f32 %v79, %v70
    %v84 = vmul.f32 %v82, %v70
    %v85 = vadd.f32 %v83, 1e-05
    %v86 = vadd.f32 %v84, 1e-05
    %v87 = vrsqrt.pop %v85
    %v88 = vrsqrt.pop %v86
    %v89 = vmul.f32 %v73, %v87
    %v90 = vmul.f32 %v74, %v88
    %v92 = vlaneseq
    %v93 = vshrl.u32 %v92, 7
    %v94 = vsub.s32 0, %v93
    %v95 = vrot.slane %v61, %v94
    %v97 = vmul.f32 %v89, %v95
    %v98 = vmul.f32 %v90, %v95
    %v100 = vlaneseq
    %v101 = vshrl.u32 %v100, 7
    %v102 = vsub.s32 0, %v101
    %v103 = vrot.slane %v62, %v102
    %v105 = vadd.f32 %v97, %v103
    %v106 = vadd.f32 %v98, %v103
    %v107 = vld [vmem:[%s5] sm:$0xff]
    %v108 = vld [vmem:[%s5 + $0x8] sm:$0xff]
    %v109 = vld [vmem:[%s5 + $0x10] sm:$0xff]
    %v110 = vld [vmem:[%s5 + $0x18] sm:$0xff]
    %v111 = vld [vmem:[%s6] sm:$0x1]
    %v113 = vlaneseq
    %v114 = vshrl.u32 %v113, 7
    %v115 = vsub.s32 0, %v114
    %v116 = vrot.slane %v111, %v115
    %v119 = vsel %vm63, %v105, 0
    %v122 = vsel %vm63, %v106, 0
    %124 = vmatprep.subr.mxu0 0.0
    %125 = vmatpush1.msra.mxu0 %v107
    %126 = vmatprep.subr.mxu0 0.0
    %127 = vmatpush1.msra.mxu0 %v108
    %128 = vmatprep.subr.mxu0 0.0
    %129 = vmatpush1.msra.mxu0 %v109
    %130 = vmatprep.subr.mxu0 0.0
    %131 = vmatpush1.msra.mxu0 %v110
    %132 = vmatprep.subr.mxu0 0.0
    %133 = vmatpush1.msra.mxu0 0.0
    %134 = vmatprep.subr.mxu0 0.0
    %135 = vmatpush1.msra.mxu0 0.0
    %136 = vmatprep.subr.mxu0 0.0
    %137 = vmatpush1.msra.mxu0 0.0
    %138 = vmatprep.subr.mxu0 0.0
    %139 = vmatpush1.msra.mxu0 0.0
    %140 = vmatprep.subr.mxu0 0.0
    %141 = vmatpush1.msra.mxu0 0.0
    %142 = vmatprep.subr.mxu0 0.0
    %143 = vmatpush1.msra.mxu0 0.0
    %144 = vmatprep.subr.mxu0 0.0
    %145 = vmatpush1.msra.mxu0 0.0
    %146 = vmatprep.subr.mxu0 0.0
    %147 = vmatpush1.msra.mxu0 0.0
    %148 = vmatprep.subr.mxu0 0.0
    %149 = vmatpush1.msra.mxu0 0.0
    %150 = vmatprep.subr.mxu0 0.0
    %151 = vmatpush1.msra.mxu0 0.0
    %152 = vmatprep.subr.mxu0 0.0
    %153 = vmatpush1.msra.mxu0 0.0
    %154 = vmatprep.subr.mxu0 0.0
    %155 = vmatpush1.msra.mxu0 0.0
    %156 = vmatprep.subr.mxu0 0.0
    %157 = vmatpush1.msra.mxu0 0.0
    %158 = vmatprep.subr.mxu0 0.0
    %159 = vmatpush1.msra.mxu0 0.0
    %160 = vmatprep.subr.mxu0 0.0
    %161 = vmatpush1.msra.mxu0 0.0
    %162 = vmatprep.subr.mxu0 0.0
    %163 = vmatpush1.msra.mxu0 0.0
    %164 = vmatprep.subr.mxu0 0.0
    %165 = vmatpush1.msra.mxu0 0.0
    %166 = vmatprep.subr.mxu0 0.0
    %167 = vmatpush1.msra.mxu0 0.0
    %168 = vmatprep.subr.mxu0 0.0
    %169 = vmatpush1.msra.mxu0 0.0
    %170 = vmatprep.subr.mxu0 0.0
    %171 = vmatpush1.msra.mxu0 0.0
    %172 = vmatprep.subr.mxu0 0.0
    %173 = vmatpush1.msra.mxu0 0.0
    %174 = vmatprep.subr.mxu0 0.0
    %175 = vmatpush1.msra.mxu0 0.0
    %176 = vmatprep.subr.mxu0 0.0
    %177 = vmatpush1.msra.mxu0 0.0
    %178 = vmatprep.subr.mxu0 0.0
    %179 = vmatpush1.msra.mxu0 0.0
    %180 = vmatprep.subr.mxu0 0.0
    %181 = vmatpush1.msra.mxu0 0.0
    %182 = vmatprep.subr.mxu0 0.0
    %183 = vmatpush1.msra.mxu0 0.0
    %184 = vmatprep.subr.mxu0 0.0
    %185 = vmatpush1.msra.mxu0 0.0
    %186 = vmatprep.subr.mxu0 0.0
    %187 = vmatpush1.msra.mxu0 0.0
    %188 = vmatprep.mubr.f32.mxu0 0.0
    %189 = vmatmul.mubr.f32.gmra.mrb[0].mxu0 %v119
    %v190 = vpop.f32.mrb[0].mxu0
    %v191 = vadd.f32 %v116, %v190
    %v192 = vpop.f32.mrb[0].mxu0
    %193 = vmatprep.mubr.f32.mxu0 0.0
    %194 = vmatmul.mubr.f32.gmra.mrb[0].mxu0 %v122
    %v195 = vpop.f32.mrb[0].mxu0
    %v196 = vadd.f32 %v116, %v195
    %v197 = vpop.f32.mrb[0].mxu0
    %198 = vdwg.mxu0
    %v199 = vld [vmem:[%s7] sm:$0xff]
    %v200 = vld [vmem:[%s7 + $0x8] sm:$0xff]
    %v201 = vld [vmem:[%s7 + $0x10] sm:$0xff]
    %v202 = vld [vmem:[%s7 + $0x18] sm:$0xff]
    %204 = vrot.lane.b32.xlu0 %v191, 96
    %v205 = vpop.permute.xlu0 %204
    %vm206 = vcmask 130048
    %v207 = vsel %vm206, %v191, 0
    %v209 = vsel %vm206, %v205, 0
    %211 = vmatprep.subr.mxu0 0.0
    %212 = vmatpush1.xpose.msra.mxu0 %v209
    %213 = vmatprep.subr.mxu0 0.0
    %214 = vmatpush1.xpose.msra.mxu0 0.0
    %215 = vmatprep.subr.mxu0 0.0
    %216 = vmatpush1.xpose.msra.mxu0 0.0
    %217 = vmatprep.subr.mxu0 0.0
    %218 = vmatpush1.xpose.msra.mxu0 0.0
    %219 = vmatprep.subr.mxu0 0.0
    %220 = vmatpush1.xpose.msra.mxu0 0.0
    %221 = vmatprep.subr.mxu0 0.0
    %222 = vmatpush1.xpose.msra.mxu0 0.0
    %223 = vmatprep.subr.mxu0 0.0
    %224 = vmatpush1.xpose.msra.mxu0 0.0
    %225 = vmatprep.subr.mxu0 0.0
    %226 = vmatpush1.xpose.msra.mxu0 0.0
    %227 = vmatprep.subr.mxu0 0.0
    %228 = vmatpush1.xpose.msra.mxu0 0.0
    %229 = vmatprep.subr.mxu0 0.0
    %230 = vmatpush1.xpose.msra.mxu0 0.0
    %231 = vmatprep.subr.mxu0 0.0
    %232 = vmatpush1.xpose.msra.mxu0 0.0
    %233 = vmatprep.subr.mxu0 0.0
    %234 = vmatpush1.xpose.msra.mxu0 0.0
    %235 = vmatprep.subr.mxu0 0.0
    %236 = vmatpush1.xpose.msra.mxu0 0.0
    %237 = vmatprep.subr.mxu0 0.0
    %238 = vmatpush1.xpose.msra.mxu0 0.0
    %239 = vmatprep.subr.mxu0 0.0
    %240 = vmatpush1.xpose.msra.mxu0 0.0
    %241 = vmatprep.subr.mxu0 0.0
    %242 = vmatpush1.xpose.msra.mxu0 0.0
    %243 = vmatprep.subr.mxu0 0.0
    %244 = vmatpush1.xpose.msra.mxu0 0.0
    %245 = vmatprep.subr.mxu0 0.0
    %246 = vmatpush1.xpose.msra.mxu0 0.0
    %247 = vmatprep.subr.mxu0 0.0
    %248 = vmatpush1.xpose.msra.mxu0 0.0
    %249 = vmatprep.subr.mxu0 0.0
    %250 = vmatpush1.xpose.msra.mxu0 0.0
    %251 = vmatprep.subr.mxu0 0.0
    %252 = vmatpush1.xpose.msra.mxu0 0.0
    %253 = vmatprep.subr.mxu0 0.0
    %254 = vmatpush1.xpose.msra.mxu0 0.0
    %255 = vmatprep.subr.mxu0 0.0
    %256 = vmatpush1.xpose.msra.mxu0 0.0
    %257 = vmatprep.subr.mxu0 0.0
    %258 = vmatpush1.xpose.msra.mxu0 0.0
    %259 = vmatprep.subr.mxu0 0.0
    %260 = vmatpush1.xpose.msra.mxu0 0.0
    %261 = vmatprep.subr.mxu0 0.0
    %262 = vmatpush1.xpose.msra.mxu0 0.0
    %263 = vmatprep.subr.mxu0 0.0
    %264 = vmatpush1.xpose.msra.mxu0 0.0
    %265 = vmatprep.subr.mxu0 0.0
    %266 = vmatpush1.xpose.msra.mxu0 0.0
    %267 = vmatprep.subr.mxu0 0.0
    %268 = vmatpush1.xpose.msra.mxu0 0.0
    %269 = vmatprep.subr.mxu0 0.0
    %270 = vmatpush1.xpose.msra.mxu0 0.0
    %271 = vmatprep.subr.mxu0 0.0
    %272 = vmatpush1.xpose.msra.mxu0 0.0
    %273 = vmatprep.subr.mxu0 0.0
    %274 = vmatpush1.xpose.msra.mxu0 0.0
    %275 = vmatprep.mubr.f32.mxu0 0.0
    %276 = vmatmul.mubr.f32.gmra.mrb[0].mxu0 %v207
    %v277 = vpop.f32.mrb[0].mxu0
    %v278 = vadd.f32 0.0, %v277
    %v279 = vpop.f32.mrb[0].mxu0
    %280 = vdwg.mxu0
    %282 = vrot.lane.b32.xlu0 %v196, 96
    %v283 = vpop.permute.xlu0 %282
    %v284 = vsel %vm206, %v196, 0
    %v286 = vsel %vm206, %v283, 0
    %288 = vmatprep.subr.mxu0 0.0
    %289 = vmatpush1.xpose.msra.mxu0 %v286
    %290 = vmatprep.subr.mxu0 0.0
    %291 = vmatpush1.xpose.msra.mxu0 0.0
    %292 = vmatprep.subr.mxu0 0.0
    %293 = vmatpush1.xpose.msra.mxu0 0.0
    %294 = vmatprep.subr.mxu0 0.0
    %295 = vmatpush1.xpose.msra.mxu0 0.0
    %296 = vmatprep.subr.mxu0 0.0
    %297 = vmatpush1.xpose.msra.mxu0 0.0
    %298 = vmatprep.subr.mxu0 0.0
    %299 = vmatpush1.xpose.msra.mxu0 0.0
    %300 = vmatprep.subr.mxu0 0.0
    %301 = vmatpush1.xpose.msra.mxu0 0.0
    %302 = vmatprep.subr.mxu0 0.0
    %303 = vmatpush1.xpose.msra.mxu0 0.0
    %304 = vmatprep.subr.mxu0 0.0
    %305 = vmatpush1.xpose.msra.mxu0 0.0
    %306 = vmatprep.subr.mxu0 0.0
    %307 = vmatpush1.xpose.msra.mxu0 0.0
    %308 = vmatprep.subr.mxu0 0.0
    %309 = vmatpush1.xpose.msra.mxu0 0.0
    %310 = vmatprep.subr.mxu0 0.0
    %311 = vmatpush1.xpose.msra.mxu0 0.0
    %312 = vmatprep.subr.mxu0 0.0
    %313 = vmatpush1.xpose.msra.mxu0 0.0
    %314 = vmatprep.subr.mxu0 0.0
    %315 = vmatpush1.xpose.msra.mxu0 0.0
    %316 = vmatprep.subr.mxu0 0.0
    %317 = vmatpush1.xpose.msra.mxu0 0.0
    %318 = vmatprep.subr.mxu0 0.0
    %319 = vmatpush1.xpose.msra.mxu0 0.0
    %320 = vmatprep.subr.mxu0 0.0
    %321 = vmatpush1.xpose.msra.mxu0 0.0
    %322 = vmatprep.subr.mxu0 0.0
    %323 = vmatpush1.xpose.msra.mxu0 0.0
    %324 = vmatprep.subr.mxu0 0.0
    %325 = vmatpush1.xpose.msra.mxu0 0.0
    %326 = vmatprep.subr.mxu0 0.0
    %327 = vmatpush1.xpose.msra.mxu0 0.0
    %328 = vmatprep.subr.mxu0 0.0
    %329 = vmatpush1.xpose.msra.mxu0 0.0
    %330 = vmatprep.subr.mxu0 0.0
    %331 = vmatpush1.xpose.msra.mxu0 0.0
    %332 = vmatprep.subr.mxu0 0.0
    %333 = vmatpush1.xpose.msra.mxu0 0.0
    %334 = vmatprep.subr.mxu0 0.0
    %335 = vmatpush1.xpose.msra.mxu0 0.0
    %336 = vmatprep.subr.mxu0 0.0
    %337 = vmatpush1.xpose.msra.mxu0 0.0
    %338 = vmatprep.subr.mxu0 0.0
    %339 = vmatpush1.xpose.msra.mxu0 0.0
    %340 = vmatprep.subr.mxu0 0.0
    %341 = vmatpush1.xpose.msra.mxu0 0.0
    %342 = vmatprep.subr.mxu0 0.0
    %343 = vmatpush1.xpose.msra.mxu0 0.0
    %344 = vmatprep.subr.mxu0 0.0
    %345 = vmatpush1.xpose.msra.mxu0 0.0
    %346 = vmatprep.subr.mxu0 0.0
    %347 = vmatpush1.xpose.msra.mxu0 0.0
    %348 = vmatprep.subr.mxu0 0.0
    %349 = vmatpush1.xpose.msra.mxu0 0.0
    %350 = vmatprep.subr.mxu0 0.0
    %351 = vmatpush1.xpose.msra.mxu0 0.0
    %352 = vmatprep.mubr.f32.mxu0 0.0
    %353 = vmatmul.mubr.f32.gmra.mrb[0].mxu0 %v284
    %v354 = vpop.f32.mrb[0].mxu0
    %v355 = vadd.f32 0.0, %v354
    %v356 = vpop.f32.mrb[0].mxu0
    %357 = vdwg.mxu0
    %v358 = vmul.f32 %v278, 0.25
    %v359 = vmul.f32 %v355, 0.25
    %v360 = vadd.f32 %v358, %v59
    %v361 = vadd.f32 %v359, %v60
    %vm362 = vcmask 64512
    %v363 = vsel %vm362, %v360, -inf
    %364 = vmax.xlane.f32.xlu0 %v363
    %v365 = vpop.xlane.xlu0 %364
    %v366 = vsel %vm362, %v361, -inf
    %367 = vmax.xlane.f32.xlu0 %v366
    %v368 = vpop.xlane.xlu0 %367
    %v369 = vsub.f32 %v360, %v365
    %v370 = vsub.f32 %v361, %v368
    %v371 = vmul.f32 %v369, 1.442695
    %v372 = vpow.pop %v371
    %v373 = vmul.f32 %v370, 1.442695
    %v374 = vpow.pop %v373
    %v375 = vsel %vm362, %v372, 0.0
    %376 = vadd.xlane.f32.xlu0 %v375
    %v377 = vpop.xlane.xlu0 %376
    %v378 = vsel %vm362, %v374, 0.0
    %379 = vadd.xlane.f32.xlu0 %v378
    %v380 = vpop.xlane.xlu0 %379
    %v381 = vrcp.pop %v377
    %v382 = vrcp.pop %v380
    %v383 = vmul.f32 %v372, %v381
    %v384 = vmul.f32 %v374, %v382
    %385 = vrot.lane.b32.xlu0 %v191, 64
    %v386 = vpop.permute.xlu0 %385
    %v389 = vsel %vm362, %v383, 0
    %391 = vmatprep.subr.mxu0 0.0
    %392 = vmatpush1.msra.mxu0 %v386
    %393 = vmatprep.subr.mxu0 0.0
    %394 = vmatpush1.msra.mxu0 0.0
    %395 = vmatprep.subr.mxu0 0.0
    %396 = vmatpush1.msra.mxu0 0.0
    %397 = vmatprep.subr.mxu0 0.0
    %398 = vmatpush1.msra.mxu0 0.0
    %399 = vmatprep.subr.mxu0 0.0
    %400 = vmatpush1.msra.mxu0 0.0
    %401 = vmatprep.subr.mxu0 0.0
    %402 = vmatpush1.msra.mxu0 0.0
    %403 = vmatprep.subr.mxu0 0.0
    %404 = vmatpush1.msra.mxu0 0.0
    %405 = vmatprep.subr.mxu0 0.0
    %406 = vmatpush1.msra.mxu0 0.0
    %407 = vmatprep.subr.mxu0 0.0
    %408 = vmatpush1.msra.mxu0 0.0
    %409 = vmatprep.subr.mxu0 0.0
    %410 = vmatpush1.msra.mxu0 0.0
    %411 = vmatprep.subr.mxu0 0.0
    %412 = vmatpush1.msra.mxu0 0.0
    %413 = vmatprep.subr.mxu0 0.0
    %414 = vmatpush1.msra.mxu0 0.0
    %415 = vmatprep.subr.mxu0 0.0
    %416 = vmatpush1.msra.mxu0 0.0
    %417 = vmatprep.subr.mxu0 0.0
    %418 = vmatpush1.msra.mxu0 0.0
    %419 = vmatprep.subr.mxu0 0.0
    %420 = vmatpush1.msra.mxu0 0.0
    %421 = vmatprep.subr.mxu0 0.0
    %422 = vmatpush1.msra.mxu0 0.0
    %423 = vmatprep.subr.mxu0 0.0
    %424 = vmatpush1.msra.mxu0 0.0
    %425 = vmatprep.subr.mxu0 0.0
    %426 = vmatpush1.msra.mxu0 0.0
    %427 = vmatprep.subr.mxu0 0.0
    %428 = vmatpush1.msra.mxu0 0.0
    %429 = vmatprep.subr.mxu0 0.0
    %430 = vmatpush1.msra.mxu0 0.0
    %431 = vmatprep.subr.mxu0 0.0
    %432 = vmatpush1.msra.mxu0 0.0
    %433 = vmatprep.subr.mxu0 0.0
    %434 = vmatpush1.msra.mxu0 0.0
    %435 = vmatprep.subr.mxu0 0.0
    %436 = vmatpush1.msra.mxu0 0.0
    %437 = vmatprep.subr.mxu0 0.0
    %438 = vmatpush1.msra.mxu0 0.0
    %439 = vmatprep.subr.mxu0 0.0
    %440 = vmatpush1.msra.mxu0 0.0
    %441 = vmatprep.subr.mxu0 0.0
    %442 = vmatpush1.msra.mxu0 0.0
    %443 = vmatprep.subr.mxu0 0.0
    %444 = vmatpush1.msra.mxu0 0.0
    %445 = vmatprep.subr.mxu0 0.0
    %446 = vmatpush1.msra.mxu0 0.0
    %447 = vmatprep.subr.mxu0 0.0
    %448 = vmatpush1.msra.mxu0 0.0
    %449 = vmatprep.subr.mxu0 0.0
    %450 = vmatpush1.msra.mxu0 0.0
    %451 = vmatprep.subr.mxu0 0.0
    %452 = vmatpush1.msra.mxu0 0.0
    %453 = vmatprep.subr.mxu0 0.0
    %454 = vmatpush1.msra.mxu0 0.0
    %455 = vmatprep.mubr.f32.mxu0 0.0
    %456 = vmatmul.mubr.f32.gmra.mrb[0].mxu0 %v389
    %v457 = vpop.f32.mrb[0].mxu0
    %v458 = vadd.f32 0.0, %v457
    %v459 = vpop.f32.mrb[0].mxu0
    %460 = vdwg.mxu0
    %461 = vrot.lane.b32.xlu0 %v196, 64
    %v462 = vpop.permute.xlu0 %461
    %v465 = vsel %vm362, %v384, 0
    %467 = vmatprep.subr.mxu0 0.0
    %468 = vmatpush1.msra.mxu0 %v462
    %469 = vmatprep.subr.mxu0 0.0
    %470 = vmatpush1.msra.mxu0 0.0
    %471 = vmatprep.subr.mxu0 0.0
    %472 = vmatpush1.msra.mxu0 0.0
    %473 = vmatprep.subr.mxu0 0.0
    %474 = vmatpush1.msra.mxu0 0.0
    %475 = vmatprep.subr.mxu0 0.0
    %476 = vmatpush1.msra.mxu0 0.0
    %477 = vmatprep.subr.mxu0 0.0
    %478 = vmatpush1.msra.mxu0 0.0
    %479 = vmatprep.subr.mxu0 0.0
    %480 = vmatpush1.msra.mxu0 0.0
    %481 = vmatprep.subr.mxu0 0.0
    %482 = vmatpush1.msra.mxu0 0.0
    %483 = vmatprep.subr.mxu0 0.0
    %484 = vmatpush1.msra.mxu0 0.0
    %485 = vmatprep.subr.mxu0 0.0
    %486 = vmatpush1.msra.mxu0 0.0
    %487 = vmatprep.subr.mxu0 0.0
    %488 = vmatpush1.msra.mxu0 0.0
    %489 = vmatprep.subr.mxu0 0.0
    %490 = vmatpush1.msra.mxu0 0.0
    %491 = vmatprep.subr.mxu0 0.0
    %492 = vmatpush1.msra.mxu0 0.0
    %493 = vmatprep.subr.mxu0 0.0
    %494 = vmatpush1.msra.mxu0 0.0
    %495 = vmatprep.subr.mxu0 0.0
    %496 = vmatpush1.msra.mxu0 0.0
    %497 = vmatprep.subr.mxu0 0.0
    %498 = vmatpush1.msra.mxu0 0.0
    %499 = vmatprep.subr.mxu0 0.0
    %500 = vmatpush1.msra.mxu0 0.0
    %501 = vmatprep.subr.mxu0 0.0
    %502 = vmatpush1.msra.mxu0 0.0
    %503 = vmatprep.subr.mxu0 0.0
    %504 = vmatpush1.msra.mxu0 0.0
    %505 = vmatprep.subr.mxu0 0.0
    %506 = vmatpush1.msra.mxu0 0.0
    %507 = vmatprep.subr.mxu0 0.0
    %508 = vmatpush1.msra.mxu0 0.0
    %509 = vmatprep.subr.mxu0 0.0
    %510 = vmatpush1.msra.mxu0 0.0
    %511 = vmatprep.subr.mxu0 0.0
    %512 = vmatpush1.msra.mxu0 0.0
    %513 = vmatprep.subr.mxu0 0.0
    %514 = vmatpush1.msra.mxu0 0.0
    %515 = vmatprep.subr.mxu0 0.0
    %516 = vmatpush1.msra.mxu0 0.0
    %517 = vmatprep.subr.mxu0 0.0
    %518 = vmatpush1.msra.mxu0 0.0
    %519 = vmatprep.subr.mxu0 0.0
    %520 = vmatpush1.msra.mxu0 0.0
    %521 = vmatprep.subr.mxu0 0.0
    %522 = vmatpush1.msra.mxu0 0.0
    %523 = vmatprep.subr.mxu0 0.0
    %524 = vmatpush1.msra.mxu0 0.0
    %525 = vmatprep.subr.mxu0 0.0
    %526 = vmatpush1.msra.mxu0 0.0
    %527 = vmatprep.subr.mxu0 0.0
    %528 = vmatpush1.msra.mxu0 0.0
    %529 = vmatprep.subr.mxu0 0.0
    %530 = vmatpush1.msra.mxu0 0.0
    %531 = vmatprep.mubr.f32.mxu0 0.0
    %532 = vmatmul.mubr.f32.gmra.mrb[0].mxu0 %v465
    %v533 = vpop.f32.mrb[0].mxu0
    %v534 = vadd.f32 0.0, %v533
    %v535 = vpop.f32.mrb[0].mxu0
    %536 = vdwg.mxu0
    %537 = vrot.lane.b32.xlu0 %v191, 112
    %v538 = vpop.permute.xlu0 %537
    %539 = vrot.lane.b32.xlu0 %v191, 80
    %v540 = vpop.permute.xlu0 %539
    %v541 = vsel %vm206, %v538, 0
    %v543 = vsel %vm206, %v540, 0
    %545 = vmatprep.subr.mxu0 0.0
    %546 = vmatpush1.xpose.msra.mxu0 %v543
    %547 = vmatprep.subr.mxu0 0.0
    %548 = vmatpush1.xpose.msra.mxu0 0.0
    %549 = vmatprep.subr.mxu0 0.0
    %550 = vmatpush1.xpose.msra.mxu0 0.0
    %551 = vmatprep.subr.mxu0 0.0
    %552 = vmatpush1.xpose.msra.mxu0 0.0
    %553 = vmatprep.subr.mxu0 0.0
    %554 = vmatpush1.xpose.msra.mxu0 0.0
    %555 = vmatprep.subr.mxu0 0.0
    %556 = vmatpush1.xpose.msra.mxu0 0.0
    %557 = vmatprep.subr.mxu0 0.0
    %558 = vmatpush1.xpose.msra.mxu0 0.0
    %559 = vmatprep.subr.mxu0 0.0
    %560 = vmatpush1.xpose.msra.mxu0 0.0
    %561 = vmatprep.subr.mxu0 0.0
    %562 = vmatpush1.xpose.msra.mxu0 0.0
    %563 = vmatprep.subr.mxu0 0.0
    %564 = vmatpush1.xpose.msra.mxu0 0.0
    %565 = vmatprep.subr.mxu0 0.0
    %566 = vmatpush1.xpose.msra.mxu0 0.0
    %567 = vmatprep.subr.mxu0 0.0
    %568 = vmatpush1.xpose.msra.mxu0 0.0
    %569 = vmatprep.subr.mxu0 0.0
    %570 = vmatpush1.xpose.msra.mxu0 0.0
    %571 = vmatprep.subr.mxu0 0.0
    %572 = vmatpush1.xpose.msra.mxu0 0.0
    %573 = vmatprep.subr.mxu0 0.0
    %574 = vmatpush1.xpose.msra.mxu0 0.0
    %575 = vmatprep.subr.mxu0 0.0
    %576 = vmatpush1.xpose.msra.mxu0 0.0
    %577 = vmatprep.subr.mxu0 0.0
    %578 = vmatpush1.xpose.msra.mxu0 0.0
    %579 = vmatprep.subr.mxu0 0.0
    %580 = vmatpush1.xpose.msra.mxu0 0.0
    %581 = vmatprep.subr.mxu0 0.0
    %582 = vmatpush1.xpose.msra.mxu0 0.0
    %583 = vmatprep.subr.mxu0 0.0
    %584 = vmatpush1.xpose.msra.mxu0 0.0
    %585 = vmatprep.subr.mxu0 0.0
    %586 = vmatpush1.xpose.msra.mxu0 0.0
    %587 = vmatprep.subr.mxu0 0.0
    %588 = vmatpush1.xpose.msra.mxu0 0.0
    %589 = vmatprep.subr.mxu0 0.0
    %590 = vmatpush1.xpose.msra.mxu0 0.0
    %591 = vmatprep.subr.mxu0 0.0
    %592 = vmatpush1.xpose.msra.mxu0 0.0
    %593 = vmatprep.subr.mxu0 0.0
    %594 = vmatpush1.xpose.msra.mxu0 0.0
    %595 = vmatprep.subr.mxu0 0.0
    %596 = vmatpush1.xpose.msra.mxu0 0.0
    %597 = vmatprep.subr.mxu0 0.0
    %598 = vmatpush1.xpose.msra.mxu0 0.0
    %599 = vmatprep.subr.mxu0 0.0
    %600 = vmatpush1.xpose.msra.mxu0 0.0
    %601 = vmatprep.subr.mxu0 0.0
    %602 = vmatpush1.xpose.msra.mxu0 0.0
    %603 = vmatprep.subr.mxu0 0.0
    %604 = vmatpush1.xpose.msra.mxu0 0.0
    %605 = vmatprep.subr.mxu0 0.0
    %606 = vmatpush1.xpose.msra.mxu0 0.0
    %607 = vmatprep.subr.mxu0 0.0
    %608 = vmatpush1.xpose.msra.mxu0 0.0
    %609 = vmatprep.mubr.f32.mxu0 0.0
    %610 = vmatmul.mubr.f32.gmra.mrb[0].mxu0 %v541
    %v611 = vpop.f32.mrb[0].mxu0
    %v612 = vadd.f32 0.0, %v611
    %v613 = vpop.f32.mrb[0].mxu0
    %614 = vdwg.mxu0
    %615 = vrot.lane.b32.xlu0 %v196, 112
    %v616 = vpop.permute.xlu0 %615
    %617 = vrot.lane.b32.xlu0 %v196, 80
    %v618 = vpop.permute.xlu0 %617
    %v619 = vsel %vm206, %v616, 0
    %v621 = vsel %vm206, %v618, 0
    %623 = vmatprep.subr.mxu0 0.0
    %624 = vmatpush1.xpose.msra.mxu0 %v621
    %625 = vmatprep.subr.mxu0 0.0
    %626 = vmatpush1.xpose.msra.mxu0 0.0
    %627 = vmatprep.subr.mxu0 0.0
    %628 = vmatpush1.xpose.msra.mxu0 0.0
    %629 = vmatprep.subr.mxu0 0.0
    %630 = vmatpush1.xpose.msra.mxu0 0.0
    %631 = vmatprep.subr.mxu0 0.0
    %632 = vmatpush1.xpose.msra.mxu0 0.0
    %633 = vmatprep.subr.mxu0 0.0
    %634 = vmatpush1.xpose.msra.mxu0 0.0
    %635 = vmatprep.subr.mxu0 0.0
    %636 = vmatpush1.xpose.msra.mxu0 0.0
    %637 = vmatprep.subr.mxu0 0.0
    %638 = vmatpush1.xpose.msra.mxu0 0.0
    %639 = vmatprep.subr.mxu0 0.0
    %640 = vmatpush1.xpose.msra.mxu0 0.0
    %641 = vmatprep.subr.mxu0 0.0
    %642 = vmatpush1.xpose.msra.mxu0 0.0
    %643 = vmatprep.subr.mxu0 0.0
    %644 = vmatpush1.xpose.msra.mxu0 0.0
    %645 = vmatprep.subr.mxu0 0.0
    %646 = vmatpush1.xpose.msra.mxu0 0.0
    %647 = vmatprep.subr.mxu0 0.0
    %648 = vmatpush1.xpose.msra.mxu0 0.0
    %649 = vmatprep.subr.mxu0 0.0
    %650 = vmatpush1.xpose.msra.mxu0 0.0
    %651 = vmatprep.subr.mxu0 0.0
    %652 = vmatpush1.xpose.msra.mxu0 0.0
    %653 = vmatprep.subr.mxu0 0.0
    %654 = vmatpush1.xpose.msra.mxu0 0.0
    %655 = vmatprep.subr.mxu0 0.0
    %656 = vmatpush1.xpose.msra.mxu0 0.0
    %657 = vmatprep.subr.mxu0 0.0
    %658 = vmatpush1.xpose.msra.mxu0 0.0
    %659 = vmatprep.subr.mxu0 0.0
    %660 = vmatpush1.xpose.msra.mxu0 0.0
    %661 = vmatprep.subr.mxu0 0.0
    %662 = vmatpush1.xpose.msra.mxu0 0.0
    %663 = vmatprep.subr.mxu0 0.0
    %664 = vmatpush1.xpose.msra.mxu0 0.0
    %665 = vmatprep.subr.mxu0 0.0
    %666 = vmatpush1.xpose.msra.mxu0 0.0
    %667 = vmatprep.subr.mxu0 0.0
    %668 = vmatpush1.xpose.msra.mxu0 0.0
    %669 = vmatprep.subr.mxu0 0.0
    %670 = vmatpush1.xpose.msra.mxu0 0.0
    %671 = vmatprep.subr.mxu0 0.0
    %672 = vmatpush1.xpose.msra.mxu0 0.0
    %673 = vmatprep.subr.mxu0 0.0
    %674 = vmatpush1.xpose.msra.mxu0 0.0
    %675 = vmatprep.subr.mxu0 0.0
    %676 = vmatpush1.xpose.msra.mxu0 0.0
    %677 = vmatprep.subr.mxu0 0.0
    %678 = vmatpush1.xpose.msra.mxu0 0.0
    %679 = vmatprep.subr.mxu0 0.0
    %680 = vmatpush1.xpose.msra.mxu0 0.0
    %681 = vmatprep.subr.mxu0 0.0
    %682 = vmatpush1.xpose.msra.mxu0 0.0
    %683 = vmatprep.subr.mxu0 0.0
    %684 = vmatpush1.xpose.msra.mxu0 0.0
    %685 = vmatprep.subr.mxu0 0.0
    %686 = vmatpush1.xpose.msra.mxu0 0.0
    %687 = vmatprep.mubr.f32.mxu0 0.0
    %688 = vmatmul.mubr.f32.gmra.mrb[0].mxu0 %v619
    %v689 = vpop.f32.mrb[0].mxu0
    %v690 = vadd.f32 0.0, %v689
    %v691 = vpop.f32.mrb[0].mxu0
    %692 = vdwg.mxu0
    %v693 = vmul.f32 %v612, 0.25
    %v694 = vmul.f32 %v690, 0.25
    %v695 = vadd.f32 %v693, %v59
    %v696 = vadd.f32 %v694, %v60
    %v697 = vsel %vm362, %v695, -inf
    %698 = vmax.xlane.f32.xlu0 %v697
    %v699 = vpop.xlane.xlu0 %698
    %v700 = vsel %vm362, %v696, -inf
    %701 = vmax.xlane.f32.xlu0 %v700
    %v702 = vpop.xlane.xlu0 %701
    %v703 = vsub.f32 %v695, %v699
    %v704 = vsub.f32 %v696, %v702
    %v705 = vmul.f32 %v703, 1.442695
    %v706 = vpow.pop %v705
    %v707 = vmul.f32 %v704, 1.442695
    %v708 = vpow.pop %v707
    %v709 = vsel %vm362, %v706, 0.0
    %710 = vadd.xlane.f32.xlu0 %v709
    %v711 = vpop.xlane.xlu0 %710
    %v712 = vsel %vm362, %v708, 0.0
    %713 = vadd.xlane.f32.xlu0 %v712
    %v714 = vpop.xlane.xlu0 %713
    %v715 = vrcp.pop %v711
    %v716 = vrcp.pop %v714
    %v717 = vmul.f32 %v706, %v715
    %v718 = vmul.f32 %v708, %v716
    %719 = vrot.lane.b32.xlu0 %v191, 48
    %v720 = vpop.permute.xlu0 %719
    %v723 = vsel %vm362, %v717, 0
    %725 = vmatprep.subr.mxu0 0.0
    %726 = vmatpush1.msra.mxu0 %v720
    %727 = vmatprep.subr.mxu0 0.0
    %728 = vmatpush1.msra.mxu0 0.0
    %729 = vmatprep.subr.mxu0 0.0
    %730 = vmatpush1.msra.mxu0 0.0
    %731 = vmatprep.subr.mxu0 0.0
    %732 = vmatpush1.msra.mxu0 0.0
    %733 = vmatprep.subr.mxu0 0.0
    %734 = vmatpush1.msra.mxu0 0.0
    %735 = vmatprep.subr.mxu0 0.0
    %736 = vmatpush1.msra.mxu0 0.0
    %737 = vmatprep.subr.mxu0 0.0
    %738 = vmatpush1.msra.mxu0 0.0
    %739 = vmatprep.subr.mxu0 0.0
    %740 = vmatpush1.msra.mxu0 0.0
    %741 = vmatprep.subr.mxu0 0.0
    %742 = vmatpush1.msra.mxu0 0.0
    %743 = vmatprep.subr.mxu0 0.0
    %744 = vmatpush1.msra.mxu0 0.0
    %745 = vmatprep.subr.mxu0 0.0
    %746 = vmatpush1.msra.mxu0 0.0
    %747 = vmatprep.subr.mxu0 0.0
    %748 = vmatpush1.msra.mxu0 0.0
    %749 = vmatprep.subr.mxu0 0.0
    %750 = vmatpush1.msra.mxu0 0.0
    %751 = vmatprep.subr.mxu0 0.0
    %752 = vmatpush1.msra.mxu0 0.0
    %753 = vmatprep.subr.mxu0 0.0
    %754 = vmatpush1.msra.mxu0 0.0
    %755 = vmatprep.subr.mxu0 0.0
    %756 = vmatpush1.msra.mxu0 0.0
    %757 = vmatprep.subr.mxu0 0.0
    %758 = vmatpush1.msra.mxu0 0.0
    %759 = vmatprep.subr.mxu0 0.0
    %760 = vmatpush1.msra.mxu0 0.0
    %761 = vmatprep.subr.mxu0 0.0
    %762 = vmatpush1.msra.mxu0 0.0
    %763 = vmatprep.subr.mxu0 0.0
    %764 = vmatpush1.msra.mxu0 0.0
    %765 = vmatprep.subr.mxu0 0.0
    %766 = vmatpush1.msra.mxu0 0.0
    %767 = vmatprep.subr.mxu0 0.0
    %768 = vmatpush1.msra.mxu0 0.0
    %769 = vmatprep.subr.mxu0 0.0
    %770 = vmatpush1.msra.mxu0 0.0
    %771 = vmatprep.subr.mxu0 0.0
    %772 = vmatpush1.msra.mxu0 0.0
    %773 = vmatprep.subr.mxu0 0.0
    %774 = vmatpush1.msra.mxu0 0.0
    %775 = vmatprep.subr.mxu0 0.0
    %776 = vmatpush1.msra.mxu0 0.0
    %777 = vmatprep.subr.mxu0 0.0
    %778 = vmatpush1.msra.mxu0 0.0
    %779 = vmatprep.subr.mxu0 0.0
    %780 = vmatpush1.msra.mxu0 0.0
    %781 = vmatprep.subr.mxu0 0.0
    %782 = vmatpush1.msra.mxu0 0.0
    %783 = vmatprep.subr.mxu0 0.0
    %784 = vmatpush1.msra.mxu0 0.0
    %785 = vmatprep.subr.mxu0 0.0
    %786 = vmatpush1.msra.mxu0 0.0
    %787 = vmatprep.subr.mxu0 0.0
    %788 = vmatpush1.msra.mxu0 0.0
    %789 = vmatprep.mubr.f32.mxu0 0.0
    %790 = vmatmul.mubr.f32.gmra.mrb[0].mxu0 %v723
    %v791 = vpop.f32.mrb[0].mxu0
    %v792 = vadd.f32 0.0, %v791
    %v793 = vpop.f32.mrb[0].mxu0
    %794 = vdwg.mxu0
    %795 = vrot.lane.b32.xlu0 %v196, 48
    %v796 = vpop.permute.xlu0 %795
    %v799 = vsel %vm362, %v718, 0
    %801 = vmatprep.subr.mxu0 0.0
    %802 = vmatpush1.msra.mxu0 %v796
    %803 = vmatprep.subr.mxu0 0.0
    %804 = vmatpush1.msra.mxu0 0.0
    %805 = vmatprep.subr.mxu0 0.0
    %806 = vmatpush1.msra.mxu0 0.0
    %807 = vmatprep.subr.mxu0 0.0
    %808 = vmatpush1.msra.mxu0 0.0
    %809 = vmatprep.subr.mxu0 0.0
    %810 = vmatpush1.msra.mxu0 0.0
    %811 = vmatprep.subr.mxu0 0.0
    %812 = vmatpush1.msra.mxu0 0.0
    %813 = vmatprep.subr.mxu0 0.0
    %814 = vmatpush1.msra.mxu0 0.0
    %815 = vmatprep.subr.mxu0 0.0
    %816 = vmatpush1.msra.mxu0 0.0
    %817 = vmatprep.subr.mxu0 0.0
    %818 = vmatpush1.msra.mxu0 0.0
    %819 = vmatprep.subr.mxu0 0.0
    %820 = vmatpush1.msra.mxu0 0.0
    %821 = vmatprep.subr.mxu0 0.0
    %822 = vmatpush1.msra.mxu0 0.0
    %823 = vmatprep.subr.mxu0 0.0
    %824 = vmatpush1.msra.mxu0 0.0
    %825 = vmatprep.subr.mxu0 0.0
    %826 = vmatpush1.msra.mxu0 0.0
    %827 = vmatprep.subr.mxu0 0.0
    %828 = vmatpush1.msra.mxu0 0.0
    %829 = vmatprep.subr.mxu0 0.0
    %830 = vmatpush1.msra.mxu0 0.0
    %831 = vmatprep.subr.mxu0 0.0
    %832 = vmatpush1.msra.mxu0 0.0
    %833 = vmatprep.subr.mxu0 0.0
    %834 = vmatpush1.msra.mxu0 0.0
    %835 = vmatprep.subr.mxu0 0.0
    %836 = vmatpush1.msra.mxu0 0.0
    %837 = vmatprep.subr.mxu0 0.0
    %838 = vmatpush1.msra.mxu0 0.0
    %839 = vmatprep.subr.mxu0 0.0
    %840 = vmatpush1.msra.mxu0 0.0
    %841 = vmatprep.subr.mxu0 0.0
    %842 = vmatpush1.msra.mxu0 0.0
    %843 = vmatprep.subr.mxu0 0.0
    %844 = vmatpush1.msra.mxu0 0.0
    %845 = vmatprep.subr.mxu0 0.0
    %846 = vmatpush1.msra.mxu0 0.0
    %847 = vmatprep.subr.mxu0 0.0
    %848 = vmatpush1.msra.mxu0 0.0
    %849 = vmatprep.subr.mxu0 0.0
    %850 = vmatpush1.msra.mxu0 0.0
    %851 = vmatprep.subr.mxu0 0.0
    %852 = vmatpush1.msra.mxu0 0.0
    %853 = vmatprep.subr.mxu0 0.0
    %854 = vmatpush1.msra.mxu0 0.0
    %855 = vmatprep.subr.mxu0 0.0
    %856 = vmatpush1.msra.mxu0 0.0
    %857 = vmatprep.subr.mxu0 0.0
    %858 = vmatpush1.msra.mxu0 0.0
    %859 = vmatprep.subr.mxu0 0.0
    %860 = vmatpush1.msra.mxu0 0.0
    %861 = vmatprep.subr.mxu0 0.0
    %862 = vmatpush1.msra.mxu0 0.0
    %863 = vmatprep.subr.mxu0 0.0
    %864 = vmatpush1.msra.mxu0 0.0
    %865 = vmatprep.mubr.f32.mxu0 0.0
    %866 = vmatmul.mubr.f32.gmra.mrb[0].mxu0 %v799
    %v867 = vpop.f32.mrb[0].mxu0
    %v868 = vadd.f32 0.0, %v867
    %v869 = vpop.f32.mrb[0].mxu0
    %870 = vdwg.mxu0
    %v872 = vsel %vm206, %v792, 0
    %v875 = vsel %vm206, %v868, 0
    %877 = vmatprep.subr.mxu0 0.0
    %878 = vmatpush1.msra.mxu0 %v201
    %879 = vmatprep.subr.mxu0 0.0
    %880 = vmatpush1.msra.mxu0 %v202
    %881 = vmatprep.subr.mxu0 0.0
    %882 = vmatpush1.msra.mxu0 0.0
    %883 = vmatprep.subr.mxu0 0.0
    %884 = vmatpush1.msra.mxu0 0.0
    %885 = vmatprep.subr.mxu0 0.0
    %886 = vmatpush1.msra.mxu0 0.0
    %887 = vmatprep.subr.mxu0 0.0
    %888 = vmatpush1.msra.mxu0 0.0
    %889 = vmatprep.subr.mxu0 0.0
    %890 = vmatpush1.msra.mxu0 0.0
    %891 = vmatprep.subr.mxu0 0.0
    %892 = vmatpush1.msra.mxu0 0.0
    %893 = vmatprep.subr.mxu0 0.0
    %894 = vmatpush1.msra.mxu0 0.0
    %895 = vmatprep.subr.mxu0 0.0
    %896 = vmatpush1.msra.mxu0 0.0
    %897 = vmatprep.subr.mxu0 0.0
    %898 = vmatpush1.msra.mxu0 0.0
    %899 = vmatprep.subr.mxu0 0.0
    %900 = vmatpush1.msra.mxu0 0.0
    %901 = vmatprep.subr.mxu0 0.0
    %902 = vmatpush1.msra.mxu0 0.0
    %903 = vmatprep.subr.mxu0 0.0
    %904 = vmatpush1.msra.mxu0 0.0
    %905 = vmatprep.subr.mxu0 0.0
    %906 = vmatpush1.msra.mxu0 0.0
    %907 = vmatprep.subr.mxu0 0.0
    %908 = vmatpush1.msra.mxu0 0.0
    %909 = vmatprep.subr.mxu0 0.0
    %910 = vmatpush1.msra.mxu0 0.0
    %911 = vmatprep.subr.mxu0 0.0
    %912 = vmatpush1.msra.mxu0 0.0
    %913 = vmatprep.subr.mxu0 0.0
    %914 = vmatpush1.msra.mxu0 0.0
    %915 = vmatprep.subr.mxu0 0.0
    %916 = vmatpush1.msra.mxu0 0.0
    %917 = vmatprep.subr.mxu0 0.0
    %918 = vmatpush1.msra.mxu0 0.0
    %919 = vmatprep.subr.mxu0 0.0
    %920 = vmatpush1.msra.mxu0 0.0
    %921 = vmatprep.subr.mxu0 0.0
    %922 = vmatpush1.msra.mxu0 0.0
    %923 = vmatprep.subr.mxu0 0.0
    %924 = vmatpush1.msra.mxu0 0.0
    %925 = vmatprep.subr.mxu0 0.0
    %926 = vmatpush1.msra.mxu0 0.0
    %927 = vmatprep.subr.mxu0 0.0
    %928 = vmatpush1.msra.mxu0 0.0
    %929 = vmatprep.subr.mxu0 0.0
    %930 = vmatpush1.msra.mxu0 0.0
    %931 = vmatprep.subr.mxu0 0.0
    %932 = vmatpush1.msra.mxu0 0.0
    %933 = vmatprep.subr.mxu0 0.0
    %934 = vmatpush1.msra.mxu0 0.0
    %935 = vmatprep.subr.mxu0 0.0
    %936 = vmatpush1.msra.mxu0 0.0
    %937 = vmatprep.subr.mxu0 0.0
    %938 = vmatpush1.msra.mxu0 0.0
    %939 = vmatprep.subr.mxu0 0.0
    %940 = vmatpush1.msra.mxu0 0.0
    %941 = vmatprep.mubr.f32.mxu0 0.0
    %942 = vmatmul.mubr.f32.gmra.mrb[0].mxu0 %v872
    %v943 = vpop.f32.mrb[0].mxu0
    %v944 = vadd.f32 0.0, %v943
    %v945 = vpop.f32.mrb[0].mxu0
    %946 = vmatprep.mubr.f32.mxu0 0.0
    %947 = vmatmul.mubr.f32.gmra.mrb[0].mxu0 %v875
    %v948 = vpop.f32.mrb[0].mxu0
    %v949 = vadd.f32 0.0, %v948
    %v950 = vpop.f32.mrb[0].mxu0
    %951 = vdwg.mxu0
    %v953 = vsel %vm206, %v458, 0
    %v956 = vsel %vm206, %v534, 0
    %958 = vmatprep.subr.mxu0 0.0
    %959 = vmatpush1.msra.mxu0 %v199
    %960 = vmatprep.subr.mxu0 0.0
    %961 = vmatpush1.msra.mxu0 %v200
    %962 = vmatprep.subr.mxu0 0.0
    %963 = vmatpush1.msra.mxu0 0.0
    %964 = vmatprep.subr.mxu0 0.0
    %965 = vmatpush1.msra.mxu0 0.0
    %966 = vmatprep.subr.mxu0 0.0
    %967 = vmatpush1.msra.mxu0 0.0
    %968 = vmatprep.subr.mxu0 0.0
    %969 = vmatpush1.msra.mxu0 0.0
    %970 = vmatprep.subr.mxu0 0.0
    %971 = vmatpush1.msra.mxu0 0.0
    %972 = vmatprep.subr.mxu0 0.0
    %973 = vmatpush1.msra.mxu0 0.0
    %974 = vmatprep.subr.mxu0 0.0
    %975 = vmatpush1.msra.mxu0 0.0
    %976 = vmatprep.subr.mxu0 0.0
    %977 = vmatpush1.msra.mxu0 0.0
    %978 = vmatprep.subr.mxu0 0.0
    %979 = vmatpush1.msra.mxu0 0.0
    %980 = vmatprep.subr.mxu0 0.0
    %981 = vmatpush1.msra.mxu0 0.0
    %982 = vmatprep.subr.mxu0 0.0
    %983 = vmatpush1.msra.mxu0 0.0
    %984 = vmatprep.subr.mxu0 0.0
    %985 = vmatpush1.msra.mxu0 0.0
    %986 = vmatprep.subr.mxu0 0.0
    %987 = vmatpush1.msra.mxu0 0.0
    %988 = vmatprep.subr.mxu0 0.0
    %989 = vmatpush1.msra.mxu0 0.0
    %990 = vmatprep.subr.mxu0 0.0
    %991 = vmatpush1.msra.mxu0 0.0
    %992 = vmatprep.subr.mxu0 0.0
    %993 = vmatpush1.msra.mxu0 0.0
    %994 = vmatprep.subr.mxu0 0.0
    %995 = vmatpush1.msra.mxu0 0.0
    %996 = vmatprep.subr.mxu0 0.0
    %997 = vmatpush1.msra.mxu0 0.0
    %998 = vmatprep.subr.mxu0 0.0
    %999 = vmatpush1.msra.mxu0 0.0
    %1000 = vmatprep.subr.mxu0 0.0
    %1001 = vmatpush1.msra.mxu0 0.0
    %1002 = vmatprep.subr.mxu0 0.0
    %1003 = vmatpush1.msra.mxu0 0.0
    %1004 = vmatprep.subr.mxu0 0.0
    %1005 = vmatpush1.msra.mxu0 0.0
    %1006 = vmatprep.subr.mxu0 0.0
    %1007 = vmatpush1.msra.mxu0 0.0
    %1008 = vmatprep.subr.mxu0 0.0
    %1009 = vmatpush1.msra.mxu0 0.0
    %1010 = vmatprep.subr.mxu0 0.0
    %1011 = vmatpush1.msra.mxu0 0.0
    %1012 = vmatprep.subr.mxu0 0.0
    %1013 = vmatpush1.msra.mxu0 0.0
    %1014 = vmatprep.subr.mxu0 0.0
    %1015 = vmatpush1.msra.mxu0 0.0
    %1016 = vmatprep.subr.mxu0 0.0
    %1017 = vmatpush1.msra.mxu0 0.0
    %1018 = vmatprep.subr.mxu0 0.0
    %1019 = vmatpush1.msra.mxu0 0.0
    %1020 = vmatprep.subr.mxu0 0.0
    %1021 = vmatpush1.msra.mxu0 0.0
    %1022 = vmatprep.mubr.f32.mxu0 0.0
    %1023 = vmatmul.mubr.f32.gmra.mrb[0].mxu0 %v953
    %v1024 = vpop.f32.mrb[0].mxu0
    %v1025 = vadd.f32 %v944, %v1024
    %v1026 = vpop.f32.mrb[0].mxu0
    %1027 = vmatprep.mubr.f32.mxu0 0.0
    %1028 = vmatmul.mubr.f32.gmra.mrb[0].mxu0 %v956
    %v1029 = vpop.f32.mrb[0].mxu0
    %v1030 = vadd.f32 %v949, %v1029
    %v1031 = vpop.f32.mrb[0].mxu0
    %1032 = vdwg.mxu0
    %v1033 = vld [vmem:[%s8] sm:$0x1]
    %v1035 = vlaneseq
    %v1036 = vshrl.u32 %v1035, 7
    %v1037 = vsub.s32 0, %v1036
    %v1038 = vrot.slane %v1033, %v1037
    %v1040 = vadd.f32 %v1025, %v1038
    %v1041 = vadd.f32 %v1030, %v1038
    %v1042 = vadd.f32 %v1040, %v105
    %v1043 = vadd.f32 %v1041, %v106
    %v1044 = vld [vmem:[%s9] sm:$0x1]
    %v1045 = vld [vmem:[%s10] sm:$0x1]
    %v1046 = vsel %vm63, %v1042, 0.0
    %1047 = vadd.xlane.f32.xlu0 %v1046
    %v1048 = vpop.xlane.xlu0 %1047
    %v1049 = vsel %vm63, %v1043, 0.0
    %1050 = vadd.xlane.f32.xlu0 %v1049
    %v1051 = vpop.xlane.xlu0 %1050
    %v1052 = vmul.f32 %v1048, %v70
    %v1053 = vmul.f32 %v1051, %v70
    %v1054 = vsub.f32 %v1042, %v1052
    %v1055 = vsub.f32 %v1043, %v1053
    %v1056 = vmul.f32 %v1054, %v1054
    %v1057 = vmul.f32 %v1055, %v1055
    %v1058 = vsel %vm63, %v1056, 0.0
    %1059 = vadd.xlane.f32.xlu0 %v1058
    %v1060 = vpop.xlane.xlu0 %1059
    %v1061 = vsel %vm63, %v1057, 0.0
    %1062 = vadd.xlane.f32.xlu0 %v1061
    %v1063 = vpop.xlane.xlu0 %1062
    %v1064 = vmul.f32 %v1060, %v70
    %v1065 = vmul.f32 %v1063, %v70
    %v1066 = vadd.f32 %v1064, 1e-12
    %v1067 = vadd.f32 %v1065, 1e-12
    %v1068 = vrsqrt.pop %v1066
    %v1069 = vrsqrt.pop %v1067
    %v1070 = vmul.f32 %v1054, %v1068
    %v1071 = vmul.f32 %v1055, %v1069
    %v1073 = vlaneseq
    %v1074 = vshrl.u32 %v1073, 7
    %v1075 = vsub.s32 0, %v1074
    %v1076 = vrot.slane %v1044, %v1075
    %v1078 = vmul.f32 %v1070, %v1076
    %v1079 = vmul.f32 %v1071, %v1076
    %v1081 = vlaneseq
    %v1082 = vshrl.u32 %v1081, 7
    %v1083 = vsub.s32 0, %v1082
    %v1084 = vrot.slane %v1045, %v1083
    %v1086 = vadd.f32 %v1078, %v1084
    %v1087 = vadd.f32 %v1079, %v1084
    %v1088 = vld [vmem:[%s11] sm:$0xff]
    %v1089 = vld [vmem:[%s11 + $0x8] sm:$0xff]
    %v1090 = vld [vmem:[%s11 + $0x10] sm:$0xff]
    %v1091 = vld [vmem:[%s11 + $0x18] sm:$0xff]
    %v1092 = vld [vmem:[%s12] sm:$0x1]
    %v1094 = vlaneseq
    %v1095 = vshrl.u32 %v1094, 7
    %v1096 = vsub.s32 0, %v1095
    %v1097 = vrot.slane %v1092, %v1096
    %v1100 = vsel %vm63, %v1086, 0
    %v1103 = vsel %vm63, %v1087, 0
    %1105 = vmatprep.subr.mxu0 0.0
    %1106 = vmatpush1.msra.mxu0 %v1088
    %1107 = vmatprep.subr.mxu0 0.0
    %1108 = vmatpush1.msra.mxu0 %v1089
    %1109 = vmatprep.subr.mxu0 0.0
    %1110 = vmatpush1.msra.mxu0 %v1090
    %1111 = vmatprep.subr.mxu0 0.0
    %1112 = vmatpush1.msra.mxu0 %v1091
    %1113 = vmatprep.subr.mxu0 0.0
    %1114 = vmatpush1.msra.mxu0 0.0
    %1115 = vmatprep.subr.mxu0 0.0
    %1116 = vmatpush1.msra.mxu0 0.0
    %1117 = vmatprep.subr.mxu0 0.0
    %1118 = vmatpush1.msra.mxu0 0.0
    %1119 = vmatprep.subr.mxu0 0.0
    %1120 = vmatpush1.msra.mxu0 0.0
    %1121 = vmatprep.subr.mxu0 0.0
    %1122 = vmatpush1.msra.mxu0 0.0
    %1123 = vmatprep.subr.mxu0 0.0
    %1124 = vmatpush1.msra.mxu0 0.0
    %1125 = vmatprep.subr.mxu0 0.0
    %1126 = vmatpush1.msra.mxu0 0.0
    %1127 = vmatprep.subr.mxu0 0.0
    %1128 = vmatpush1.msra.mxu0 0.0
    %1129 = vmatprep.subr.mxu0 0.0
    %1130 = vmatpush1.msra.mxu0 0.0
    %1131 = vmatprep.subr.mxu0 0.0
    %1132 = vmatpush1.msra.mxu0 0.0
    %1133 = vmatprep.subr.mxu0 0.0
    %1134 = vmatpush1.msra.mxu0 0.0
    %1135 = vmatprep.subr.mxu0 0.0
    %1136 = vmatpush1.msra.mxu0 0.0
    %1137 = vmatprep.subr.mxu0 0.0
    %1138 = vmatpush1.msra.mxu0 0.0
    %1139 = vmatprep.subr.mxu0 0.0
    %1140 = vmatpush1.msra.mxu0 0.0
    %1141 = vmatprep.subr.mxu0 0.0
    %1142 = vmatpush1.msra.mxu0 0.0
    %1143 = vmatprep.subr.mxu0 0.0
    %1144 = vmatpush1.msra.mxu0 0.0
    %1145 = vmatprep.subr.mxu0 0.0
    %1146 = vmatpush1.msra.mxu0 0.0
    %1147 = vmatprep.subr.mxu0 0.0
    %1148 = vmatpush1.msra.mxu0 0.0
    %1149 = vmatprep.subr.mxu0 0.0
    %1150 = vmatpush1.msra.mxu0 0.0
    %1151 = vmatprep.subr.mxu0 0.0
    %1152 = vmatpush1.msra.mxu0 0.0
    %1153 = vmatprep.subr.mxu0 0.0
    %1154 = vmatpush1.msra.mxu0 0.0
    %1155 = vmatprep.subr.mxu0 0.0
    %1156 = vmatpush1.msra.mxu0 0.0
    %1157 = vmatprep.subr.mxu0 0.0
    %1158 = vmatpush1.msra.mxu0 0.0
    %1159 = vmatprep.subr.mxu0 0.0
    %1160 = vmatpush1.msra.mxu0 0.0
    %1161 = vmatprep.subr.mxu0 0.0
    %1162 = vmatpush1.msra.mxu0 0.0
    %1163 = vmatprep.subr.mxu0 0.0
    %1164 = vmatpush1.msra.mxu0 0.0
    %1165 = vmatprep.subr.mxu0 0.0
    %1166 = vmatpush1.msra.mxu0 0.0
    %1167 = vmatprep.subr.mxu0 0.0
    %1168 = vmatpush1.msra.mxu0 0.0
    %1169 = vmatprep.mubr.f32.mxu0 0.0
    %1170 = vmatmul.mubr.f32.gmra.mrb[0].mxu0 %v1100
    %v1171 = vpop.f32.mrb[0].mxu0
    %v1172 = vadd.f32 %v1097, %v1171
    %v1173 = vpop.f32.mrb[0].mxu0
    %1174 = vmatprep.mubr.f32.mxu0 0.0
    %1175 = vmatmul.mubr.f32.gmra.mrb[0].mxu0 %v1103
    %v1176 = vpop.f32.mrb[0].mxu0
    %v1177 = vadd.f32 %v1097, %v1176
    %v1178 = vpop.f32.mrb[0].mxu0
    %1179 = vdwg.mxu0
    %v1180 = vmul.f32 %v1172, 0.5
    %v1181 = vmul.f32 %v1177, 0.5
    %v1182 = vmul.f32 %v1172, 0.70710677
    %v1183 = vmul.f32 %v1177, 0.70710677
    %v1184 = vand.u32 2147483647, %v1182
    %v1185 = vand.u32 2147483647, %v1183
    %v1186 = vmul.f32 %v1184, 0.5
    %v1187 = vmul.f32 %v1185, 0.5
    %v1188 = vadd.f32 %v1186, 1.0
    %v1189 = vadd.f32 %v1187, 1.0
    %v1190 = vrcp.pop %v1188
    %v1191 = vmul.f32 1.0, %v1190
    %v1192 = vrcp.pop %v1189
    %v1193 = vmul.f32 1.0, %v1192
    %v1194 = vsub.f32 0.0, %v1184
    %v1195 = vsub.f32 0.0, %v1185
    %v1196 = vmul.f32 %v1194, %v1184
    %v1197 = vmul.f32 %v1195, %v1185
    %v1198 = vsub.f32 %v1196, 1.2655122
    %v1199 = vsub.f32 %v1197, 1.2655122
    %v1200 = vmul.f32 %v1191, 0.17087276
    %v1201 = vmul.f32 %v1193, 0.17087276
    %v1202 = vadd.f32 %v1200, -0.82215226
    %v1203 = vadd.f32 %v1201, -0.82215226
    %v1204 = vmul.f32 %v1191, %v1202
    %v1205 = vmul.f32 %v1193, %v1203
    %v1206 = vadd.f32 %v1204, 1.4885159
    %v1207 = vadd.f32 %v1205, 1.4885159
    %v1208 = vmul.f32 %v1191, %v1206
    %v1209 = vmul.f32 %v1193, %v1207
    %v1210 = vadd.f32 %v1208, -1.135204
    %v1211 = vadd.f32 %v1209, -1.135204
    %v1212 = vmul.f32 %v1191, %v1210
    %v1213 = vmul.f32 %v1193, %v1211
    %v1214 = vadd.f32 %v1212, 0.27886808
    %v1215 = vadd.f32 %v1213, 0.27886808
    %v1216 = vmul.f32 %v1191, %v1214
    %v1217 = vmul.f32 %v1193, %v1215
    %v1218 = vadd.f32 %v1216, -0.18628806
    %v1219 = vadd.f32 %v1217, -0.18628806
    %v1220 = vmul.f32 %v1191, %v1218
    %v1221 = vmul.f32 %v1193, %v1219
    %v1222 = vadd.f32 %v1220, 0.09678418
    %v1223 = vadd.f32 %v1221, 0.09678418
    %v1224 = vmul.f32 %v1191, %v1222
    %v1225 = vmul.f32 %v1193, %v1223
    %v1226 = vadd.f32 %v1224, 0.37409195
    %v1227 = vadd.f32 %v1225, 0.37409195
    %v1228 = vmul.f32 %v1191, %v1226
    %v1229 = vmul.f32 %v1193, %v1227
    %v1230 = vadd.f32 %v1228, 1.0000237
    %v1231 = vadd.f32 %v1229, 1.0000237
    %v1232 = vmul.f32 %v1191, %v1230
    %v1233 = vmul.f32 %v1193, %v1231
    %v1234 = vadd.f32 %v1198, %v1232
    %v1235 = vadd.f32 %v1199, %v1233
    %v1236 = vmul.f32 %v1234, 1.442695
    %v1237 = vpow.pop %v1236
    %v1238 = vmul.f32 %v1235, 1.442695
    %v1239 = vpow.pop %v1238
    %v1240 = vmul.f32 %v1191, %v1237
    %v1241 = vmul.f32 %v1193, %v1239
    %v1242 = vsub.f32 1.0, %v1240
    %v1243 = vsub.f32 1.0, %v1241
    %vm1244 = vcmp.ge.f32.partialorder %v1182, 0.0
    %vm1245 = vcmp.ge.f32.partialorder %v1183, 0.0
    %v1246 = vsub.f32 0.0, %v1242
    %v1247 = vsub.f32 0.0, %v1243
    %v1248 = vsel %vm1244, %v1242, %v1246
    %v1249 = vsel %vm1245, %v1243, %v1247
    %v1250 = vadd.f32 %v1248, 1.0
    %v1251 = vadd.f32 %v1249, 1.0
    %v1252 = vmul.f32 %v1180, %v1250
    %v1253 = vmul.f32 %v1181, %v1251
    %v1254 = vld [vmem:[%s13] sm:$0xff]
    %v1255 = vld [vmem:[%s13 + $0x8] sm:$0xff]
    %v1256 = vld [vmem:[%s13 + $0x10] sm:$0xff]
    %v1257 = vld [vmem:[%s13 + $0x18] sm:$0xff]
    %v1258 = vld [vmem:[%s13 + $0x20] sm:$0xff]
    %v1259 = vld [vmem:[%s13 + $0x28] sm:$0xff]
    %v1260 = vld [vmem:[%s13 + $0x30] sm:$0xff]
    %v1261 = vld [vmem:[%s13 + $0x38] sm:$0xff]
    %v1262 = vld [vmem:[%s13 + $0x40] sm:$0xff]
    %v1263 = vld [vmem:[%s13 + $0x48] sm:$0xff]
    %v1264 = vld [vmem:[%s13 + $0x50] sm:$0xff]
    %v1265 = vld [vmem:[%s13 + $0x58] sm:$0xff]
    %v1266 = vld [vmem:[%s13 + $0x60] sm:$0xff]
    %v1267 = vld [vmem:[%s13 + $0x68] sm:$0xff]
    %v1268 = vld [vmem:[%s13 + $0x70] sm:$0xff]
    %v1269 = vld [vmem:[%s13 + $0x78] sm:$0xff]
    %v1270 = vld [vmem:[%s14] sm:$0x1]
    %v1272 = vlaneseq
    %v1273 = vshrl.u32 %v1272, 7
    %v1274 = vsub.s32 0, %v1273
    %v1275 = vrot.slane %v1270, %v1274
    %1277 = vmatprep.subr.mxu0 0.0
    %1278 = vmatpush1.msra.mxu0 %v1254
    %1279 = vmatprep.subr.mxu0 0.0
    %1280 = vmatpush1.msra.mxu0 %v1255
    %1281 = vmatprep.subr.mxu0 0.0
    %1282 = vmatpush1.msra.mxu0 %v1256
    %1283 = vmatprep.subr.mxu0 0.0
    %1284 = vmatpush1.msra.mxu0 %v1257
    %1285 = vmatprep.subr.mxu0 0.0
    %1286 = vmatpush1.msra.mxu0 %v1258
    %1287 = vmatprep.subr.mxu0 0.0
    %1288 = vmatpush1.msra.mxu0 %v1259
    %1289 = vmatprep.subr.mxu0 0.0
    %1290 = vmatpush1.msra.mxu0 %v1260
    %1291 = vmatprep.subr.mxu0 0.0
    %1292 = vmatpush1.msra.mxu0 %v1261
    %1293 = vmatprep.subr.mxu0 0.0
    %1294 = vmatpush1.msra.mxu0 %v1262
    %1295 = vmatprep.subr.mxu0 0.0
    %1296 = vmatpush1.msra.mxu0 %v1263
    %1297 = vmatprep.subr.mxu0 0.0
    %1298 = vmatpush1.msra.mxu0 %v1264
    %1299 = vmatprep.subr.mxu0 0.0
    %1300 = vmatpush1.msra.mxu0 %v1265
    %1301 = vmatprep.subr.mxu0 0.0
    %1302 = vmatpush1.msra.mxu0 %v1266
    %1303 = vmatprep.subr.mxu0 0.0
    %1304 = vmatpush1.msra.mxu0 %v1267
    %1305 = vmatprep.subr.mxu0 0.0
    %1306 = vmatpush1.msra.mxu0 %v1268
    %1307 = vmatprep.subr.mxu0 0.0
    %1308 = vmatpush1.msra.mxu0 %v1269
    %1309 = vmatprep.subr.mxu0 0.0
    %1310 = vmatpush1.msra.mxu0 0.0
    %1311 = vmatprep.subr.mxu0 0.0
    %1312 = vmatpush1.msra.mxu0 0.0
    %1313 = vmatprep.subr.mxu0 0.0
    %1314 = vmatpush1.msra.mxu0 0.0
    %1315 = vmatprep.subr.mxu0 0.0
    %1316 = vmatpush1.msra.mxu0 0.0
    %1317 = vmatprep.subr.mxu0 0.0
    %1318 = vmatpush1.msra.mxu0 0.0
    %1319 = vmatprep.subr.mxu0 0.0
    %1320 = vmatpush1.msra.mxu0 0.0
    %1321 = vmatprep.subr.mxu0 0.0
    %1322 = vmatpush1.msra.mxu0 0.0
    %1323 = vmatprep.subr.mxu0 0.0
    %1324 = vmatpush1.msra.mxu0 0.0
    %1325 = vmatprep.subr.mxu0 0.0
    %1326 = vmatpush1.msra.mxu0 0.0
    %1327 = vmatprep.subr.mxu0 0.0
    %1328 = vmatpush1.msra.mxu0 0.0
    %1329 = vmatprep.subr.mxu0 0.0
    %1330 = vmatpush1.msra.mxu0 0.0
    %1331 = vmatprep.subr.mxu0 0.0
    %1332 = vmatpush1.msra.mxu0 0.0
    %1333 = vmatprep.subr.mxu0 0.0
    %1334 = vmatpush1.msra.mxu0 0.0
    %1335 = vmatprep.subr.mxu0 0.0
    %1336 = vmatpush1.msra.mxu0 0.0
    %1337 = vmatprep.subr.mxu0 0.0
    %1338 = vmatpush1.msra.mxu0 0.0
    %1339 = vmatprep.subr.mxu0 0.0
    %1340 = vmatpush1.msra.mxu0 0.0
    %1341 = vmatprep.mubr.f32.mxu0 0.0
    %1342 = vmatmul.mubr.f32.gmra.mrb[0].mxu0 %v1252
    %v1343 = vpop.f32.mrb[0].mxu0
    %v1344 = vadd.f32 %v1275, %v1343
    %v1345 = vpop.f32.mrb[0].mxu0
    %1346 = vmatprep.mubr.f32.mxu0 0.0
    %1347 = vmatmul.mubr.f32.gmra.mrb[0].mxu0 %v1253
    %v1348 = vpop.f32.mrb[0].mxu0
    %v1349 = vadd.f32 %v1275, %v1348
    %v1350 = vpop.f32.mrb[0].mxu0
    %1351 = vdwg.mxu0
    %v1352 = vadd.f32 %v1344, %v1086
    %v1353 = vadd.f32 %v1349, %v1087
    %v1354 = vld [vmem:[%s15] sm:$0x1]
    %v1355 = vld [vmem:[%s16] sm:$0x1]
    %v1356 = vsel %vm63, %v1352, 0.0
    %1357 = vadd.xlane.f32.xlu0 %v1356
    %v1358 = vpop.xlane.xlu0 %1357
    %v1359 = vsel %vm63, %v1353, 0.0
    %1360 = vadd.xlane.f32.xlu0 %v1359
    %v1361 = vpop.xlane.xlu0 %1360
    %v1362 = vmul.f32 %v1358, %v70
    %v1363 = vmul.f32 %v1361, %v70
    %v1364 = vsub.f32 %v1352, %v1362
    %v1365 = vsub.f32 %v1353, %v1363
    %v1366 = vmul.f32 %v1364, %v1364
    %v1367 = vmul.f32 %v1365, %v1365
    %v1368 = vsel %vm63, %v1366, 0.0
    %1369 = vadd.xlane.f32.xlu0 %v1368
    %v1370 = vpop.xlane.xlu0 %1369
    %v1371 = vsel %vm63, %v1367, 0.0
    %1372 = vadd.xlane.f32.xlu0 %v1371
    %v1373 = vpop.xlane.xlu0 %1372
    %v1374 = vmul.f32 %v1370, %v70
    %v1375 = vmul.f32 %v1373, %v70
    %v1376 = vadd.f32 %v1374, 1e-12
    %v1377 = vadd.f32 %v1375, 1e-12
    %v1378 = vrsqrt.pop %v1376
    %v1379 = vrsqrt.pop %v1377
    %v1380 = vmul.f32 %v1364, %v1378
    %v1381 = vmul.f32 %v1365, %v1379
    %v1383 = vlaneseq
    %v1384 = vshrl.u32 %v1383, 7
    %v1385 = vsub.s32 0, %v1384
    %v1386 = vrot.slane %v1354, %v1385
    %v1388 = vmul.f32 %v1380, %v1386
    %v1389 = vmul.f32 %v1381, %v1386
    %v1391 = vlaneseq
    %v1392 = vshrl.u32 %v1391, 7
    %v1393 = vsub.s32 0, %v1392
    %v1394 = vrot.slane %v1355, %v1393
    %v1396 = vadd.f32 %v1388, %v1394
    %v1397 = vadd.f32 %v1389, %v1394
    %s1398 = scalar_lea.vmem %s5, 32
    %v1399 = vld [vmem:[%s1398] sm:$0xff]
    %v1400 = vld [vmem:[%s1398 + $0x8] sm:$0xff]
    %v1401 = vld [vmem:[%s1398 + $0x10] sm:$0xff]
    %v1402 = vld [vmem:[%s1398 + $0x18] sm:$0xff]
    %s1403 = scalar_lea.vmem %s6, 1
    %v1404 = vld [vmem:[%s1403] sm:$0x1]
    %v1406 = vlaneseq
    %v1407 = vshrl.u32 %v1406, 7
    %v1408 = vsub.s32 0, %v1407
    %v1409 = vrot.slane %v1404, %v1408
    %v1412 = vsel %vm63, %v1396, 0
    %v1415 = vsel %vm63, %v1397, 0
    %1417 = vmatprep.subr.mxu0 0.0
    %1418 = vmatpush1.msra.mxu0 %v1399
    %1419 = vmatprep.subr.mxu0 0.0
    %1420 = vmatpush1.msra.mxu0 %v1400
    %1421 = vmatprep.subr.mxu0 0.0
    %1422 = vmatpush1.msra.mxu0 %v1401
    %1423 = vmatprep.subr.mxu0 0.0
    %1424 = vmatpush1.msra.mxu0 %v1402
    %1425 = vmatprep.subr.mxu0 0.0
    %1426 = vmatpush1.msra.mxu0 0.0
    %1427 = vmatprep.subr.mxu0 0.0
    %1428 = vmatpush1.msra.mxu0 0.0
    %1429 = vmatprep.subr.mxu0 0.0
    %1430 = vmatpush1.msra.mxu0 0.0
    %1431 = vmatprep.subr.mxu0 0.0
    %1432 = vmatpush1.msra.mxu0 0.0
    %1433 = vmatprep.subr.mxu0 0.0
    %1434 = vmatpush1.msra.mxu0 0.0
    %1435 = vmatprep.subr.mxu0 0.0
    %1436 = vmatpush1.msra.mxu0 0.0
    %1437 = vmatprep.subr.mxu0 0.0
    %1438 = vmatpush1.msra.mxu0 0.0
    %1439 = vmatprep.subr.mxu0 0.0
    %1440 = vmatpush1.msra.mxu0 0.0
    %1441 = vmatprep.subr.mxu0 0.0
    %1442 = vmatpush1.msra.mxu0 0.0
    %1443 = vmatprep.subr.mxu0 0.0
    %1444 = vmatpush1.msra.mxu0 0.0
    %1445 = vmatprep.subr.mxu0 0.0
    %1446 = vmatpush1.msra.mxu0 0.0
    %1447 = vmatprep.subr.mxu0 0.0
    %1448 = vmatpush1.msra.mxu0 0.0
    %1449 = vmatprep.subr.mxu0 0.0
    %1450 = vmatpush1.msra.mxu0 0.0
    %1451 = vmatprep.subr.mxu0 0.0
    %1452 = vmatpush1.msra.mxu0 0.0
    %1453 = vmatprep.subr.mxu0 0.0
    %1454 = vmatpush1.msra.mxu0 0.0
    %1455 = vmatprep.subr.mxu0 0.0
    %1456 = vmatpush1.msra.mxu0 0.0
    %1457 = vmatprep.subr.mxu0 0.0
    %1458 = vmatpush1.msra.mxu0 0.0
    %1459 = vmatprep.subr.mxu0 0.0
    %1460 = vmatpush1.msra.mxu0 0.0
    %1461 = vmatprep.subr.mxu0 0.0
    %1462 = vmatpush1.msra.mxu0 0.0
    %1463 = vmatprep.subr.mxu0 0.0
    %1464 = vmatpush1.msra.mxu0 0.0
    %1465 = vmatprep.subr.mxu0 0.0
    %1466 = vmatpush1.msra.mxu0 0.0
    %1467 = vmatprep.subr.mxu0 0.0
    %1468 = vmatpush1.msra.mxu0 0.0
    %1469 = vmatprep.subr.mxu0 0.0
    %1470 = vmatpush1.msra.mxu0 0.0
    %1471 = vmatprep.subr.mxu0 0.0
    %1472 = vmatpush1.msra.mxu0 0.0
    %1473 = vmatprep.subr.mxu0 0.0
    %1474 = vmatpush1.msra.mxu0 0.0
    %1475 = vmatprep.subr.mxu0 0.0
    %1476 = vmatpush1.msra.mxu0 0.0
    %1477 = vmatprep.subr.mxu0 0.0
    %1478 = vmatpush1.msra.mxu0 0.0
    %1479 = vmatprep.subr.mxu0 0.0
    %1480 = vmatpush1.msra.mxu0 0.0
    %1481 = vmatprep.mubr.f32.mxu0 0.0
    %1482 = vmatmul.mubr.f32.gmra.mrb[0].mxu0 %v1412
    %v1483 = vpop.f32.mrb[0].mxu0
    %v1484 = vadd.f32 %v1409, %v1483
    %v1485 = vpop.f32.mrb[0].mxu0
    %1486 = vmatprep.mubr.f32.mxu0 0.0
    %1487 = vmatmul.mubr.f32.gmra.mrb[0].mxu0 %v1415
    %v1488 = vpop.f32.mrb[0].mxu0
    %v1489 = vadd.f32 %v1409, %v1488
    %v1490 = vpop.f32.mrb[0].mxu0
    %1491 = vdwg.mxu0
    %s1492 = scalar_lea.vmem %s7, 32
    %v1493 = vld [vmem:[%s1492] sm:$0xff]
    %v1494 = vld [vmem:[%s1492 + $0x8] sm:$0xff]
    %v1495 = vld [vmem:[%s1492 + $0x10] sm:$0xff]
    %v1496 = vld [vmem:[%s1492 + $0x18] sm:$0xff]
    %1498 = vrot.lane.b32.xlu0 %v1484, 96
    %v1499 = vpop.permute.xlu0 %1498
    %v1500 = vsel %vm206, %v1484, 0
    %v1502 = vsel %vm206, %v1499, 0
    %1504 = vmatprep.subr.mxu0 0.0
    %1505 = vmatpush1.xpose.msra.mxu0 %v1502
    %1506 = vmatprep.subr.mxu0 0.0
    %1507 = vmatpush1.xpose.msra.mxu0 0.0
    %1508 = vmatprep.subr.mxu0 0.0
    %1509 = vmatpush1.xpose.msra.mxu0 0.0
    %1510 = vmatprep.subr.mxu0 0.0
    %1511 = vmatpush1.xpose.msra.mxu0 0.0
    %1512 = vmatprep.subr.mxu0 0.0
    %1513 = vmatpush1.xpose.msra.mxu0 0.0
    %1514 = vmatprep.subr.mxu0 0.0
    %1515 = vmatpush1.xpose.msra.mxu0 0.0
    %1516 = vmatprep.subr.mxu0 0.0
    %1517 = vmatpush1.xpose.msra.mxu0 0.0
    %1518 = vmatprep.subr.mxu0 0.0
    %1519 = vmatpush1.xpose.msra.mxu0 0.0
    %1520 = vmatprep.subr.mxu0 0.0
    %1521 = vmatpush1.xpose.msra.mxu0 0.0
    %1522 = vmatprep.subr.mxu0 0.0
    %1523 = vmatpush1.xpose.msra.mxu0 0.0
    %1524 = vmatprep.subr.mxu0 0.0
    %1525 = vmatpush1.xpose.msra.mxu0 0.0
    %1526 = vmatprep.subr.mxu0 0.0
    %1527 = vmatpush1.xpose.msra.mxu0 0.0
    %1528 = vmatprep.subr.mxu0 0.0
    %1529 = vmatpush1.xpose.msra.mxu0 0.0
    %1530 = vmatprep.subr.mxu0 0.0
    %1531 = vmatpush1.xpose.msra.mxu0 0.0
    %1532 = vmatprep.subr.mxu0 0.0
    %1533 = vmatpush1.xpose.msra.mxu0 0.0
    %1534 = vmatprep.subr.mxu0 0.0
    %1535 = vmatpush1.xpose.msra.mxu0 0.0
    %1536 = vmatprep.subr.mxu0 0.0
    %1537 = vmatpush1.xpose.msra.mxu0 0.0
    %1538 = vmatprep.subr.mxu0 0.0
    %1539 = vmatpush1.xpose.msra.mxu0 0.0
    %1540 = vmatprep.subr.mxu0 0.0
    %1541 = vmatpush1.xpose.msra.mxu0 0.0
    %1542 = vmatprep.subr.mxu0 0.0
    %1543 = vmatpush1.xpose.msra.mxu0 0.0
    %1544 = vmatprep.subr.mxu0 0.0
    %1545 = vmatpush1.xpose.msra.mxu0 0.0
    %1546 = vmatprep.subr.mxu0 0.0
    %1547 = vmatpush1.xpose.msra.mxu0 0.0
    %1548 = vmatprep.subr.mxu0 0.0
    %1549 = vmatpush1.xpose.msra.mxu0 0.0
    %1550 = vmatprep.subr.mxu0 0.0
    %1551 = vmatpush1.xpose.msra.mxu0 0.0
    %1552 = vmatprep.subr.mxu0 0.0
    %1553 = vmatpush1.xpose.msra.mxu0 0.0
    %1554 = vmatprep.subr.mxu0 0.0
    %1555 = vmatpush1.xpose.msra.mxu0 0.0
    %1556 = vmatprep.subr.mxu0 0.0
    %1557 = vmatpush1.xpose.msra.mxu0 0.0
    %1558 = vmatprep.subr.mxu0 0.0
    %1559 = vmatpush1.xpose.msra.mxu0 0.0
    %1560 = vmatprep.subr.mxu0 0.0
    %1561 = vmatpush1.xpose.msra.mxu0 0.0
    %1562 = vmatprep.subr.mxu0 0.0
    %1563 = vmatpush1.xpose.msra.mxu0 0.0
    %1564 = vmatprep.subr.mxu0 0.0
    %1565 = vmatpush1.xpose.msra.mxu0 0.0
    %1566 = vmatprep.subr.mxu0 0.0
    %1567 = vmatpush1.xpose.msra.mxu0 0.0
    %1568 = vmatprep.mubr.f32.mxu0 0.0
    %1569 = vmatmul.mubr.f32.gmra.mrb[0].mxu0 %v1500
    %v1570 = vpop.f32.mrb[0].mxu0
    %v1571 = vadd.f32 0.0, %v1570
    %v1572 = vpop.f32.mrb[0].mxu0
    %1573 = vdwg.mxu0
    %1575 = vrot.lane.b32.xlu0 %v1489, 96
    %v1576 = vpop.permute.xlu0 %1575
    %v1577 = vsel %vm206, %v1489, 0
    %v1579 = vsel %vm206, %v1576, 0
    %1581 = vmatprep.subr.mxu0 0.0
    %1582 = vmatpush1.xpose.msra.mxu0 %v1579
    %1583 = vmatprep.subr.mxu0 0.0
    %1584 = vmatpush1.xpose.msra.mxu0 0.0
    %1585 = vmatprep.subr.mxu0 0.0
    %1586 = vmatpush1.xpose.msra.mxu0 0.0
    %1587 = vmatprep.subr.mxu0 0.0
    %1588 = vmatpush1.xpose.msra.mxu0 0.0
    %1589 = vmatprep.subr.mxu0 0.0
    %1590 = vmatpush1.xpose.msra.mxu0 0.0
    %1591 = vmatprep.subr.mxu0 0.0
    %1592 = vmatpush1.xpose.msra.mxu0 0.0
    %1593 = vmatprep.subr.mxu0 0.0
    %1594 = vmatpush1.xpose.msra.mxu0 0.0
    %1595 = vmatprep.subr.mxu0 0.0
    %1596 = vmatpush1.xpose.msra.mxu0 0.0
    %1597 = vmatprep.subr.mxu0 0.0
    %1598 = vmatpush1.xpose.msra.mxu0 0.0
    %1599 = vmatprep.subr.mxu0 0.0
    %1600 = vmatpush1.xpose.msra.mxu0 0.0
    %1601 = vmatprep.subr.mxu0 0.0
    %1602 = vmatpush1.xpose.msra.mxu0 0.0
    %1603 = vmatprep.subr.mxu0 0.0
    %1604 = vmatpush1.xpose.msra.mxu0 0.0
    %1605 = vmatprep.subr.mxu0 0.0
    %1606 = vmatpush1.xpose.msra.mxu0 0.0
    %1607 = vmatprep.subr.mxu0 0.0
    %1608 = vmatpush1.xpose.msra.mxu0 0.0
    %1609 = vmatprep.subr.mxu0 0.0
    %1610 = vmatpush1.xpose.msra.mxu0 0.0
    %1611 = vmatprep.subr.mxu0 0.0
    %1612 = vmatpush1.xpose.msra.mxu0 0.0
    %1613 = vmatprep.subr.mxu0 0.0
    %1614 = vmatpush1.xpose.msra.mxu0 0.0
    %1615 = vmatprep.subr.mxu0 0.0
    %1616 = vmatpush1.xpose.msra.mxu0 0.0
    %1617 = vmatprep.subr.mxu0 0.0
    %1618 = vmatpush1.xpose.msra.mxu0 0.0
    %1619 = vmatprep.subr.mxu0 0.0
    %1620 = vmatpush1.xpose.msra.mxu0 0.0
    %1621 = vmatprep.subr.mxu0 0.0
    %1622 = vmatpush1.xpose.msra.mxu0 0.0
    %1623 = vmatprep.subr.mxu0 0.0
    %1624 = vmatpush1.xpose.msra.mxu0 0.0
    %1625 = vmatprep.subr.mxu0 0.0
    %1626 = vmatpush1.xpose.msra.mxu0 0.0
    %1627 = vmatprep.subr.mxu0 0.0
    %1628 = vmatpush1.xpose.msra.mxu0 0.0
    %1629 = vmatprep.subr.mxu0 0.0
    %1630 = vmatpush1.xpose.msra.mxu0 0.0
    %1631 = vmatprep.subr.mxu0 0.0
    %1632 = vmatpush1.xpose.msra.mxu0 0.0
    %1633 = vmatprep.subr.mxu0 0.0
    %1634 = vmatpush1.xpose.msra.mxu0 0.0
    %1635 = vmatprep.subr.mxu0 0.0
    %1636 = vmatpush1.xpose.msra.mxu0 0.0
    %1637 = vmatprep.subr.mxu0 0.0
    %1638 = vmatpush1.xpose.msra.mxu0 0.0
    %1639 = vmatprep.subr.mxu0 0.0
    %1640 = vmatpush1.xpose.msra.mxu0 0.0
    %1641 = vmatprep.subr.mxu0 0.0
    %1642 = vmatpush1.xpose.msra.mxu0 0.0
    %1643 = vmatprep.subr.mxu0 0.0
    %1644 = vmatpush1.xpose.msra.mxu0 0.0
    %1645 = vmatprep.mubr.f32.mxu0 0.0
    %1646 = vmatmul.mubr.f32.gmra.mrb[0].mxu0 %v1577
    %v1647 = vpop.f32.mrb[0].mxu0
    %v1648 = vadd.f32 0.0, %v1647
    %v1649 = vpop.f32.mrb[0].mxu0
    %1650 = vdwg.mxu0
    %v1651 = vmul.f32 %v1571, 0.25
    %v1652 = vmul.f32 %v1648, 0.25
    %v1653 = vadd.f32 %v1651, %v59
    %v1654 = vadd.f32 %v1652, %v60
    %v1655 = vsel %vm362, %v1653, -inf
    %1656 = vmax.xlane.f32.xlu0 %v1655
    %v1657 = vpop.xlane.xlu0 %1656
    %v1658 = vsel %vm362, %v1654, -inf
    %1659 = vmax.xlane.f32.xlu0 %v1658
    %v1660 = vpop.xlane.xlu0 %1659
    %v1661 = vsub.f32 %v1653, %v1657
    %v1662 = vsub.f32 %v1654, %v1660
    %v1663 = vmul.f32 %v1661, 1.442695
    %v1664 = vpow.pop %v1663
    %v1665 = vmul.f32 %v1662, 1.442695
    %v1666 = vpow.pop %v1665
    %v1667 = vsel %vm362, %v1664, 0.0
    %1668 = vadd.xlane.f32.xlu0 %v1667
    %v1669 = vpop.xlane.xlu0 %1668
    %v1670 = vsel %vm362, %v1666, 0.0
    %1671 = vadd.xlane.f32.xlu0 %v1670
    %v1672 = vpop.xlane.xlu0 %1671
    %v1673 = vrcp.pop %v1669
    %v1674 = vrcp.pop %v1672
    %v1675 = vmul.f32 %v1664, %v1673
    %v1676 = vmul.f32 %v1666, %v1674
    %1677 = vrot.lane.b32.xlu0 %v1484, 64
    %v1678 = vpop.permute.xlu0 %1677
    %v1681 = vsel %vm362, %v1675, 0
    %1683 = vmatprep.subr.mxu0 0.0
    %1684 = vmatpush1.msra.mxu0 %v1678
    %1685 = vmatprep.subr.mxu0 0.0
    %1686 = vmatpush1.msra.mxu0 0.0
    %1687 = vmatprep.subr.mxu0 0.0
    %1688 = vmatpush1.msra.mxu0 0.0
    %1689 = vmatprep.subr.mxu0 0.0
    %1690 = vmatpush1.msra.mxu0 0.0
    %1691 = vmatprep.subr.mxu0 0.0
    %1692 = vmatpush1.msra.mxu0 0.0
    %1693 = vmatprep.subr.mxu0 0.0
    %1694 = vmatpush1.msra.mxu0 0.0
    %1695 = vmatprep.subr.mxu0 0.0
    %1696 = vmatpush1.msra.mxu0 0.0
    %1697 = vmatprep.subr.mxu0 0.0
    %1698 = vmatpush1.msra.mxu0 0.0
    %1699 = vmatprep.subr.mxu0 0.0
    %1700 = vmatpush1.msra.mxu0 0.0
    %1701 = vmatprep.subr.mxu0 0.0
    %1702 = vmatpush1.msra.mxu0 0.0
    %1703 = vmatprep.subr.mxu0 0.0
    %1704 = vmatpush1.msra.mxu0 0.0
    %1705 = vmatprep.subr.mxu0 0.0
    %1706 = vmatpush1.msra.mxu0 0.0
    %1707 = vmatprep.subr.mxu0 0.0
    %1708 = vmatpush1.msra.mxu0 0.0
    %1709 = vmatprep.subr.mxu0 0.0
    %1710 = vmatpush1.msra.mxu0 0.0
    %1711 = vmatprep.subr.mxu0 0.0
    %1712 = vmatpush1.msra.mxu0 0.0
    %1713 = vmatprep.subr.mxu0 0.0
    %1714 = vmatpush1.msra.mxu0 0.0
    %1715 = vmatprep.subr.mxu0 0.0
    %1716 = vmatpush1.msra.mxu0 0.0
    %1717 = vmatprep.subr.mxu0 0.0
    %1718 = vmatpush1.msra.mxu0 0.0
    %1719 = vmatprep.subr.mxu0 0.0
    %1720 = vmatpush1.msra.mxu0 0.0
    %1721 = vmatprep.subr.mxu0 0.0
    %1722 = vmatpush1.msra.mxu0 0.0
    %1723 = vmatprep.subr.mxu0 0.0
    %1724 = vmatpush1.msra.mxu0 0.0
    %1725 = vmatprep.subr.mxu0 0.0
    %1726 = vmatpush1.msra.mxu0 0.0
    %1727 = vmatprep.subr.mxu0 0.0
    %1728 = vmatpush1.msra.mxu0 0.0
    %1729 = vmatprep.subr.mxu0 0.0
    %1730 = vmatpush1.msra.mxu0 0.0
    %1731 = vmatprep.subr.mxu0 0.0
    %1732 = vmatpush1.msra.mxu0 0.0
    %1733 = vmatprep.subr.mxu0 0.0
    %1734 = vmatpush1.msra.mxu0 0.0
    %1735 = vmatprep.subr.mxu0 0.0
    %1736 = vmatpush1.msra.mxu0 0.0
    %1737 = vmatprep.subr.mxu0 0.0
    %1738 = vmatpush1.msra.mxu0 0.0
    %1739 = vmatprep.subr.mxu0 0.0
    %1740 = vmatpush1.msra.mxu0 0.0
    %1741 = vmatprep.subr.mxu0 0.0
    %1742 = vmatpush1.msra.mxu0 0.0
    %1743 = vmatprep.subr.mxu0 0.0
    %1744 = vmatpush1.msra.mxu0 0.0
    %1745 = vmatprep.subr.mxu0 0.0
    %1746 = vmatpush1.msra.mxu0 0.0
    %1747 = vmatprep.mubr.f32.mxu0 0.0
    %1748 = vmatmul.mubr.f32.gmra.mrb[0].mxu0 %v1681
    %v1749 = vpop.f32.mrb[0].mxu0
    %v1750 = vadd.f32 0.0, %v1749
    %v1751 = vpop.f32.mrb[0].mxu0
    %1752 = vdwg.mxu0
    %1753 = vrot.lane.b32.xlu0 %v1489, 64
    %v1754 = vpop.permute.xlu0 %1753
    %v1757 = vsel %vm362, %v1676, 0
    %1759 = vmatprep.subr.mxu0 0.0
    %1760 = vmatpush1.msra.mxu0 %v1754
    %1761 = vmatprep.subr.mxu0 0.0
    %1762 = vmatpush1.msra.mxu0 0.0
    %1763 = vmatprep.subr.mxu0 0.0
    %1764 = vmatpush1.msra.mxu0 0.0
    %1765 = vmatprep.subr.mxu0 0.0
    %1766 = vmatpush1.msra.mxu0 0.0
    %1767 = vmatprep.subr.mxu0 0.0
    %1768 = vmatpush1.msra.mxu0 0.0
    %1769 = vmatprep.subr.mxu0 0.0
    %1770 = vmatpush1.msra.mxu0 0.0
    %1771 = vmatprep.subr.mxu0 0.0
    %1772 = vmatpush1.msra.mxu0 0.0
    %1773 = vmatprep.subr.mxu0 0.0
    %1774 = vmatpush1.msra.mxu0 0.0
    %1775 = vmatprep.subr.mxu0 0.0
    %1776 = vmatpush1.msra.mxu0 0.0
    %1777 = vmatprep.subr.mxu0 0.0
    %1778 = vmatpush1.msra.mxu0 0.0
    %1779 = vmatprep.subr.mxu0 0.0
    %1780 = vmatpush1.msra.mxu0 0.0
    %1781 = vmatprep.subr.mxu0 0.0
    %1782 = vmatpush1.msra.mxu0 0.0
    %1783 = vmatprep.subr.mxu0 0.0
    %1784 = vmatpush1.msra.mxu0 0.0
    %1785 = vmatprep.subr.mxu0 0.0
    %1786 = vmatpush1.msra.mxu0 0.0
    %1787 = vmatprep.subr.mxu0 0.0
    %1788 = vmatpush1.msra.mxu0 0.0
    %1789 = vmatprep.subr.mxu0 0.0
    %1790 = vmatpush1.msra.mxu0 0.0
    %1791 = vmatprep.subr.mxu0 0.0
    %1792 = vmatpush1.msra.mxu0 0.0
    %1793 = vmatprep.subr.mxu0 0.0
    %1794 = vmatpush1.msra.mxu0 0.0
    %1795 = vmatprep.subr.mxu0 0.0
    %1796 = vmatpush1.msra.mxu0 0.0
    %1797 = vmatprep.subr.mxu0 0.0
    %1798 = vmatpush1.msra.mxu0 0.0
    %1799 = vmatprep.subr.mxu0 0.0
    %1800 = vmatpush1.msra.mxu0 0.0
    %1801 = vmatprep.subr.mxu0 0.0
    %1802 = vmatpush1.msra.mxu0 0.0
    %1803 = vmatprep.subr.mxu0 0.0
    %1804 = vmatpush1.msra.mxu0 0.0
    %1805 = vmatprep.subr.mxu0 0.0
    %1806 = vmatpush1.msra.mxu0 0.0
    %1807 = vmatprep.subr.mxu0 0.0
    %1808 = vmatpush1.msra.mxu0 0.0
    %1809 = vmatprep.subr.mxu0 0.0
    %1810 = vmatpush1.msra.mxu0 0.0
    %1811 = vmatprep.subr.mxu0 0.0
    %1812 = vmatpush1.msra.mxu0 0.0
    %1813 = vmatprep.subr.mxu0 0.0
    %1814 = vmatpush1.msra.mxu0 0.0
    %1815 = vmatprep.subr.mxu0 0.0
    %1816 = vmatpush1.msra.mxu0 0.0
    %1817 = vmatprep.subr.mxu0 0.0
    %1818 = vmatpush1.msra.mxu0 0.0
    %1819 = vmatprep.subr.mxu0 0.0
    %1820 = vmatpush1.msra.mxu0 0.0
    %1821 = vmatprep.subr.mxu0 0.0
    %1822 = vmatpush1.msra.mxu0 0.0
    %1823 = vmatprep.mubr.f32.mxu0 0.0
    %1824 = vmatmul.mubr.f32.gmra.mrb[0].mxu0 %v1757
    %v1825 = vpop.f32.mrb[0].mxu0
    %v1826 = vadd.f32 0.0, %v1825
    %v1827 = vpop.f32.mrb[0].mxu0
    %1828 = vdwg.mxu0
    %1829 = vrot.lane.b32.xlu0 %v1484, 112
    %v1830 = vpop.permute.xlu0 %1829
    %1831 = vrot.lane.b32.xlu0 %v1484, 80
    %v1832 = vpop.permute.xlu0 %1831
    %v1833 = vsel %vm206, %v1830, 0
    %v1835 = vsel %vm206, %v1832, 0
    %1837 = vmatprep.subr.mxu0 0.0
    %1838 = vmatpush1.xpose.msra.mxu0 %v1835
    %1839 = vmatprep.subr.mxu0 0.0
    %1840 = vmatpush1.xpose.msra.mxu0 0.0
    %1841 = vmatprep.subr.mxu0 0.0
    %1842 = vmatpush1.xpose.msra.mxu0 0.0
    %1843 = vmatprep.subr.mxu0 0.0
    %1844 = vmatpush1.xpose.msra.mxu0 0.0
    %1845 = vmatprep.subr.mxu0 0.0
    %1846 = vmatpush1.xpose.msra.mxu0 0.0
    %1847 = vmatprep.subr.mxu0 0.0
    %1848 = vmatpush1.xpose.msra.mxu0 0.0
    %1849 = vmatprep.subr.mxu0 0.0
    %1850 = vmatpush1.xpose.msra.mxu0 0.0
    %1851 = vmatprep.subr.mxu0 0.0
    %1852 = vmatpush1.xpose.msra.mxu0 0.0
    %1853 = vmatprep.subr.mxu0 0.0
    %1854 = vmatpush1.xpose.msra.mxu0 0.0
    %1855 = vmatprep.subr.mxu0 0.0
    %1856 = vmatpush1.xpose.msra.mxu0 0.0
    %1857 = vmatprep.subr.mxu0 0.0
    %1858 = vmatpush1.xpose.msra.mxu0 0.0
    %1859 = vmatprep.subr.mxu0 0.0
    %1860 = vmatpush1.xpose.msra.mxu0 0.0
    %1861 = vmatprep.subr.mxu0 0.0
    %1862 = vmatpush1.xpose.msra.mxu0 0.0
    %1863 = vmatprep.subr.mxu0 0.0
    %1864 = vmatpush1.xpose.msra.mxu0 0.0
    %1865 = vmatprep.subr.mxu0 0.0
    %1866 = vmatpush1.xpose.msra.mxu0 0.0
    %1867 = vmatprep.subr.mxu0 0.0
    %1868 = vmatpush1.xpose.msra.mxu0 0.0
    %1869 = vmatprep.subr.mxu0 0.0
    %1870 = vmatpush1.xpose.msra.mxu0 0.0
    %1871 = vmatprep.subr.mxu0 0.0
    %1872 = vmatpush1.xpose.msra.mxu0 0.0
    %1873 = vmatprep.subr.mxu0 0.0
    %1874 = vmatpush1.xpose.msra.mxu0 0.0
    %1875 = vmatprep.subr.mxu0 0.0
    %1876 = vmatpush1.xpose.msra.mxu0 0.0
    %1877 = vmatprep.subr.mxu0 0.0
    %1878 = vmatpush1.xpose.msra.mxu0 0.0
    %1879 = vmatprep.subr.mxu0 0.0
    %1880 = vmatpush1.xpose.msra.mxu0 0.0
    %1881 = vmatprep.subr.mxu0 0.0
    %1882 = vmatpush1.xpose.msra.mxu0 0.0
    %1883 = vmatprep.subr.mxu0 0.0
    %1884 = vmatpush1.xpose.msra.mxu0 0.0
    %1885 = vmatprep.subr.mxu0 0.0
    %1886 = vmatpush1.xpose.msra.mxu0 0.0
    %1887 = vmatprep.subr.mxu0 0.0
    %1888 = vmatpush1.xpose.msra.mxu0 0.0
    %1889 = vmatprep.subr.mxu0 0.0
    %1890 = vmatpush1.xpose.msra.mxu0 0.0
    %1891 = vmatprep.subr.mxu0 0.0
    %1892 = vmatpush1.xpose.msra.mxu0 0.0
    %1893 = vmatprep.subr.mxu0 0.0
    %1894 = vmatpush1.xpose.msra.mxu0 0.0
    %1895 = vmatprep.subr.mxu0 0.0
    %1896 = vmatpush1.xpose.msra.mxu0 0.0
    %1897 = vmatprep.subr.mxu0 0.0
    %1898 = vmatpush1.xpose.msra.mxu0 0.0
    %1899 = vmatprep.subr.mxu0 0.0
    %1900 = vmatpush1.xpose.msra.mxu0 0.0
    %1901 = vmatprep.mubr.f32.mxu0 0.0
    %1902 = vmatmul.mubr.f32.gmra.mrb[0].mxu0 %v1833
    %v1903 = vpop.f32.mrb[0].mxu0
    %v1904 = vadd.f32 0.0, %v1903
    %v1905 = vpop.f32.mrb[0].mxu0
    %1906 = vdwg.mxu0
    %1907 = vrot.lane.b32.xlu0 %v1489, 112
    %v1908 = vpop.permute.xlu0 %1907
    %1909 = vrot.lane.b32.xlu0 %v1489, 80
    %v1910 = vpop.permute.xlu0 %1909
    %v1911 = vsel %vm206, %v1908, 0
    %v1913 = vsel %vm206, %v1910, 0
    %1915 = vmatprep.subr.mxu0 0.0
    %1916 = vmatpush1.xpose.msra.mxu0 %v1913
    %1917 = vmatprep.subr.mxu0 0.0
    %1918 = vmatpush1.xpose.msra.mxu0 0.0
    %1919 = vmatprep.subr.mxu0 0.0
    %1920 = vmatpush1.xpose.msra.mxu0 0.0
    %1921 = vmatprep.subr.mxu0 0.0
    %1922 = vmatpush1.xpose.msra.mxu0 0.0
    %1923 = vmatprep.subr.mxu0 0.0
    %1924 = vmatpush1.xpose.msra.mxu0 0.0
    %1925 = vmatprep.subr.mxu0 0.0
    %1926 = vmatpush1.xpose.msra.mxu0 0.0
    %1927 = vmatprep.subr.mxu0 0.0
    %1928 = vmatpush1.xpose.msra.mxu0 0.0
    %1929 = vmatprep.subr.mxu0 0.0
    %1930 = vmatpush1.xpose.msra.mxu0 0.0
    %1931 = vmatprep.subr.mxu0 0.0
    %1932 = vmatpush1.xpose.msra.mxu0 0.0
    %1933 = vmatprep.subr.mxu0 0.0
    %1934 = vmatpush1.xpose.msra.mxu0 0.0
    %1935 = vmatprep.subr.mxu0 0.0
    %1936 = vmatpush1.xpose.msra.mxu0 0.0
    %1937 = vmatprep.subr.mxu0 0.0
    %1938 = vmatpush1.xpose.msra.mxu0 0.0
    %1939 = vmatprep.subr.mxu0 0.0
    %1940 = vmatpush1.xpose.msra.mxu0 0.0
    %1941 = vmatprep.subr.mxu0 0.0
    %1942 = vmatpush1.xpose.msra.mxu0 0.0
    %1943 = vmatprep.subr.mxu0 0.0
    %1944 = vmatpush1.xpose.msra.mxu0 0.0
    %1945 = vmatprep.subr.mxu0 0.0
    %1946 = vmatpush1.xpose.msra.mxu0 0.0
    %1947 = vmatprep.subr.mxu0 0.0
    %1948 = vmatpush1.xpose.msra.mxu0 0.0
    %1949 = vmatprep.subr.mxu0 0.0
    %1950 = vmatpush1.xpose.msra.mxu0 0.0
    %1951 = vmatprep.subr.mxu0 0.0
    %1952 = vmatpush1.xpose.msra.mxu0 0.0
    %1953 = vmatprep.subr.mxu0 0.0
    %1954 = vmatpush1.xpose.msra.mxu0 0.0
    %1955 = vmatprep.subr.mxu0 0.0
    %1956 = vmatpush1.xpose.msra.mxu0 0.0
    %1957 = vmatprep.subr.mxu0 0.0
    %1958 = vmatpush1.xpose.msra.mxu0 0.0
    %1959 = vmatprep.subr.mxu0 0.0
    %1960 = vmatpush1.xpose.msra.mxu0 0.0
    %1961 = vmatprep.subr.mxu0 0.0
    %1962 = vmatpush1.xpose.msra.mxu0 0.0
    %1963 = vmatprep.subr.mxu0 0.0
    %1964 = vmatpush1.xpose.msra.mxu0 0.0
    %1965 = vmatprep.subr.mxu0 0.0
    %1966 = vmatpush1.xpose.msra.mxu0 0.0
    %1967 = vmatprep.subr.mxu0 0.0
    %1968 = vmatpush1.xpose.msra.mxu0 0.0
    %1969 = vmatprep.subr.mxu0 0.0
    %1970 = vmatpush1.xpose.msra.mxu0 0.0
    %1971 = vmatprep.subr.mxu0 0.0
    %1972 = vmatpush1.xpose.msra.mxu0 0.0
    %1973 = vmatprep.subr.mxu0 0.0
    %1974 = vmatpush1.xpose.msra.mxu0 0.0
    %1975 = vmatprep.subr.mxu0 0.0
    %1976 = vmatpush1.xpose.msra.mxu0 0.0
    %1977 = vmatprep.subr.mxu0 0.0
    %1978 = vmatpush1.xpose.msra.mxu0 0.0
    %1979 = vmatprep.mubr.f32.mxu0 0.0
    %1980 = vmatmul.mubr.f32.gmra.mrb[0].mxu0 %v1911
    %v1981 = vpop.f32.mrb[0].mxu0
    %v1982 = vadd.f32 0.0, %v1981
    %v1983 = vpop.f32.mrb[0].mxu0
    %1984 = vdwg.mxu0
    %v1985 = vmul.f32 %v1904, 0.25
    %v1986 = vmul.f32 %v1982, 0.25
    %v1987 = vadd.f32 %v1985, %v59
    %v1988 = vadd.f32 %v1986, %v60
    %v1989 = vsel %vm362, %v1987, -inf
    %1990 = vmax.xlane.f32.xlu0 %v1989
    %v1991 = vpop.xlane.xlu0 %1990
    %v1992 = vsel %vm362, %v1988, -inf
    %1993 = vmax.xlane.f32.xlu0 %v1992
    %v1994 = vpop.xlane.xlu0 %1993
    %v1995 = vsub.f32 %v1987, %v1991
    %v1996 = vsub.f32 %v1988, %v1994
    %v1997 = vmul.f32 %v1995, 1.442695
    %v1998 = vpow.pop %v1997
    %v1999 = vmul.f32 %v1996, 1.442695
    %v2000 = vpow.pop %v1999
    %v2001 = vsel %vm362, %v1998, 0.0
    %2002 = vadd.xlane.f32.xlu0 %v2001
    %v2003 = vpop.xlane.xlu0 %2002
    %v2004 = vsel %vm362, %v2000, 0.0
    %2005 = vadd.xlane.f32.xlu0 %v2004
    %v2006 = vpop.xlane.xlu0 %2005
    %v2007 = vrcp.pop %v2003
    %v2008 = vrcp.pop %v2006
    %v2009 = vmul.f32 %v1998, %v2007
    %v2010 = vmul.f32 %v2000, %v2008
    %2011 = vrot.lane.b32.xlu0 %v1484, 48
    %v2012 = vpop.permute.xlu0 %2011
    %v2015 = vsel %vm362, %v2009, 0
    %2017 = vmatprep.subr.mxu0 0.0
    %2018 = vmatpush1.msra.mxu0 %v2012
    %2019 = vmatprep.subr.mxu0 0.0
    %2020 = vmatpush1.msra.mxu0 0.0
    %2021 = vmatprep.subr.mxu0 0.0
    %2022 = vmatpush1.msra.mxu0 0.0
    %2023 = vmatprep.subr.mxu0 0.0
    %2024 = vmatpush1.msra.mxu0 0.0
    %2025 = vmatprep.subr.mxu0 0.0
    %2026 = vmatpush1.msra.mxu0 0.0
    %2027 = vmatprep.subr.mxu0 0.0
    %2028 = vmatpush1.msra.mxu0 0.0
    %2029 = vmatprep.subr.mxu0 0.0
    %2030 = vmatpush1.msra.mxu0 0.0
    %2031 = vmatprep.subr.mxu0 0.0
    %2032 = vmatpush1.msra.mxu0 0.0
    %2033 = vmatprep.subr.mxu0 0.0
    %2034 = vmatpush1.msra.mxu0 0.0
    %2035 = vmatprep.subr.mxu0 0.0
    %2036 = vmatpush1.msra.mxu0 0.0
    %2037 = vmatprep.subr.mxu0 0.0
    %2038 = vmatpush1.msra.mxu0 0.0
    %2039 = vmatprep.subr.mxu0 0.0
    %2040 = vmatpush1.msra.mxu0 0.0
    %2041 = vmatprep.subr.mxu0 0.0
    %2042 = vmatpush1.msra.mxu0 0.0
    %2043 = vmatprep.subr.mxu0 0.0
    %2044 = vmatpush1.msra.mxu0 0.0
    %2045 = vmatprep.subr.mxu0 0.0
    %2046 = vmatpush1.msra.mxu0 0.0
    %2047 = vmatprep.subr.mxu0 0.0
    %2048 = vmatpush1.msra.mxu0 0.0
    %2049 = vmatprep.subr.mxu0 0.0
    %2050 = vmatpush1.msra.mxu0 0.0
    %2051 = vmatprep.subr.mxu0 0.0
    %2052 = vmatpush1.msra.mxu0 0.0
    %2053 = vmatprep.subr.mxu0 0.0
    %2054 = vmatpush1.msra.mxu0 0.0
    %2055 = vmatprep.subr.mxu0 0.0
    %2056 = vmatpush1.msra.mxu0 0.0
    %2057 = vmatprep.subr.mxu0 0.0
    %2058 = vmatpush1.msra.mxu0 0.0
    %2059 = vmatprep.subr.mxu0 0.0
    %2060 = vmatpush1.msra.mxu0 0.0
    %2061 = vmatprep.subr.mxu0 0.0
    %2062 = vmatpush1.msra.mxu0 0.0
    %2063 = vmatprep.subr.mxu0 0.0
    %2064 = vmatpush1.msra.mxu0 0.0
    %2065 = vmatprep.subr.mxu0 0.0
    %2066 = vmatpush1.msra.mxu0 0.0
    %2067 = vmatprep.subr.mxu0 0.0
    %2068 = vmatpush1.msra.mxu0 0.0
    %2069 = vmatprep.subr.mxu0 0.0
    %2070 = vmatpush1.msra.mxu0 0.0
    %2071 = vmatprep.subr.mxu0 0.0
    %2072 = vmatpush1.msra.mxu0 0.0
    %2073 = vmatprep.subr.mxu0 0.0
    %2074 = vmatpush1.msra.mxu0 0.0
    %2075 = vmatprep.subr.mxu0 0.0
    %2076 = vmatpush1.msra.mxu0 0.0
    %2077 = vmatprep.subr.mxu0 0.0
    %2078 = vmatpush1.msra.mxu0 0.0
    %2079 = vmatprep.subr.mxu0 0.0
    %2080 = vmatpush1.msra.mxu0 0.0
    %2081 = vmatprep.mubr.f32.mxu0 0.0
    %2082 = vmatmul.mubr.f32.gmra.mrb[0].mxu0 %v2015
    %v2083 = vpop.f32.mrb[0].mxu0
    %v2084 = vadd.f32 0.0, %v2083
    %v2085 = vpop.f32.mrb[0].mxu0
    %2086 = vdwg.mxu0
    %2087 = vrot.lane.b32.xlu0 %v1489, 48
    %v2088 = vpop.permute.xlu0 %2087
    %v2091 = vsel %vm362, %v2010, 0
    %2093 = vmatprep.subr.mxu0 0.0
    %2094 = vmatpush1.msra.mxu0 %v2088
    %2095 = vmatprep.subr.mxu0 0.0
    %2096 = vmatpush1.msra.mxu0 0.0
    %2097 = vmatprep.subr.mxu0 0.0
    %2098 = vmatpush1.msra.mxu0 0.0
    %2099 = vmatprep.subr.mxu0 0.0
    %2100 = vmatpush1.msra.mxu0 0.0
    %2101 = vmatprep.subr.mxu0 0.0
    %2102 = vmatpush1.msra.mxu0 0.0
    %2103 = vmatprep.subr.mxu0 0.0
    %2104 = vmatpush1.msra.mxu0 0.0
    %2105 = vmatprep.subr.mxu0 0.0
    %2106 = vmatpush1.msra.mxu0 0.0
    %2107 = vmatprep.subr.mxu0 0.0
    %2108 = vmatpush1.msra.mxu0 0.0
    %2109 = vmatprep.subr.mxu0 0.0
    %2110 = vmatpush1.msra.mxu0 0.0
    %2111 = vmatprep.subr.mxu0 0.0
    %2112 = vmatpush1.msra.mxu0 0.0
    %2113 = vmatprep.subr.mxu0 0.0
    %2114 = vmatpush1.msra.mxu0 0.0
    %2115 = vmatprep.subr.mxu0 0.0
    %2116 = vmatpush1.msra.mxu0 0.0
    %2117 = vmatprep.subr.mxu0 0.0
    %2118 = vmatpush1.msra.mxu0 0.0
    %2119 = vmatprep.subr.mxu0 0.0
    %2120 = vmatpush1.msra.mxu0 0.0
    %2121 = vmatprep.subr.mxu0 0.0
    %2122 = vmatpush1.msra.mxu0 0.0
    %2123 = vmatprep.subr.mxu0 0.0
    %2124 = vmatpush1.msra.mxu0 0.0
    %2125 = vmatprep.subr.mxu0 0.0
    %2126 = vmatpush1.msra.mxu0 0.0
    %2127 = vmatprep.subr.mxu0 0.0
    %2128 = vmatpush1.msra.mxu0 0.0
    %2129 = vmatprep.subr.mxu0 0.0
    %2130 = vmatpush1.msra.mxu0 0.0
    %2131 = vmatprep.subr.mxu0 0.0
    %2132 = vmatpush1.msra.mxu0 0.0
    %2133 = vmatprep.subr.mxu0 0.0
    %2134 = vmatpush1.msra.mxu0 0.0
    %2135 = vmatprep.subr.mxu0 0.0
    %2136 = vmatpush1.msra.mxu0 0.0
    %2137 = vmatprep.subr.mxu0 0.0
    %2138 = vmatpush1.msra.mxu0 0.0
    %2139 = vmatprep.subr.mxu0 0.0
    %2140 = vmatpush1.msra.mxu0 0.0
    %2141 = vmatprep.subr.mxu0 0.0
    %2142 = vmatpush1.msra.mxu0 0.0
    %2143 = vmatprep.subr.mxu0 0.0
    %2144 = vmatpush1.msra.mxu0 0.0
    %2145 = vmatprep.subr.mxu0 0.0
    %2146 = vmatpush1.msra.mxu0 0.0
    %2147 = vmatprep.subr.mxu0 0.0
    %2148 = vmatpush1.msra.mxu0 0.0
    %2149 = vmatprep.subr.mxu0 0.0
    %2150 = vmatpush1.msra.mxu0 0.0
    %2151 = vmatprep.subr.mxu0 0.0
    %2152 = vmatpush1.msra.mxu0 0.0
    %2153 = vmatprep.subr.mxu0 0.0
    %2154 = vmatpush1.msra.mxu0 0.0
    %2155 = vmatprep.subr.mxu0 0.0
    %2156 = vmatpush1.msra.mxu0 0.0
    %2157 = vmatprep.mubr.f32.mxu0 0.0
    %2158 = vmatmul.mubr.f32.gmra.mrb[0].mxu0 %v2091
    %v2159 = vpop.f32.mrb[0].mxu0
    %v2160 = vadd.f32 0.0, %v2159
    %v2161 = vpop.f32.mrb[0].mxu0
    %2162 = vdwg.mxu0
    %v2164 = vsel %vm206, %v2084, 0
    %v2167 = vsel %vm206, %v2160, 0
    %2169 = vmatprep.subr.mxu0 0.0
    %2170 = vmatpush1.msra.mxu0 %v1495
    %2171 = vmatprep.subr.mxu0 0.0
    %2172 = vmatpush1.msra.mxu0 %v1496
    %2173 = vmatprep.subr.mxu0 0.0
    %2174 = vmatpush1.msra.mxu0 0.0
    %2175 = vmatprep.subr.mxu0 0.0
    %2176 = vmatpush1.msra.mxu0 0.0
    %2177 = vmatprep.subr.mxu0 0.0
    %2178 = vmatpush1.msra.mxu0 0.0
    %2179 = vmatprep.subr.mxu0 0.0
    %2180 = vmatpush1.msra.mxu0 0.0
    %2181 = vmatprep.subr.mxu0 0.0
    %2182 = vmatpush1.msra.mxu0 0.0
    %2183 = vmatprep.subr.mxu0 0.0
    %2184 = vmatpush1.msra.mxu0 0.0
    %2185 = vmatprep.subr.mxu0 0.0
    %2186 = vmatpush1.msra.mxu0 0.0
    %2187 = vmatprep.subr.mxu0 0.0
    %2188 = vmatpush1.msra.mxu0 0.0
    %2189 = vmatprep.subr.mxu0 0.0
    %2190 = vmatpush1.msra.mxu0 0.0
    %2191 = vmatprep.subr.mxu0 0.0
    %2192 = vmatpush1.msra.mxu0 0.0
    %2193 = vmatprep.subr.mxu0 0.0
    %2194 = vmatpush1.msra.mxu0 0.0
    %2195 = vmatprep.subr.mxu0 0.0
    %2196 = vmatpush1.msra.mxu0 0.0
    %2197 = vmatprep.subr.mxu0 0.0
    %2198 = vmatpush1.msra.mxu0 0.0
    %2199 = vmatprep.subr.mxu0 0.0
    %2200 = vmatpush1.msra.mxu0 0.0
    %2201 = vmatprep.subr.mxu0 0.0
    %2202 = vmatpush1.msra.mxu0 0.0
    %2203 = vmatprep.subr.mxu0 0.0
    %2204 = vmatpush1.msra.mxu0 0.0
    %2205 = vmatprep.subr.mxu0 0.0
    %2206 = vmatpush1.msra.mxu0 0.0
    %2207 = vmatprep.subr.mxu0 0.0
    %2208 = vmatpush1.msra.mxu0 0.0
    %2209 = vmatprep.subr.mxu0 0.0
    %2210 = vmatpush1.msra.mxu0 0.0
    %2211 = vmatprep.subr.mxu0 0.0
    %2212 = vmatpush1.msra.mxu0 0.0
    %2213 = vmatprep.subr.mxu0 0.0
    %2214 = vmatpush1.msra.mxu0 0.0
    %2215 = vmatprep.subr.mxu0 0.0
    %2216 = vmatpush1.msra.mxu0 0.0
    %2217 = vmatprep.subr.mxu0 0.0
    %2218 = vmatpush1.msra.mxu0 0.0
    %2219 = vmatprep.subr.mxu0 0.0
    %2220 = vmatpush1.msra.mxu0 0.0
    %2221 = vmatprep.subr.mxu0 0.0
    %2222 = vmatpush1.msra.mxu0 0.0
    %2223 = vmatprep.subr.mxu0 0.0
    %2224 = vmatpush1.msra.mxu0 0.0
    %2225 = vmatprep.subr.mxu0 0.0
    %2226 = vmatpush1.msra.mxu0 0.0
    %2227 = vmatprep.subr.mxu0 0.0
    %2228 = vmatpush1.msra.mxu0 0.0
    %2229 = vmatprep.subr.mxu0 0.0
    %2230 = vmatpush1.msra.mxu0 0.0
    %2231 = vmatprep.subr.mxu0 0.0
    %2232 = vmatpush1.msra.mxu0 0.0
    %2233 = vmatprep.mubr.f32.mxu0 0.0
    %2234 = vmatmul.mubr.f32.gmra.mrb[0].mxu0 %v2164
    %v2235 = vpop.f32.mrb[0].mxu0
    %v2236 = vadd.f32 0.0, %v2235
    %v2237 = vpop.f32.mrb[0].mxu0
    %2238 = vmatprep.mubr.f32.mxu0 0.0
    %2239 = vmatmul.mubr.f32.gmra.mrb[0].mxu0 %v2167
    %v2240 = vpop.f32.mrb[0].mxu0
    %v2241 = vadd.f32 0.0, %v2240
    %v2242 = vpop.f32.mrb[0].mxu0
    %2243 = vdwg.mxu0
    %v2245 = vsel %vm206, %v1750, 0
    %v2248 = vsel %vm206, %v1826, 0
    %2250 = vmatprep.subr.mxu0 0.0
    %2251 = vmatpush1.msra.mxu0 %v1493
    %2252 = vmatprep.subr.mxu0 0.0
    %2253 = vmatpush1.msra.mxu0 %v1494
    %2254 = vmatprep.subr.mxu0 0.0
    %2255 = vmatpush1.msra.mxu0 0.0
    %2256 = vmatprep.subr.mxu0 0.0
    %2257 = vmatpush1.msra.mxu0 0.0
    %2258 = vmatprep.subr.mxu0 0.0
    %2259 = vmatpush1.msra.mxu0 0.0
    %2260 = vmatprep.subr.mxu0 0.0
    %2261 = vmatpush1.msra.mxu0 0.0
    %2262 = vmatprep.subr.mxu0 0.0
    %2263 = vmatpush1.msra.mxu0 0.0
    %2264 = vmatprep.subr.mxu0 0.0
    %2265 = vmatpush1.msra.mxu0 0.0
    %2266 = vmatprep.subr.mxu0 0.0
    %2267 = vmatpush1.msra.mxu0 0.0
    %2268 = vmatprep.subr.mxu0 0.0
    %2269 = vmatpush1.msra.mxu0 0.0
    %2270 = vmatprep.subr.mxu0 0.0
    %2271 = vmatpush1.msra.mxu0 0.0
    %2272 = vmatprep.subr.mxu0 0.0
    %2273 = vmatpush1.msra.mxu0 0.0
    %2274 = vmatprep.subr.mxu0 0.0
    %2275 = vmatpush1.msra.mxu0 0.0
    %2276 = vmatprep.subr.mxu0 0.0
    %2277 = vmatpush1.msra.mxu0 0.0
    %2278 = vmatprep.subr.mxu0 0.0
    %2279 = vmatpush1.msra.mxu0 0.0
    %2280 = vmatprep.subr.mxu0 0.0
    %2281 = vmatpush1.msra.mxu0 0.0
    %2282 = vmatprep.subr.mxu0 0.0
    %2283 = vmatpush1.msra.mxu0 0.0
    %2284 = vmatprep.subr.mxu0 0.0
    %2285 = vmatpush1.msra.mxu0 0.0
    %2286 = vmatprep.subr.mxu0 0.0
    %2287 = vmatpush1.msra.mxu0 0.0
    %2288 = vmatprep.subr.mxu0 0.0
    %2289 = vmatpush1.msra.mxu0 0.0
    %2290 = vmatprep.subr.mxu0 0.0
    %2291 = vmatpush1.msra.mxu0 0.0
    %2292 = vmatprep.subr.mxu0 0.0
    %2293 = vmatpush1.msra.mxu0 0.0
    %2294 = vmatprep.subr.mxu0 0.0
    %2295 = vmatpush1.msra.mxu0 0.0
    %2296 = vmatprep.subr.mxu0 0.0
    %2297 = vmatpush1.msra.mxu0 0.0
    %2298 = vmatprep.subr.mxu0 0.0
    %2299 = vmatpush1.msra.mxu0 0.0
    %2300 = vmatprep.subr.mxu0 0.0
    %2301 = vmatpush1.msra.mxu0 0.0
    %2302 = vmatprep.subr.mxu0 0.0
    %2303 = vmatpush1.msra.mxu0 0.0
    %2304 = vmatprep.subr.mxu0 0.0
    %2305 = vmatpush1.msra.mxu0 0.0
    %2306 = vmatprep.subr.mxu0 0.0
    %2307 = vmatpush1.msra.mxu0 0.0
    %2308 = vmatprep.subr.mxu0 0.0
    %2309 = vmatpush1.msra.mxu0 0.0
    %2310 = vmatprep.subr.mxu0 0.0
    %2311 = vmatpush1.msra.mxu0 0.0
    %2312 = vmatprep.subr.mxu0 0.0
    %2313 = vmatpush1.msra.mxu0 0.0
    %2314 = vmatprep.mubr.f32.mxu0 0.0
    %2315 = vmatmul.mubr.f32.gmra.mrb[0].mxu0 %v2245
    %v2316 = vpop.f32.mrb[0].mxu0
    %v2317 = vadd.f32 %v2236, %v2316
    %v2318 = vpop.f32.mrb[0].mxu0
    %2319 = vmatprep.mubr.f32.mxu0 0.0
    %2320 = vmatmul.mubr.f32.gmra.mrb[0].mxu0 %v2248
    %v2321 = vpop.f32.mrb[0].mxu0
    %v2322 = vadd.f32 %v2241, %v2321
    %v2323 = vpop.f32.mrb[0].mxu0
    %2324 = vdwg.mxu0
    %s2325 = scalar_lea.vmem %s8, 1
    %v2326 = vld [vmem:[%s2325] sm:$0x1]
    %v2328 = vlaneseq
    %v2329 = vshrl.u32 %v2328, 7
    %v2330 = vsub.s32 0, %v2329
    %v2331 = vrot.slane %v2326, %v2330
    %v2333 = vadd.f32 %v2317, %v2331
    %v2334 = vadd.f32 %v2322, %v2331
    %v2335 = vadd.f32 %v2333, %v1396
    %v2336 = vadd.f32 %v2334, %v1397
    %s2337 = scalar_lea.vmem %s9, 1
    %v2338 = vld [vmem:[%s2337] sm:$0x1]
    %s2339 = scalar_lea.vmem %s10, 1
    %v2340 = vld [vmem:[%s2339] sm:$0x1]
    %v2341 = vsel %vm63, %v2335, 0.0
    %2342 = vadd.xlane.f32.xlu0 %v2341
    %v2343 = vpop.xlane.xlu0 %2342
    %v2344 = vsel %vm63, %v2336, 0.0
    %2345 = vadd.xlane.f32.xlu0 %v2344
    %v2346 = vpop.xlane.xlu0 %2345
    %v2347 = vmul.f32 %v2343, %v70
    %v2348 = vmul.f32 %v2346, %v70
    %v2349 = vsub.f32 %v2335, %v2347
    %v2350 = vsub.f32 %v2336, %v2348
    %v2351 = vmul.f32 %v2349, %v2349
    %v2352 = vmul.f32 %v2350, %v2350
    %v2353 = vsel %vm63, %v2351, 0.0
    %2354 = vadd.xlane.f32.xlu0 %v2353
    %v2355 = vpop.xlane.xlu0 %2354
    %v2356 = vsel %vm63, %v2352, 0.0
    %2357 = vadd.xlane.f32.xlu0 %v2356
    %v2358 = vpop.xlane.xlu0 %2357
    %v2359 = vmul.f32 %v2355, %v70
    %v2360 = vmul.f32 %v2358, %v70
    %v2361 = vadd.f32 %v2359, 1e-12
    %v2362 = vadd.f32 %v2360, 1e-12
    %v2363 = vrsqrt.pop %v2361
    %v2364 = vrsqrt.pop %v2362
    %v2365 = vmul.f32 %v2349, %v2363
    %v2366 = vmul.f32 %v2350, %v2364
    %v2368 = vlaneseq
    %v2369 = vshrl.u32 %v2368, 7
    %v2370 = vsub.s32 0, %v2369
    %v2371 = vrot.slane %v2338, %v2370
    %v2373 = vmul.f32 %v2365, %v2371
    %v2374 = vmul.f32 %v2366, %v2371
    %v2376 = vlaneseq
    %v2377 = vshrl.u32 %v2376, 7
    %v2378 = vsub.s32 0, %v2377
    %v2379 = vrot.slane %v2340, %v2378
    %v2381 = vadd.f32 %v2373, %v2379
    %v2382 = vadd.f32 %v2374, %v2379
    %s2383 = scalar_lea.vmem %s11, 32
    %v2384 = vld [vmem:[%s2383] sm:$0xff]
    %v2385 = vld [vmem:[%s2383 + $0x8] sm:$0xff]
    %v2386 = vld [vmem:[%s2383 + $0x10] sm:$0xff]
    %v2387 = vld [vmem:[%s2383 + $0x18] sm:$0xff]
    %s2388 = scalar_lea.vmem %s12, 1
    %v2389 = vld [vmem:[%s2388] sm:$0x1]
    %v2391 = vlaneseq
    %v2392 = vshrl.u32 %v2391, 7
    %v2393 = vsub.s32 0, %v2392
    %v2394 = vrot.slane %v2389, %v2393
    %v2397 = vsel %vm63, %v2381, 0
    %v2400 = vsel %vm63, %v2382, 0
    %2402 = vmatprep.subr.mxu0 0.0
    %2403 = vmatpush1.msra.mxu0 %v2384
    %2404 = vmatprep.subr.mxu0 0.0
    %2405 = vmatpush1.msra.mxu0 %v2385
    %2406 = vmatprep.subr.mxu0 0.0
    %2407 = vmatpush1.msra.mxu0 %v2386
    %2408 = vmatprep.subr.mxu0 0.0
    %2409 = vmatpush1.msra.mxu0 %v2387
    %2410 = vmatprep.subr.mxu0 0.0
    %2411 = vmatpush1.msra.mxu0 0.0
    %2412 = vmatprep.subr.mxu0 0.0
    %2413 = vmatpush1.msra.mxu0 0.0
    %2414 = vmatprep.subr.mxu0 0.0
    %2415 = vmatpush1.msra.mxu0 0.0
    %2416 = vmatprep.subr.mxu0 0.0
    %2417 = vmatpush1.msra.mxu0 0.0
    %2418 = vmatprep.subr.mxu0 0.0
    %2419 = vmatpush1.msra.mxu0 0.0
    %2420 = vmatprep.subr.mxu0 0.0
    %2421 = vmatpush1.msra.mxu0 0.0
    %2422 = vmatprep.subr.mxu0 0.0
    %2423 = vmatpush1.msra.mxu0 0.0
    %2424 = vmatprep.subr.mxu0 0.0
    %2425 = vmatpush1.msra.mxu0 0.0
    %2426 = vmatprep.subr.mxu0 0.0
    %2427 = vmatpush1.msra.mxu0 0.0
    %2428 = vmatprep.subr.mxu0 0.0
    %2429 = vmatpush1.msra.mxu0 0.0
    %2430 = vmatprep.subr.mxu0 0.0
    %2431 = vmatpush1.msra.mxu0 0.0
    %2432 = vmatprep.subr.mxu0 0.0
    %2433 = vmatpush1.msra.mxu0 0.0
    %2434 = vmatprep.subr.mxu0 0.0
    %2435 = vmatpush1.msra.mxu0 0.0
    %2436 = vmatprep.subr.mxu0 0.0
    %2437 = vmatpush1.msra.mxu0 0.0
    %2438 = vmatprep.subr.mxu0 0.0
    %2439 = vmatpush1.msra.mxu0 0.0
    %2440 = vmatprep.subr.mxu0 0.0
    %2441 = vmatpush1.msra.mxu0 0.0
    %2442 = vmatprep.subr.mxu0 0.0
    %2443 = vmatpush1.msra.mxu0 0.0
    %2444 = vmatprep.subr.mxu0 0.0
    %2445 = vmatpush1.msra.mxu0 0.0
    %2446 = vmatprep.subr.mxu0 0.0
    %2447 = vmatpush1.msra.mxu0 0.0
    %2448 = vmatprep.subr.mxu0 0.0
    %2449 = vmatpush1.msra.mxu0 0.0
    %2450 = vmatprep.subr.mxu0 0.0
    %2451 = vmatpush1.msra.mxu0 0.0
    %2452 = vmatprep.subr.mxu0 0.0
    %2453 = vmatpush1.msra.mxu0 0.0
    %2454 = vmatprep.subr.mxu0 0.0
    %2455 = vmatpush1.msra.mxu0 0.0
    %2456 = vmatprep.subr.mxu0 0.0
    %2457 = vmatpush1.msra.mxu0 0.0
    %2458 = vmatprep.subr.mxu0 0.0
    %2459 = vmatpush1.msra.mxu0 0.0
    %2460 = vmatprep.subr.mxu0 0.0
    %2461 = vmatpush1.msra.mxu0 0.0
    %2462 = vmatprep.subr.mxu0 0.0
    %2463 = vmatpush1.msra.mxu0 0.0
    %2464 = vmatprep.subr.mxu0 0.0
    %2465 = vmatpush1.msra.mxu0 0.0
    %2466 = vmatprep.mubr.f32.mxu0 0.0
    %2467 = vmatmul.mubr.f32.gmra.mrb[0].mxu0 %v2397
    %v2468 = vpop.f32.mrb[0].mxu0
    %v2469 = vadd.f32 %v2394, %v2468
    %v2470 = vpop.f32.mrb[0].mxu0
    %2471 = vmatprep.mubr.f32.mxu0 0.0
    %2472 = vmatmul.mubr.f32.gmra.mrb[0].mxu0 %v2400
    %v2473 = vpop.f32.mrb[0].mxu0
    %v2474 = vadd.f32 %v2394, %v2473
    %v2475 = vpop.f32.mrb[0].mxu0
    %2476 = vdwg.mxu0
    %v2477 = vmul.f32 %v2469, 0.5
    %v2478 = vmul.f32 %v2474, 0.5
    %v2479 = vmul.f32 %v2469, 0.70710677
    %v2480 = vmul.f32 %v2474, 0.70710677
    %v2481 = vand.u32 2147483647, %v2479
    %v2482 = vand.u32 2147483647, %v2480
    %v2483 = vmul.f32 %v2481, 0.5
    %v2484 = vmul.f32 %v2482, 0.5
    %v2485 = vadd.f32 %v2483, 1.0
    %v2486 = vadd.f32 %v2484, 1.0
    %v2487 = vrcp.pop %v2485
    %v2488 = vmul.f32 1.0, %v2487
    %v2489 = vrcp.pop %v2486
    %v2490 = vmul.f32 1.0, %v2489
    %v2491 = vsub.f32 0.0, %v2481
    %v2492 = vsub.f32 0.0, %v2482
    %v2493 = vmul.f32 %v2491, %v2481
    %v2494 = vmul.f32 %v2492, %v2482
    %v2495 = vsub.f32 %v2493, 1.2655122
    %v2496 = vsub.f32 %v2494, 1.2655122
    %v2497 = vmul.f32 %v2488, 0.17087276
    %v2498 = vmul.f32 %v2490, 0.17087276
    %v2499 = vadd.f32 %v2497, -0.82215226
    %v2500 = vadd.f32 %v2498, -0.82215226
    %v2501 = vmul.f32 %v2488, %v2499
    %v2502 = vmul.f32 %v2490, %v2500
    %v2503 = vadd.f32 %v2501, 1.4885159
    %v2504 = vadd.f32 %v2502, 1.4885159
    %v2505 = vmul.f32 %v2488, %v2503
    %v2506 = vmul.f32 %v2490, %v2504
    %v2507 = vadd.f32 %v2505, -1.135204
    %v2508 = vadd.f32 %v2506, -1.135204
    %v2509 = vmul.f32 %v2488, %v2507
    %v2510 = vmul.f32 %v2490, %v2508
    %v2511 = vadd.f32 %v2509, 0.27886808
    %v2512 = vadd.f32 %v2510, 0.27886808
    %v2513 = vmul.f32 %v2488, %v2511
    %v2514 = vmul.f32 %v2490, %v2512
    %v2515 = vadd.f32 %v2513, -0.18628806
    %v2516 = vadd.f32 %v2514, -0.18628806
    %v2517 = vmul.f32 %v2488, %v2515
    %v2518 = vmul.f32 %v2490, %v2516
    %v2519 = vadd.f32 %v2517, 0.09678418
    %v2520 = vadd.f32 %v2518, 0.09678418
    %v2521 = vmul.f32 %v2488, %v2519
    %v2522 = vmul.f32 %v2490, %v2520
    %v2523 = vadd.f32 %v2521, 0.37409195
    %v2524 = vadd.f32 %v2522, 0.37409195
    %v2525 = vmul.f32 %v2488, %v2523
    %v2526 = vmul.f32 %v2490, %v2524
    %v2527 = vadd.f32 %v2525, 1.0000237
    %v2528 = vadd.f32 %v2526, 1.0000237
    %v2529 = vmul.f32 %v2488, %v2527
    %v2530 = vmul.f32 %v2490, %v2528
    %v2531 = vadd.f32 %v2495, %v2529
    %v2532 = vadd.f32 %v2496, %v2530
    %v2533 = vmul.f32 %v2531, 1.442695
    %v2534 = vpow.pop %v2533
    %v2535 = vmul.f32 %v2532, 1.442695
    %v2536 = vpow.pop %v2535
    %v2537 = vmul.f32 %v2488, %v2534
    %v2538 = vmul.f32 %v2490, %v2536
    %v2539 = vsub.f32 1.0, %v2537
    %v2540 = vsub.f32 1.0, %v2538
    %vm2541 = vcmp.ge.f32.partialorder %v2479, 0.0
    %vm2542 = vcmp.ge.f32.partialorder %v2480, 0.0
    %v2543 = vsub.f32 0.0, %v2539
    %v2544 = vsub.f32 0.0, %v2540
    %v2545 = vsel %vm2541, %v2539, %v2543
    %v2546 = vsel %vm2542, %v2540, %v2544
    %v2547 = vadd.f32 %v2545, 1.0
    %v2548 = vadd.f32 %v2546, 1.0
    %v2549 = vmul.f32 %v2477, %v2547
    %v2550 = vmul.f32 %v2478, %v2548
    %s2551 = scalar_lea.vmem %s13, 128
    %v2552 = vld [vmem:[%s2551] sm:$0xff]
    %v2553 = vld [vmem:[%s2551 + $0x8] sm:$0xff]
    %v2554 = vld [vmem:[%s2551 + $0x10] sm:$0xff]
    %v2555 = vld [vmem:[%s2551 + $0x18] sm:$0xff]
    %v2556 = vld [vmem:[%s2551 + $0x20] sm:$0xff]
    %v2557 = vld [vmem:[%s2551 + $0x28] sm:$0xff]
    %v2558 = vld [vmem:[%s2551 + $0x30] sm:$0xff]
    %v2559 = vld [vmem:[%s2551 + $0x38] sm:$0xff]
    %v2560 = vld [vmem:[%s2551 + $0x40] sm:$0xff]
    %v2561 = vld [vmem:[%s2551 + $0x48] sm:$0xff]
    %v2562 = vld [vmem:[%s2551 + $0x50] sm:$0xff]
    %v2563 = vld [vmem:[%s2551 + $0x58] sm:$0xff]
    %v2564 = vld [vmem:[%s2551 + $0x60] sm:$0xff]
    %v2565 = vld [vmem:[%s2551 + $0x68] sm:$0xff]
    %v2566 = vld [vmem:[%s2551 + $0x70] sm:$0xff]
    %v2567 = vld [vmem:[%s2551 + $0x78] sm:$0xff]
    %s2568 = scalar_lea.vmem %s14, 1
    %v2569 = vld [vmem:[%s2568] sm:$0x1]
    %v2571 = vlaneseq
    %v2572 = vshrl.u32 %v2571, 7
    %v2573 = vsub.s32 0, %v2572
    %v2574 = vrot.slane %v2569, %v2573
    %2576 = vmatprep.subr.mxu0 0.0
    %2577 = vmatpush1.msra.mxu0 %v2552
    %2578 = vmatprep.subr.mxu0 0.0
    %2579 = vmatpush1.msra.mxu0 %v2553
    %2580 = vmatprep.subr.mxu0 0.0
    %2581 = vmatpush1.msra.mxu0 %v2554
    %2582 = vmatprep.subr.mxu0 0.0
    %2583 = vmatpush1.msra.mxu0 %v2555
    %2584 = vmatprep.subr.mxu0 0.0
    %2585 = vmatpush1.msra.mxu0 %v2556
    %2586 = vmatprep.subr.mxu0 0.0
    %2587 = vmatpush1.msra.mxu0 %v2557
    %2588 = vmatprep.subr.mxu0 0.0
    %2589 = vmatpush1.msra.mxu0 %v2558
    %2590 = vmatprep.subr.mxu0 0.0
    %2591 = vmatpush1.msra.mxu0 %v2559
    %2592 = vmatprep.subr.mxu0 0.0
    %2593 = vmatpush1.msra.mxu0 %v2560
    %2594 = vmatprep.subr.mxu0 0.0
    %2595 = vmatpush1.msra.mxu0 %v2561
    %2596 = vmatprep.subr.mxu0 0.0
    %2597 = vmatpush1.msra.mxu0 %v2562
    %2598 = vmatprep.subr.mxu0 0.0
    %2599 = vmatpush1.msra.mxu0 %v2563
    %2600 = vmatprep.subr.mxu0 0.0
    %2601 = vmatpush1.msra.mxu0 %v2564
    %2602 = vmatprep.subr.mxu0 0.0
    %2603 = vmatpush1.msra.mxu0 %v2565
    %2604 = vmatprep.subr.mxu0 0.0
    %2605 = vmatpush1.msra.mxu0 %v2566
    %2606 = vmatprep.subr.mxu0 0.0
    %2607 = vmatpush1.msra.mxu0 %v2567
    %2608 = vmatprep.subr.mxu0 0.0
    %2609 = vmatpush1.msra.mxu0 0.0
    %2610 = vmatprep.subr.mxu0 0.0
    %2611 = vmatpush1.msra.mxu0 0.0
    %2612 = vmatprep.subr.mxu0 0.0
    %2613 = vmatpush1.msra.mxu0 0.0
    %2614 = vmatprep.subr.mxu0 0.0
    %2615 = vmatpush1.msra.mxu0 0.0
    %2616 = vmatprep.subr.mxu0 0.0
    %2617 = vmatpush1.msra.mxu0 0.0
    %2618 = vmatprep.subr.mxu0 0.0
    %2619 = vmatpush1.msra.mxu0 0.0
    %2620 = vmatprep.subr.mxu0 0.0
    %2621 = vmatpush1.msra.mxu0 0.0
    %2622 = vmatprep.subr.mxu0 0.0
    %2623 = vmatpush1.msra.mxu0 0.0
    %2624 = vmatprep.subr.mxu0 0.0
    %2625 = vmatpush1.msra.mxu0 0.0
    %2626 = vmatprep.subr.mxu0 0.0
    %2627 = vmatpush1.msra.mxu0 0.0
    %2628 = vmatprep.subr.mxu0 0.0
    %2629 = vmatpush1.msra.mxu0 0.0
    %2630 = vmatprep.subr.mxu0 0.0
    %2631 = vmatpush1.msra.mxu0 0.0
    %2632 = vmatprep.subr.mxu0 0.0
    %2633 = vmatpush1.msra.mxu0 0.0
    %2634 = vmatprep.subr.mxu0 0.0
    %2635 = vmatpush1.msra.mxu0 0.0
    %2636 = vmatprep.subr.mxu0 0.0
    %2637 = vmatpush1.msra.mxu0 0.0
    %2638 = vmatprep.subr.mxu0 0.0
    %2639 = vmatpush1.msra.mxu0 0.0
    %2640 = vmatprep.mubr.f32.mxu0 0.0
    %2641 = vmatmul.mubr.f32.gmra.mrb[0].mxu0 %v2549
    %v2642 = vpop.f32.mrb[0].mxu0
    %v2643 = vadd.f32 %v2574, %v2642
    %v2644 = vpop.f32.mrb[0].mxu0
    %2645 = vmatprep.mubr.f32.mxu0 0.0
    %2646 = vmatmul.mubr.f32.gmra.mrb[0].mxu0 %v2550
    %v2647 = vpop.f32.mrb[0].mxu0
    %v2648 = vadd.f32 %v2574, %v2647
    %v2649 = vpop.f32.mrb[0].mxu0
    %2650 = vdwg.mxu0
    %v2651 = vadd.f32 %v2643, %v2381
    %v2652 = vadd.f32 %v2648, %v2382
    %s2653 = scalar_lea.vmem %s15, 1
    %v2654 = vld [vmem:[%s2653] sm:$0x1]
    %s2655 = scalar_lea.vmem %s16, 1
    %v2656 = vld [vmem:[%s2655] sm:$0x1]
    %v2657 = vsel %vm63, %v2651, 0.0
    %2658 = vadd.xlane.f32.xlu0 %v2657
    %v2659 = vpop.xlane.xlu0 %2658
    %v2660 = vsel %vm63, %v2652, 0.0
    %2661 = vadd.xlane.f32.xlu0 %v2660
    %v2662 = vpop.xlane.xlu0 %2661
    %v2663 = vmul.f32 %v2659, %v70
    %v2664 = vmul.f32 %v2662, %v70
    %v2665 = vsub.f32 %v2651, %v2663
    %v2666 = vsub.f32 %v2652, %v2664
    %v2667 = vmul.f32 %v2665, %v2665
    %v2668 = vmul.f32 %v2666, %v2666
    %v2669 = vsel %vm63, %v2667, 0.0
    %2670 = vadd.xlane.f32.xlu0 %v2669
    %v2671 = vpop.xlane.xlu0 %2670
    %v2672 = vsel %vm63, %v2668, 0.0
    %2673 = vadd.xlane.f32.xlu0 %v2672
    %v2674 = vpop.xlane.xlu0 %2673
    %v2675 = vmul.f32 %v2671, %v70
    %v2676 = vmul.f32 %v2674, %v70
    %v2677 = vadd.f32 %v2675, 1e-12
    %v2678 = vadd.f32 %v2676, 1e-12
    %v2679 = vrsqrt.pop %v2677
    %v2680 = vrsqrt.pop %v2678
    %v2681 = vmul.f32 %v2665, %v2679
    %v2682 = vmul.f32 %v2666, %v2680
    %v2684 = vlaneseq
    %v2685 = vshrl.u32 %v2684, 7
    %v2686 = vsub.s32 0, %v2685
    %v2687 = vrot.slane %v2654, %v2686
    %v2689 = vmul.f32 %v2681, %v2687
    %v2690 = vmul.f32 %v2682, %v2687
    %v2692 = vlaneseq
    %v2693 = vshrl.u32 %v2692, 7
    %v2694 = vsub.s32 0, %v2693
    %v2695 = vrot.slane %v2656, %v2694
    %v2697 = vadd.f32 %v2689, %v2695
    %v2698 = vadd.f32 %v2690, %v2695
    %v2699 = vld [vmem:[%s2] sm:$0xff]
    %v2700 = vld [vmem:[%s2 + $0x8] sm:$0xff]
    %v2701 = vld [vmem:[%s2 + $0x10] sm:$0xff]
    %v2702 = vld [vmem:[%s2 + $0x18] sm:$0xff]
    %v2705 = vrot.slane %v2697, 7
    %v2706 = vrot.slane %v2698, 6
    %vm2707 = vcmask 1041409
    %v2708 = vsel %vm2707, %v2706, %v2705
    %v2709 = vsel %vm63, %v2708, 0
    %2711 = vmatprep.subr.mxu0 0.0
    %2712 = vmatpush1.msra.mxu0 %v2699
    %2713 = vmatprep.subr.mxu0 0.0
    %2714 = vmatpush1.msra.mxu0 %v2700
    %2715 = vmatprep.subr.mxu0 0.0
    %2716 = vmatpush1.msra.mxu0 %v2701
    %2717 = vmatprep.subr.mxu0 0.0
    %2718 = vmatpush1.msra.mxu0 %v2702
    %2719 = vmatprep.subr.mxu0 0.0
    %2720 = vmatpush1.msra.mxu0 0.0
    %2721 = vmatprep.subr.mxu0 0.0
    %2722 = vmatpush1.msra.mxu0 0.0
    %2723 = vmatprep.subr.mxu0 0.0
    %2724 = vmatpush1.msra.mxu0 0.0
    %2725 = vmatprep.subr.mxu0 0.0
    %2726 = vmatpush1.msra.mxu0 0.0
    %2727 = vmatprep.subr.mxu0 0.0
    %2728 = vmatpush1.msra.mxu0 0.0
    %2729 = vmatprep.subr.mxu0 0.0
    %2730 = vmatpush1.msra.mxu0 0.0
    %2731 = vmatprep.subr.mxu0 0.0
    %2732 = vmatpush1.msra.mxu0 0.0
    %2733 = vmatprep.subr.mxu0 0.0
    %2734 = vmatpush1.msra.mxu0 0.0
    %2735 = vmatprep.subr.mxu0 0.0
    %2736 = vmatpush1.msra.mxu0 0.0
    %2737 = vmatprep.subr.mxu0 0.0
    %2738 = vmatpush1.msra.mxu0 0.0
    %2739 = vmatprep.subr.mxu0 0.0
    %2740 = vmatpush1.msra.mxu0 0.0
    %2741 = vmatprep.subr.mxu0 0.0
    %2742 = vmatpush1.msra.mxu0 0.0
    %2743 = vmatprep.subr.mxu0 0.0
    %2744 = vmatpush1.msra.mxu0 0.0
    %2745 = vmatprep.subr.mxu0 0.0
    %2746 = vmatpush1.msra.mxu0 0.0
    %2747 = vmatprep.subr.mxu0 0.0
    %2748 = vmatpush1.msra.mxu0 0.0
    %2749 = vmatprep.subr.mxu0 0.0
    %2750 = vmatpush1.msra.mxu0 0.0
    %2751 = vmatprep.subr.mxu0 0.0
    %2752 = vmatpush1.msra.mxu0 0.0
    %2753 = vmatprep.subr.mxu0 0.0
    %2754 = vmatpush1.msra.mxu0 0.0
    %2755 = vmatprep.subr.mxu0 0.0
    %2756 = vmatpush1.msra.mxu0 0.0
    %2757 = vmatprep.subr.mxu0 0.0
    %2758 = vmatpush1.msra.mxu0 0.0
    %2759 = vmatprep.subr.mxu0 0.0
    %2760 = vmatpush1.msra.mxu0 0.0
    %2761 = vmatprep.subr.mxu0 0.0
    %2762 = vmatpush1.msra.mxu0 0.0
    %2763 = vmatprep.subr.mxu0 0.0
    %2764 = vmatpush1.msra.mxu0 0.0
    %2765 = vmatprep.subr.mxu0 0.0
    %2766 = vmatpush1.msra.mxu0 0.0
    %2767 = vmatprep.subr.mxu0 0.0
    %2768 = vmatpush1.msra.mxu0 0.0
    %2769 = vmatprep.subr.mxu0 0.0
    %2770 = vmatpush1.msra.mxu0 0.0
    %2771 = vmatprep.subr.mxu0 0.0
    %2772 = vmatpush1.msra.mxu0 0.0
    %2773 = vmatprep.subr.mxu0 0.0
    %2774 = vmatpush1.msra.mxu0 0.0
    %2775 = vmatprep.mubr.f32.mxu0 0.0
    %2776 = vmatmul.mubr.f32.gmra.mrb[0].mxu0 %v2709
    %v2777 = vpop.f32.mrb[0].mxu0
    %v2778 = vadd.f32 0.0, %v2777
    %v2779 = vpop.f32.mrb[0].mxu0
    %2780 = vdwg.mxu0
    %vm2781 = vcmask 123904
    %2782 = vst.msk [vmem:[#allocation2] sm:$0x3] %vm2781, %v2778
    // Predicated region
    $region70: #{sasrec_forward.1} parent=1 // pred_check
      _
    $region71: #{sasrec_forward.1} parent=1 // pred_check_branch
      %2784 = sbr.rel (0) target = $region73
    $region72: #{sasrec_forward.1} parent=1 // pred_region
      %s2786 = ssub.s32 32, 32
      %2787 = vsyncadd [#allocation3], %s2786
      %s2789 = sshll.u32 [#allocation2], 4
      %s2790 = int_to_ptr.vmem [resolvable:$true] %s2789
      %2792 = dma.vmem_to_hbm [thread:$0]  %s2790, 32, %s17, [#allocation3]
    $region73: #{sasrec_forward.1} parent=1 // pred_fallthru
      _
    // Predicated region
    $region74: #{sasrec_forward.1} parent=1 // pred_check
      _
    $region75: #{sasrec_forward.1} parent=1 // pred_check_branch
      %2794 = sbr.rel (0) target = $region77
    $region76: #{sasrec_forward.1} parent=1 // pred_region
      %2795 = dma.done [#allocation3], 32
    $region77: #{sasrec_forward.1} parent=1 // pred_fallthru
      _
    %2796 = vsyncpa [#allocation3], 1

</llo_original>
